<compile_context>
chip_gen: v5e
topology: v5e:2x2
jax: 0.10.0
libtpu: 0.0.40
codegen_flags: <defaults>
</compile_context>

<pallas_src>
import functools

import jax
import jax.numpy as jnp
import numpy as np
from jax import lax
from jax.experimental import pallas as pl
from jax.experimental.pallas import tpu as pltpu

KSIZE = 3
PAD = 1
# Tap offsets (dh, dw); t = (dh + 1) * 3 + (dw + 1) matches the flat
# (kh, kw, cin, cout) order of the SMEM weight vector.
TAPS = tuple((dh, dw) for dh in (-1, 0, 1) for dw in (-1, 0, 1))
_CENTER = 4  # (dh, dw) == (0, 0): always in-bounds, no mask needed


def _resblock_kernel(x_ref, mask_ref, w1_ref, b1_ref, w2_ref, b2_ref, o_ref,
                     *, W):
    # x_ref, o_ref : (C, NB, S) VMEM  -- per-channel (NB, S) slabs, S = H*W
    # mask_ref     : (9, S) VMEM f32  -- 1.0 where the tap stays inside image
    # w*_ref       : (9*C*C,) SMEM f32, flat (kh, kw, cin, cout) order
    # b*_ref       : (C,) SMEM f32
    C, NB, S = x_ref.shape
    f32 = jnp.float32

    def conv3x3(chan, w_ref, b_ref):
        # chan: list of C arrays, each (NB, S) f32.
        # Taps are streamed: roll once, select once, FMA into all C
        # accumulators, discard.  Bias is folded into the accumulator init.
        acc = [jnp.full((NB, S), b_ref[co], dtype=f32) for co in range(C)]
        for t, (dh, dw) in enumerate(TAPS):
            off = dh * W + dw
            shift = (-off) % S
            valid = None if t == _CENTER else (mask_ref[t:t + 1, :] != 0.0)
            for ci in range(C):
                r = chan[ci]
                if shift != 0:
                    r = pltpu.roll(r, shift, axis=1)   # XLU lane rotation
                if valid is not None:
                    r = jnp.where(valid, r, 0.0)       # NaN-safe zero pad
                for co in range(C):
                    wv = w_ref[(t * C + ci) * C + co]  # SMEM scalar splat
                    acc[co] = acc[co] + wv * r
        return acc

    x = [x_ref[c].astype(f32) for c in range(C)]        # C x (NB, S)

    y = conv3x3(x, w1_ref, b1_ref)
    y = [jnp.maximum(v, 0.0) for v in y]                 # ReLU
    z = conv3x3(y, w2_ref, b2_ref)

    for c in range(C):                                    # residual + store
        o_ref[c] = (x[c] + z[c]).astype(o_ref.dtype)


def _make_tap_masks(H, W):
    """(9, H*W) float32 validity masks, one per 3x3 tap (host precompute)."""
    S = H * W
    pos = np.arange(S)
    hh, ww = pos // W, pos % W
    m = np.empty((len(TAPS), S), np.float32)
    for t, (dh, dw) in enumerate(TAPS):
        m[t] = ((hh + dh >= 0) & (hh + dh < H) &
                (ww + dw >= 0) & (ww + dw < W)).astype(np.float32)
    return jnp.asarray(m)


def _pick_batch_block(n, c, s):
    """Images per grid step.  The sublane block dim must be a multiple of 8
    or the full batch ((8,128) BlockSpec rule).  Prefer multiples of 8 that
    fill sublanes, keep >= 2 parallel grid steps (v7x megacore) and stay
    under ~2 MiB per block (VMEM headroom on every generation, incl. v7x)."""
    if n < 16 or n % 8 != 0:
        return n                      # whole batch in one step (toy sizes)
    budget_elems = (2 * 1024 * 1024) // 4
    nb = 8
    while (nb * 2 <= n // 2 and n % (nb * 2) == 0
           and c * nb * 2 * s <= budget_elems):
        nb *= 2
    return nb


def resblock_pallas(x_nchw, w1_oihw, b1, w2_oihw, b2):
    """ResBlock forward. x_nchw: (N, C, H, W) float32 (PyTorch layout).
    w*_oihw: (C, C, 3, 3) Conv2d weights. b*: (C,) biases."""
    N, C, H, W = x_nchw.shape
    S = H * W
    NB = _pick_batch_block(N, C, S)

    # Channel-major layout: (C, N, S) so each channel is a dense (N, S) slab
    # -- batch on sublanes, spatial axis lane-dense.
    x_cns = jnp.transpose(x_nchw, (1, 0, 2, 3)).reshape(C, N, S)
    masks = _make_tap_masks(H, W)            # hoisted out of the kernel
    # Weights flat in (kh, kw, cin, cout) scalar order for SMEM.
    w1_flat = jnp.transpose(w1_oihw, (2, 3, 1, 0)).reshape(-1)
    w2_flat = jnp.transpose(w2_oihw, (2, 3, 1, 0)).reshape(-1)

    smem = pl.BlockSpec(memory_space=pltpu.MemorySpace.SMEM)
    out = pl.pallas_call(
        functools.partial(_resblock_kernel, W=W),
        out_shape=jax.ShapeDtypeStruct((C, N, S), x_nchw.dtype),
        grid=(N // NB,),
        in_specs=[
            pl.BlockSpec((C, NB, S), lambda b: (0, b, 0)),
            pl.BlockSpec((len(TAPS), S), lambda b: (0, 0)),
            smem, smem, smem, smem,
        ],
        out_specs=pl.BlockSpec((C, NB, S), lambda b: (0, b, 0)),
        compiler_params=pltpu.CompilerParams(
            dimension_semantics=("parallel",)),   # v7x: shard batch over TCs
    )(x_cns, masks, w1_flat, b1, w2_flat, b2)
    return jnp.transpose(out.reshape(C, N, H, W), (1, 0, 2, 3))


def resblock_reference(x_nchw, w1_oihw, b1, w2_oihw, b2):
    dn = ("NCHW", "OIHW", "NCHW")
    pad = ((PAD, PAD), (PAD, PAD))
    y = lax.conv_general_dilated(x_nchw, w1_oihw, (1, 1), pad,
                                 dimension_numbers=dn)
    y = y + b1.reshape(1, -1, 1, 1)
    y = jnp.maximum(y, 0.0)
    y = lax.conv_general_dilated(y, w2_oihw, (1, 1), pad,
                                 dimension_numbers=dn)
    y = y + b2.reshape(1, -1, 1, 1)
    return x_nchw + y


if __name__ == "__main__":
    N, C, H, W = 2, 4, 16, 16   # PyTorch NCHW input shape

    key = jax.random.PRNGKey(0)
    k1, k2, k3, k4, k5 = jax.random.split(key, 5)

    x = jax.random.normal(k1, (N, C, H, W), dtype=jnp.float32)

    scale = 1.0 / np.sqrt(C * KSIZE * KSIZE)
    w1 = jax.random.normal(k2, (C, C, KSIZE, KSIZE), jnp.float32) * scale
    w2 = jax.random.normal(k3, (C, C, KSIZE, KSIZE), jnp.float32) * scale
    b1 = jax.random.normal(k4, (C,), jnp.float32) * scale
    b2 = jax.random.normal(k5, (C,), jnp.float32) * scale

    out = resblock_pallas(x, w1, b1, w2, b2)
    out = jax.block_until_ready(out)

    ref = resblock_reference(x, w1, b1, w2, b2)
    np.testing.assert_allclose(np.asarray(out), np.asarray(ref),
                               rtol=1e-4, atol=1e-4)

    print("KERNEL_OK")
</pallas_src>

<mosaic_0001>
module attributes {stable_mosaic.version = 11 : i64} {
  func.func @_resblock_kernel(%arg0: i32, %arg1: memref<4x2x256xf32, #tpu.memory_space<vmem>>, %arg2: memref<9x256xf32, #tpu.memory_space<vmem>>, %arg3: memref<144xf32, #tpu.memory_space<smem>>, %arg4: memref<4xf32, #tpu.memory_space<smem>>, %arg5: memref<144xf32, #tpu.memory_space<smem>>, %arg6: memref<4xf32, #tpu.memory_space<smem>>, %arg7: memref<4x2x256xf32, #tpu.memory_space<vmem>>) attributes {dimension_semantics = [#tpu.dimension_semantics<parallel>], iteration_bounds = array<i64: 1>, scalar_prefetch = 0 : i64, scratch_operands = 0 : i64, tpu.core_type = #tpu.core_type<tc>, window_params = [{transform_indices = @transform_0, window_bounds = array<i64: 4, 2, 256>}, {pipeline_mode = #tpu.pipeline_mode<synchronous>, transform_indices = @transform_1, window_bounds = array<i64: 9, 256>}, {transform_indices = @transform_2, window_bounds = array<i64: 144>}, {transform_indices = @transform_3, window_bounds = array<i64: 4>}, {transform_indices = @transform_4, window_bounds = array<i64: 144>}, {transform_indices = @transform_5, window_bounds = array<i64: 4>}, {transform_indices = @transform_6, window_bounds = array<i64: 4, 2, 256>}]} {
    %c0 = arith.constant 0 : index
    %c0_0 = arith.constant 0 : index
    %c0_1 = arith.constant 0 : index
    %0 = vector.load %arg1[%c0, %c0_0, %c0_1] : memref<4x2x256xf32, #tpu.memory_space<vmem>>, vector<1x2x256xf32>
    %1 = vector.shape_cast %0 : vector<1x2x256xf32> to vector<2x256xf32>
    %c1 = arith.constant 1 : index
    %c0_2 = arith.constant 0 : index
    %c0_3 = arith.constant 0 : index
    %2 = vector.load %arg1[%c1, %c0_2, %c0_3] : memref<4x2x256xf32, #tpu.memory_space<vmem>>, vector<1x2x256xf32>
    %3 = vector.shape_cast %2 : vector<1x2x256xf32> to vector<2x256xf32>
    %c2 = arith.constant 2 : index
    %c0_4 = arith.constant 0 : index
    %c0_5 = arith.constant 0 : index
    %4 = vector.load %arg1[%c2, %c0_4, %c0_5] : memref<4x2x256xf32, #tpu.memory_space<vmem>>, vector<1x2x256xf32>
    %5 = vector.shape_cast %4 : vector<1x2x256xf32> to vector<2x256xf32>
    %c3 = arith.constant 3 : index
    %c0_6 = arith.constant 0 : index
    %c0_7 = arith.constant 0 : index
    %6 = vector.load %arg1[%c3, %c0_6, %c0_7] : memref<4x2x256xf32, #tpu.memory_space<vmem>>, vector<1x2x256xf32>
    %7 = vector.shape_cast %6 : vector<1x2x256xf32> to vector<2x256xf32>
    %c0_8 = arith.constant 0 : index
    %8 = memref.load %arg4[%c0_8] : memref<4xf32, #tpu.memory_space<smem>>
    %9 = vector.broadcast %8 : f32 to vector<2x256xf32>
    %c1_9 = arith.constant 1 : index
    %10 = memref.load %arg4[%c1_9] : memref<4xf32, #tpu.memory_space<smem>>
    %11 = vector.broadcast %10 : f32 to vector<2x256xf32>
    %c2_10 = arith.constant 2 : index
    %12 = memref.load %arg4[%c2_10] : memref<4xf32, #tpu.memory_space<smem>>
    %13 = vector.broadcast %12 : f32 to vector<2x256xf32>
    %c3_11 = arith.constant 3 : index
    %14 = memref.load %arg4[%c3_11] : memref<4xf32, #tpu.memory_space<smem>>
    %15 = vector.broadcast %14 : f32 to vector<2x256xf32>
    %c0_12 = arith.constant 0 : index
    %c0_13 = arith.constant 0 : index
    %16 = vector.load %arg2[%c0_12, %c0_13] : memref<9x256xf32, #tpu.memory_space<vmem>>, vector<1x256xf32>
    %cst = arith.constant 0.000000e+00 : f32
    %17 = vector.broadcast %cst : f32 to vector<1x256xf32>
    %18 = arith.cmpf one, %16, %17 : vector<1x256xf32>
    %c17_i32 = arith.constant 17 : i32
    %19 = tpu.dynamic_rotate %1 by %c17_i32 dim 1 : vector<2x256xf32>, i32 -> vector<2x256xf32>
    %cst_14 = arith.constant 0.000000e+00 : f32
    %20 = vector.shape_cast %18 : vector<1x256xi1> to vector<1x256xi1>
    %21 = vector.broadcast %20 : vector<1x256xi1> to vector<2x256xi1>
    %22 = vector.broadcast %cst_14 : f32 to vector<2x256xf32>
    %23 = arith.select %21, %19, %22 : vector<2x256xi1>, vector<2x256xf32>
    %c0_15 = arith.constant 0 : index
    %24 = memref.load %arg3[%c0_15] : memref<144xf32, #tpu.memory_space<smem>>
    %25 = vector.broadcast %24 : f32 to vector<2x256xf32>
    %26 = arith.mulf %25, %23 : vector<2x256xf32>
    %27 = arith.addf %9, %26 : vector<2x256xf32>
    %c1_16 = arith.constant 1 : index
    %28 = memref.load %arg3[%c1_16] : memref<144xf32, #tpu.memory_space<smem>>
    %29 = vector.broadcast %28 : f32 to vector<2x256xf32>
    %30 = arith.mulf %29, %23 : vector<2x256xf32>
    %31 = arith.addf %11, %30 : vector<2x256xf32>
    %c2_17 = arith.constant 2 : index
    %32 = memref.load %arg3[%c2_17] : memref<144xf32, #tpu.memory_space<smem>>
    %33 = vector.broadcast %32 : f32 to vector<2x256xf32>
    %34 = arith.mulf %33, %23 : vector<2x256xf32>
    %35 = arith.addf %13, %34 : vector<2x256xf32>
    %c3_18 = arith.constant 3 : index
    %36 = memref.load %arg3[%c3_18] : memref<144xf32, #tpu.memory_space<smem>>
    %37 = vector.broadcast %36 : f32 to vector<2x256xf32>
    %38 = arith.mulf %37, %23 : vector<2x256xf32>
    %39 = arith.addf %15, %38 : vector<2x256xf32>
    %c17_i32_19 = arith.constant 17 : i32
    %40 = tpu.dynamic_rotate %3 by %c17_i32_19 dim 1 : vector<2x256xf32>, i32 -> vector<2x256xf32>
    %cst_20 = arith.constant 0.000000e+00 : f32
    %41 = vector.shape_cast %18 : vector<1x256xi1> to vector<1x256xi1>
    %42 = vector.broadcast %41 : vector<1x256xi1> to vector<2x256xi1>
    %43 = vector.broadcast %cst_20 : f32 to vector<2x256xf32>
    %44 = arith.select %42, %40, %43 : vector<2x256xi1>, vector<2x256xf32>
    %c4 = arith.constant 4 : index
    %45 = memref.load %arg3[%c4] : memref<144xf32, #tpu.memory_space<smem>>
    %46 = vector.broadcast %45 : f32 to vector<2x256xf32>
    %47 = arith.mulf %46, %44 : vector<2x256xf32>
    %48 = arith.addf %27, %47 : vector<2x256xf32>
    %c5 = arith.constant 5 : index
    %49 = memref.load %arg3[%c5] : memref<144xf32, #tpu.memory_space<smem>>
    %50 = vector.broadcast %49 : f32 to vector<2x256xf32>
    %51 = arith.mulf %50, %44 : vector<2x256xf32>
    %52 = arith.addf %31, %51 : vector<2x256xf32>
    %c6 = arith.constant 6 : index
    %53 = memref.load %arg3[%c6] : memref<144xf32, #tpu.memory_space<smem>>
    %54 = vector.broadcast %53 : f32 to vector<2x256xf32>
    %55 = arith.mulf %54, %44 : vector<2x256xf32>
    %56 = arith.addf %35, %55 : vector<2x256xf32>
    %c7 = arith.constant 7 : index
    %57 = memref.load %arg3[%c7] : memref<144xf32, #tpu.memory_space<smem>>
    %58 = vector.broadcast %57 : f32 to vector<2x256xf32>
    %59 = arith.mulf %58, %44 : vector<2x256xf32>
    %60 = arith.addf %39, %59 : vector<2x256xf32>
    %c17_i32_21 = arith.constant 17 : i32
    %61 = tpu.dynamic_rotate %5 by %c17_i32_21 dim 1 : vector<2x256xf32>, i32 -> vector<2x256xf32>
    %cst_22 = arith.constant 0.000000e+00 : f32
    %62 = vector.shape_cast %18 : vector<1x256xi1> to vector<1x256xi1>
    %63 = vector.broadcast %62 : vector<1x256xi1> to vector<2x256xi1>
    %64 = vector.broadcast %cst_22 : f32 to vector<2x256xf32>
    %65 = arith.select %63, %61, %64 : vector<2x256xi1>, vector<2x256xf32>
    %c8 = arith.constant 8 : index
    %66 = memref.load %arg3[%c8] : memref<144xf32, #tpu.memory_space<smem>>
    %67 = vector.broadcast %66 : f32 to vector<2x256xf32>
    %68 = arith.mulf %67, %65 : vector<2x256xf32>
    %69 = arith.addf %48, %68 : vector<2x256xf32>
    %c9 = arith.constant 9 : index
    %70 = memref.load %arg3[%c9] : memref<144xf32, #tpu.memory_space<smem>>
    %71 = vector.broadcast %70 : f32 to vector<2x256xf32>
    %72 = arith.mulf %71, %65 : vector<2x256xf32>
    %73 = arith.addf %52, %72 : vector<2x256xf32>
    %c10 = arith.constant 10 : index
    %74 = memref.load %arg3[%c10] : memref<144xf32, #tpu.memory_space<smem>>
    %75 = vector.broadcast %74 : f32 to vector<2x256xf32>
    %76 = arith.mulf %75, %65 : vector<2x256xf32>
    %77 = arith.addf %56, %76 : vector<2x256xf32>
    %c11 = arith.constant 11 : index
    %78 = memref.load %arg3[%c11] : memref<144xf32, #tpu.memory_space<smem>>
    %79 = vector.broadcast %78 : f32 to vector<2x256xf32>
    %80 = arith.mulf %79, %65 : vector<2x256xf32>
    %81 = arith.addf %60, %80 : vector<2x256xf32>
    %c17_i32_23 = arith.constant 17 : i32
    %82 = tpu.dynamic_rotate %7 by %c17_i32_23 dim 1 : vector<2x256xf32>, i32 -> vector<2x256xf32>
    %cst_24 = arith.constant 0.000000e+00 : f32
    %83 = vector.shape_cast %18 : vector<1x256xi1> to vector<1x256xi1>
    %84 = vector.broadcast %83 : vector<1x256xi1> to vector<2x256xi1>
    %85 = vector.broadcast %cst_24 : f32 to vector<2x256xf32>
    %86 = arith.select %84, %82, %85 : vector<2x256xi1>, vector<2x256xf32>
    %c12 = arith.constant 12 : index
    %87 = memref.load %arg3[%c12] : memref<144xf32, #tpu.memory_space<smem>>
    %88 = vector.broadcast %87 : f32 to vector<2x256xf32>
    %89 = arith.mulf %88, %86 : vector<2x256xf32>
    %90 = arith.addf %69, %89 : vector<2x256xf32>
    %c13 = arith.constant 13 : index
    %91 = memref.load %arg3[%c13] : memref<144xf32, #tpu.memory_space<smem>>
    %92 = vector.broadcast %91 : f32 to vector<2x256xf32>
    %93 = arith.mulf %92, %86 : vector<2x256xf32>
    %94 = arith.addf %73, %93 : vector<2x256xf32>
    %c14 = arith.constant 14 : index
    %95 = memref.load %arg3[%c14] : memref<144xf32, #tpu.memory_space<smem>>
    %96 = vector.broadcast %95 : f32 to vector<2x256xf32>
    %97 = arith.mulf %96, %86 : vector<2x256xf32>
    %98 = arith.addf %77, %97 : vector<2x256xf32>
    %c15 = arith.constant 15 : index
    %99 = memref.load %arg3[%c15] : memref<144xf32, #tpu.memory_space<smem>>
    %100 = vector.broadcast %99 : f32 to vector<2x256xf32>
    %101 = arith.mulf %100, %86 : vector<2x256xf32>
    %102 = arith.addf %81, %101 : vector<2x256xf32>
    %c1_25 = arith.constant 1 : index
    %c0_26 = arith.constant 0 : index
    %103 = vector.load %arg2[%c1_25, %c0_26] : memref<9x256xf32, #tpu.memory_space<vmem>>, vector<1x256xf32>
    %cst_27 = arith.constant 0.000000e+00 : f32
    %104 = vector.broadcast %cst_27 : f32 to vector<1x256xf32>
    %105 = arith.cmpf one, %103, %104 : vector<1x256xf32>
    %c16_i32 = arith.constant 16 : i32
    %106 = tpu.dynamic_rotate %1 by %c16_i32 dim 1 : vector<2x256xf32>, i32 -> vector<2x256xf32>
    %cst_28 = arith.constant 0.000000e+00 : f32
    %107 = vector.shape_cast %105 : vector<1x256xi1> to vector<1x256xi1>
    %108 = vector.broadcast %107 : vector<1x256xi1> to vector<2x256xi1>
    %109 = vector.broadcast %cst_28 : f32 to vector<2x256xf32>
    %110 = arith.select %108, %106, %109 : vector<2x256xi1>, vector<2x256xf32>
    %c16 = arith.constant 16 : index
    %111 = memref.load %arg3[%c16] : memref<144xf32, #tpu.memory_space<smem>>
    %112 = vector.broadcast %111 : f32 to vector<2x256xf32>
    %113 = arith.mulf %112, %110 : vector<2x256xf32>
    %114 = arith.addf %90, %113 : vector<2x256xf32>
    %c17 = arith.constant 17 : index
    %115 = memref.load %arg3[%c17] : memref<144xf32, #tpu.memory_space<smem>>
    %116 = vector.broadcast %115 : f32 to vector<2x256xf32>
    %117 = arith.mulf %116, %110 : vector<2x256xf32>
    %118 = arith.addf %94, %117 : vector<2x256xf32>
    %c18 = arith.constant 18 : index
    %119 = memref.load %arg3[%c18] : memref<144xf32, #tpu.memory_space<smem>>
    %120 = vector.broadcast %119 : f32 to vector<2x256xf32>
    %121 = arith.mulf %120, %110 : vector<2x256xf32>
    %122 = arith.addf %98, %121 : vector<2x256xf32>
    %c19 = arith.constant 19 : index
    %123 = memref.load %arg3[%c19] : memref<144xf32, #tpu.memory_space<smem>>
    %124 = vector.broadcast %123 : f32 to vector<2x256xf32>
    %125 = arith.mulf %124, %110 : vector<2x256xf32>
    %126 = arith.addf %102, %125 : vector<2x256xf32>
    %c16_i32_29 = arith.constant 16 : i32
    %127 = tpu.dynamic_rotate %3 by %c16_i32_29 dim 1 : vector<2x256xf32>, i32 -> vector<2x256xf32>
    %cst_30 = arith.constant 0.000000e+00 : f32
    %128 = vector.shape_cast %105 : vector<1x256xi1> to vector<1x256xi1>
    %129 = vector.broadcast %128 : vector<1x256xi1> to vector<2x256xi1>
    %130 = vector.broadcast %cst_30 : f32 to vector<2x256xf32>
    %131 = arith.select %129, %127, %130 : vector<2x256xi1>, vector<2x256xf32>
    %c20 = arith.constant 20 : index
    %132 = memref.load %arg3[%c20] : memref<144xf32, #tpu.memory_space<smem>>
    %133 = vector.broadcast %132 : f32 to vector<2x256xf32>
    %134 = arith.mulf %133, %131 : vector<2x256xf32>
    %135 = arith.addf %114, %134 : vector<2x256xf32>
    %c21 = arith.constant 21 : index
    %136 = memref.load %arg3[%c21] : memref<144xf32, #tpu.memory_space<smem>>
    %137 = vector.broadcast %136 : f32 to vector<2x256xf32>
    %138 = arith.mulf %137, %131 : vector<2x256xf32>
    %139 = arith.addf %118, %138 : vector<2x256xf32>
    %c22 = arith.constant 22 : index
    %140 = memref.load %arg3[%c22] : memref<144xf32, #tpu.memory_space<smem>>
    %141 = vector.broadcast %140 : f32 to vector<2x256xf32>
    %142 = arith.mulf %141, %131 : vector<2x256xf32>
    %143 = arith.addf %122, %142 : vector<2x256xf32>
    %c23 = arith.constant 23 : index
    %144 = memref.load %arg3[%c23] : memref<144xf32, #tpu.memory_space<smem>>
    %145 = vector.broadcast %144 : f32 to vector<2x256xf32>
    %146 = arith.mulf %145, %131 : vector<2x256xf32>
    %147 = arith.addf %126, %146 : vector<2x256xf32>
    %c16_i32_31 = arith.constant 16 : i32
    %148 = tpu.dynamic_rotate %5 by %c16_i32_31 dim 1 : vector<2x256xf32>, i32 -> vector<2x256xf32>
    %cst_32 = arith.constant 0.000000e+00 : f32
    %149 = vector.shape_cast %105 : vector<1x256xi1> to vector<1x256xi1>
    %150 = vector.broadcast %149 : vector<1x256xi1> to vector<2x256xi1>
    %151 = vector.broadcast %cst_32 : f32 to vector<2x256xf32>
    %152 = arith.select %150, %148, %151 : vector<2x256xi1>, vector<2x256xf32>
    %c24 = arith.constant 24 : index
    %153 = memref.load %arg3[%c24] : memref<144xf32, #tpu.memory_space<smem>>
    %154 = vector.broadcast %153 : f32 to vector<2x256xf32>
    %155 = arith.mulf %154, %152 : vector<2x256xf32>
    %156 = arith.addf %135, %155 : vector<2x256xf32>
    %c25 = arith.constant 25 : index
    %157 = memref.load %arg3[%c25] : memref<144xf32, #tpu.memory_space<smem>>
    %158 = vector.broadcast %157 : f32 to vector<2x256xf32>
    %159 = arith.mulf %158, %152 : vector<2x256xf32>
    %160 = arith.addf %139, %159 : vector<2x256xf32>
    %c26 = arith.constant 26 : index
    %161 = memref.load %arg3[%c26] : memref<144xf32, #tpu.memory_space<smem>>
    %162 = vector.broadcast %161 : f32 to vector<2x256xf32>
    %163 = arith.mulf %162, %152 : vector<2x256xf32>
    %164 = arith.addf %143, %163 : vector<2x256xf32>
    %c27 = arith.constant 27 : index
    %165 = memref.load %arg3[%c27] : memref<144xf32, #tpu.memory_space<smem>>
    %166 = vector.broadcast %165 : f32 to vector<2x256xf32>
    %167 = arith.mulf %166, %152 : vector<2x256xf32>
    %168 = arith.addf %147, %167 : vector<2x256xf32>
    %c16_i32_33 = arith.constant 16 : i32
    %169 = tpu.dynamic_rotate %7 by %c16_i32_33 dim 1 : vector<2x256xf32>, i32 -> vector<2x256xf32>
    %cst_34 = arith.constant 0.000000e+00 : f32
    %170 = vector.shape_cast %105 : vector<1x256xi1> to vector<1x256xi1>
    %171 = vector.broadcast %170 : vector<1x256xi1> to vector<2x256xi1>
    %172 = vector.broadcast %cst_34 : f32 to vector<2x256xf32>
    %173 = arith.select %171, %169, %172 : vector<2x256xi1>, vector<2x256xf32>
    %c28 = arith.constant 28 : index
    %174 = memref.load %arg3[%c28] : memref<144xf32, #tpu.memory_space<smem>>
    %175 = vector.broadcast %174 : f32 to vector<2x256xf32>
    %176 = arith.mulf %175, %173 : vector<2x256xf32>
    %177 = arith.addf %156, %176 : vector<2x256xf32>
    %c29 = arith.constant 29 : index
    %178 = memref.load %arg3[%c29] : memref<144xf32, #tpu.memory_space<smem>>
    %179 = vector.broadcast %178 : f32 to vector<2x256xf32>
    %180 = arith.mulf %179, %173 : vector<2x256xf32>
    %181 = arith.addf %160, %180 : vector<2x256xf32>
    %c30 = arith.constant 30 : index
    %182 = memref.load %arg3[%c30] : memref<144xf32, #tpu.memory_space<smem>>
    %183 = vector.broadcast %182 : f32 to vector<2x256xf32>
    %184 = arith.mulf %183, %173 : vector<2x256xf32>
    %185 = arith.addf %164, %184 : vector<2x256xf32>
    %c31 = arith.constant 31 : index
    %186 = memref.load %arg3[%c31] : memref<144xf32, #tpu.memory_space<smem>>
    %187 = vector.broadcast %186 : f32 to vector<2x256xf32>
    %188 = arith.mulf %187, %173 : vector<2x256xf32>
    %189 = arith.addf %168, %188 : vector<2x256xf32>
    %c2_35 = arith.constant 2 : index
    %c0_36 = arith.constant 0 : index
    %190 = vector.load %arg2[%c2_35, %c0_36] : memref<9x256xf32, #tpu.memory_space<vmem>>, vector<1x256xf32>
    %cst_37 = arith.constant 0.000000e+00 : f32
    %191 = vector.broadcast %cst_37 : f32 to vector<1x256xf32>
    %192 = arith.cmpf one, %190, %191 : vector<1x256xf32>
    %c15_i32 = arith.constant 15 : i32
    %193 = tpu.dynamic_rotate %1 by %c15_i32 dim 1 : vector<2x256xf32>, i32 -> vector<2x256xf32>
    %cst_38 = arith.constant 0.000000e+00 : f32
    %194 = vector.shape_cast %192 : vector<1x256xi1> to vector<1x256xi1>
    %195 = vector.broadcast %194 : vector<1x256xi1> to vector<2x256xi1>
    %196 = vector.broadcast %cst_38 : f32 to vector<2x256xf32>
    %197 = arith.select %195, %193, %196 : vector<2x256xi1>, vector<2x256xf32>
    %c32 = arith.constant 32 : index
    %198 = memref.load %arg3[%c32] : memref<144xf32, #tpu.memory_space<smem>>
    %199 = vector.broadcast %198 : f32 to vector<2x256xf32>
    %200 = arith.mulf %199, %197 : vector<2x256xf32>
    %201 = arith.addf %177, %200 : vector<2x256xf32>
    %c33 = arith.constant 33 : index
    %202 = memref.load %arg3[%c33] : memref<144xf32, #tpu.memory_space<smem>>
    %203 = vector.broadcast %202 : f32 to vector<2x256xf32>
    %204 = arith.mulf %203, %197 : vector<2x256xf32>
    %205 = arith.addf %181, %204 : vector<2x256xf32>
    %c34 = arith.constant 34 : index
    %206 = memref.load %arg3[%c34] : memref<144xf32, #tpu.memory_space<smem>>
    %207 = vector.broadcast %206 : f32 to vector<2x256xf32>
    %208 = arith.mulf %207, %197 : vector<2x256xf32>
    %209 = arith.addf %185, %208 : vector<2x256xf32>
    %c35 = arith.constant 35 : index
    %210 = memref.load %arg3[%c35] : memref<144xf32, #tpu.memory_space<smem>>
    %211 = vector.broadcast %210 : f32 to vector<2x256xf32>
    %212 = arith.mulf %211, %197 : vector<2x256xf32>
    %213 = arith.addf %189, %212 : vector<2x256xf32>
    %c15_i32_39 = arith.constant 15 : i32
    %214 = tpu.dynamic_rotate %3 by %c15_i32_39 dim 1 : vector<2x256xf32>, i32 -> vector<2x256xf32>
    %cst_40 = arith.constant 0.000000e+00 : f32
    %215 = vector.shape_cast %192 : vector<1x256xi1> to vector<1x256xi1>
    %216 = vector.broadcast %215 : vector<1x256xi1> to vector<2x256xi1>
    %217 = vector.broadcast %cst_40 : f32 to vector<2x256xf32>
    %218 = arith.select %216, %214, %217 : vector<2x256xi1>, vector<2x256xf32>
    %c36 = arith.constant 36 : index
    %219 = memref.load %arg3[%c36] : memref<144xf32, #tpu.memory_space<smem>>
    %220 = vector.broadcast %219 : f32 to vector<2x256xf32>
    %221 = arith.mulf %220, %218 : vector<2x256xf32>
    %222 = arith.addf %201, %221 : vector<2x256xf32>
    %c37 = arith.constant 37 : index
    %223 = memref.load %arg3[%c37] : memref<144xf32, #tpu.memory_space<smem>>
    %224 = vector.broadcast %223 : f32 to vector<2x256xf32>
    %225 = arith.mulf %224, %218 : vector<2x256xf32>
    %226 = arith.addf %205, %225 : vector<2x256xf32>
    %c38 = arith.constant 38 : index
    %227 = memref.load %arg3[%c38] : memref<144xf32, #tpu.memory_space<smem>>
    %228 = vector.broadcast %227 : f32 to vector<2x256xf32>
    %229 = arith.mulf %228, %218 : vector<2x256xf32>
    %230 = arith.addf %209, %229 : vector<2x256xf32>
    %c39 = arith.constant 39 : index
    %231 = memref.load %arg3[%c39] : memref<144xf32, #tpu.memory_space<smem>>
    %232 = vector.broadcast %231 : f32 to vector<2x256xf32>
    %233 = arith.mulf %232, %218 : vector<2x256xf32>
    %234 = arith.addf %213, %233 : vector<2x256xf32>
    %c15_i32_41 = arith.constant 15 : i32
    %235 = tpu.dynamic_rotate %5 by %c15_i32_41 dim 1 : vector<2x256xf32>, i32 -> vector<2x256xf32>
    %cst_42 = arith.constant 0.000000e+00 : f32
    %236 = vector.shape_cast %192 : vector<1x256xi1> to vector<1x256xi1>
    %237 = vector.broadcast %236 : vector<1x256xi1> to vector<2x256xi1>
    %238 = vector.broadcast %cst_42 : f32 to vector<2x256xf32>
    %239 = arith.select %237, %235, %238 : vector<2x256xi1>, vector<2x256xf32>
    %c40 = arith.constant 40 : index
    %240 = memref.load %arg3[%c40] : memref<144xf32, #tpu.memory_space<smem>>
    %241 = vector.broadcast %240 : f32 to vector<2x256xf32>
    %242 = arith.mulf %241, %239 : vector<2x256xf32>
    %243 = arith.addf %222, %242 : vector<2x256xf32>
    %c41 = arith.constant 41 : index
    %244 = memref.load %arg3[%c41] : memref<144xf32, #tpu.memory_space<smem>>
    %245 = vector.broadcast %244 : f32 to vector<2x256xf32>
    %246 = arith.mulf %245, %239 : vector<2x256xf32>
    %247 = arith.addf %226, %246 : vector<2x256xf32>
    %c42 = arith.constant 42 : index
    %248 = memref.load %arg3[%c42] : memref<144xf32, #tpu.memory_space<smem>>
    %249 = vector.broadcast %248 : f32 to vector<2x256xf32>
    %250 = arith.mulf %249, %239 : vector<2x256xf32>
    %251 = arith.addf %230, %250 : vector<2x256xf32>
    %c43 = arith.constant 43 : index
    %252 = memref.load %arg3[%c43] : memref<144xf32, #tpu.memory_space<smem>>
    %253 = vector.broadcast %252 : f32 to vector<2x256xf32>
    %254 = arith.mulf %253, %239 : vector<2x256xf32>
    %255 = arith.addf %234, %254 : vector<2x256xf32>
    %c15_i32_43 = arith.constant 15 : i32
    %256 = tpu.dynamic_rotate %7 by %c15_i32_43 dim 1 : vector<2x256xf32>, i32 -> vector<2x256xf32>
    %cst_44 = arith.constant 0.000000e+00 : f32
    %257 = vector.shape_cast %192 : vector<1x256xi1> to vector<1x256xi1>
    %258 = vector.broadcast %257 : vector<1x256xi1> to vector<2x256xi1>
    %259 = vector.broadcast %cst_44 : f32 to vector<2x256xf32>
    %260 = arith.select %258, %256, %259 : vector<2x256xi1>, vector<2x256xf32>
    %c44 = arith.constant 44 : index
    %261 = memref.load %arg3[%c44] : memref<144xf32, #tpu.memory_space<smem>>
    %262 = vector.broadcast %261 : f32 to vector<2x256xf32>
    %263 = arith.mulf %262, %260 : vector<2x256xf32>
    %264 = arith.addf %243, %263 : vector<2x256xf32>
    %c45 = arith.constant 45 : index
    %265 = memref.load %arg3[%c45] : memref<144xf32, #tpu.memory_space<smem>>
    %266 = vector.broadcast %265 : f32 to vector<2x256xf32>
    %267 = arith.mulf %266, %260 : vector<2x256xf32>
    %268 = arith.addf %247, %267 : vector<2x256xf32>
    %c46 = arith.constant 46 : index
    %269 = memref.load %arg3[%c46] : memref<144xf32, #tpu.memory_space<smem>>
    %270 = vector.broadcast %269 : f32 to vector<2x256xf32>
    %271 = arith.mulf %270, %260 : vector<2x256xf32>
    %272 = arith.addf %251, %271 : vector<2x256xf32>
    %c47 = arith.constant 47 : index
    %273 = memref.load %arg3[%c47] : memref<144xf32, #tpu.memory_space<smem>>
    %274 = vector.broadcast %273 : f32 to vector<2x256xf32>
    %275 = arith.mulf %274, %260 : vector<2x256xf32>
    %276 = arith.addf %255, %275 : vector<2x256xf32>
    %c3_45 = arith.constant 3 : index
    %c0_46 = arith.constant 0 : index
    %277 = vector.load %arg2[%c3_45, %c0_46] : memref<9x256xf32, #tpu.memory_space<vmem>>, vector<1x256xf32>
    %cst_47 = arith.constant 0.000000e+00 : f32
    %278 = vector.broadcast %cst_47 : f32 to vector<1x256xf32>
    %279 = arith.cmpf one, %277, %278 : vector<1x256xf32>
    %c1_i32 = arith.constant 1 : i32
    %280 = tpu.dynamic_rotate %1 by %c1_i32 dim 1 : vector<2x256xf32>, i32 -> vector<2x256xf32>
    %cst_48 = arith.constant 0.000000e+00 : f32
    %281 = vector.shape_cast %279 : vector<1x256xi1> to vector<1x256xi1>
    %282 = vector.broadcast %281 : vector<1x256xi1> to vector<2x256xi1>
    %283 = vector.broadcast %cst_48 : f32 to vector<2x256xf32>
    %284 = arith.select %282, %280, %283 : vector<2x256xi1>, vector<2x256xf32>
    %c48 = arith.constant 48 : index
    %285 = memref.load %arg3[%c48] : memref<144xf32, #tpu.memory_space<smem>>
    %286 = vector.broadcast %285 : f32 to vector<2x256xf32>
    %287 = arith.mulf %286, %284 : vector<2x256xf32>
    %288 = arith.addf %264, %287 : vector<2x256xf32>
    %c49 = arith.constant 49 : index
    %289 = memref.load %arg3[%c49] : memref<144xf32, #tpu.memory_space<smem>>
    %290 = vector.broadcast %289 : f32 to vector<2x256xf32>
    %291 = arith.mulf %290, %284 : vector<2x256xf32>
    %292 = arith.addf %268, %291 : vector<2x256xf32>
    %c50 = arith.constant 50 : index
    %293 = memref.load %arg3[%c50] : memref<144xf32, #tpu.memory_space<smem>>
    %294 = vector.broadcast %293 : f32 to vector<2x256xf32>
    %295 = arith.mulf %294, %284 : vector<2x256xf32>
    %296 = arith.addf %272, %295 : vector<2x256xf32>
    %c51 = arith.constant 51 : index
    %297 = memref.load %arg3[%c51] : memref<144xf32, #tpu.memory_space<smem>>
    %298 = vector.broadcast %297 : f32 to vector<2x256xf32>
    %299 = arith.mulf %298, %284 : vector<2x256xf32>
    %300 = arith.addf %276, %299 : vector<2x256xf32>
    %c1_i32_49 = arith.constant 1 : i32
    %301 = tpu.dynamic_rotate %3 by %c1_i32_49 dim 1 : vector<2x256xf32>, i32 -> vector<2x256xf32>
    %cst_50 = arith.constant 0.000000e+00 : f32
    %302 = vector.shape_cast %279 : vector<1x256xi1> to vector<1x256xi1>
    %303 = vector.broadcast %302 : vector<1x256xi1> to vector<2x256xi1>
    %304 = vector.broadcast %cst_50 : f32 to vector<2x256xf32>
    %305 = arith.select %303, %301, %304 : vector<2x256xi1>, vector<2x256xf32>
    %c52 = arith.constant 52 : index
    %306 = memref.load %arg3[%c52] : memref<144xf32, #tpu.memory_space<smem>>
    %307 = vector.broadcast %306 : f32 to vector<2x256xf32>
    %308 = arith.mulf %307, %305 : vector<2x256xf32>
    %309 = arith.addf %288, %308 : vector<2x256xf32>
    %c53 = arith.constant 53 : index
    %310 = memref.load %arg3[%c53] : memref<144xf32, #tpu.memory_space<smem>>
    %311 = vector.broadcast %310 : f32 to vector<2x256xf32>
    %312 = arith.mulf %311, %305 : vector<2x256xf32>
    %313 = arith.addf %292, %312 : vector<2x256xf32>
    %c54 = arith.constant 54 : index
    %314 = memref.load %arg3[%c54] : memref<144xf32, #tpu.memory_space<smem>>
    %315 = vector.broadcast %314 : f32 to vector<2x256xf32>
    %316 = arith.mulf %315, %305 : vector<2x256xf32>
    %317 = arith.addf %296, %316 : vector<2x256xf32>
    %c55 = arith.constant 55 : index
    %318 = memref.load %arg3[%c55] : memref<144xf32, #tpu.memory_space<smem>>
    %319 = vector.broadcast %318 : f32 to vector<2x256xf32>
    %320 = arith.mulf %319, %305 : vector<2x256xf32>
    %321 = arith.addf %300, %320 : vector<2x256xf32>
    %c1_i32_51 = arith.constant 1 : i32
    %322 = tpu.dynamic_rotate %5 by %c1_i32_51 dim 1 : vector<2x256xf32>, i32 -> vector<2x256xf32>
    %cst_52 = arith.constant 0.000000e+00 : f32
    %323 = vector.shape_cast %279 : vector<1x256xi1> to vector<1x256xi1>
    %324 = vector.broadcast %323 : vector<1x256xi1> to vector<2x256xi1>
    %325 = vector.broadcast %cst_52 : f32 to vector<2x256xf32>
    %326 = arith.select %324, %322, %325 : vector<2x256xi1>, vector<2x256xf32>
    %c56 = arith.constant 56 : index
    %327 = memref.load %arg3[%c56] : memref<144xf32, #tpu.memory_space<smem>>
    %328 = vector.broadcast %327 : f32 to vector<2x256xf32>
    %329 = arith.mulf %328, %326 : vector<2x256xf32>
    %330 = arith.addf %309, %329 : vector<2x256xf32>
    %c57 = arith.constant 57 : index
    %331 = memref.load %arg3[%c57] : memref<144xf32, #tpu.memory_space<smem>>
    %332 = vector.broadcast %331 : f32 to vector<2x256xf32>
    %333 = arith.mulf %332, %326 : vector<2x256xf32>
    %334 = arith.addf %313, %333 : vector<2x256xf32>
    %c58 = arith.constant 58 : index
    %335 = memref.load %arg3[%c58] : memref<144xf32, #tpu.memory_space<smem>>
    %336 = vector.broadcast %335 : f32 to vector<2x256xf32>
    %337 = arith.mulf %336, %326 : vector<2x256xf32>
    %338 = arith.addf %317, %337 : vector<2x256xf32>
    %c59 = arith.constant 59 : index
    %339 = memref.load %arg3[%c59] : memref<144xf32, #tpu.memory_space<smem>>
    %340 = vector.broadcast %339 : f32 to vector<2x256xf32>
    %341 = arith.mulf %340, %326 : vector<2x256xf32>
    %342 = arith.addf %321, %341 : vector<2x256xf32>
    %c1_i32_53 = arith.constant 1 : i32
    %343 = tpu.dynamic_rotate %7 by %c1_i32_53 dim 1 : vector<2x256xf32>, i32 -> vector<2x256xf32>
    %cst_54 = arith.constant 0.000000e+00 : f32
    %344 = vector.shape_cast %279 : vector<1x256xi1> to vector<1x256xi1>
    %345 = vector.broadcast %344 : vector<1x256xi1> to vector<2x256xi1>
    %346 = vector.broadcast %cst_54 : f32 to vector<2x256xf32>
    %347 = arith.select %345, %343, %346 : vector<2x256xi1>, vector<2x256xf32>
    %c60 = arith.constant 60 : index
    %348 = memref.load %arg3[%c60] : memref<144xf32, #tpu.memory_space<smem>>
    %349 = vector.broadcast %348 : f32 to vector<2x256xf32>
    %350 = arith.mulf %349, %347 : vector<2x256xf32>
    %351 = arith.addf %330, %350 : vector<2x256xf32>
    %c61 = arith.constant 61 : index
    %352 = memref.load %arg3[%c61] : memref<144xf32, #tpu.memory_space<smem>>
    %353 = vector.broadcast %352 : f32 to vector<2x256xf32>
    %354 = arith.mulf %353, %347 : vector<2x256xf32>
    %355 = arith.addf %334, %354 : vector<2x256xf32>
    %c62 = arith.constant 62 : index
    %356 = memref.load %arg3[%c62] : memref<144xf32, #tpu.memory_space<smem>>
    %357 = vector.broadcast %356 : f32 to vector<2x256xf32>
    %358 = arith.mulf %357, %347 : vector<2x256xf32>
    %359 = arith.addf %338, %358 : vector<2x256xf32>
    %c63 = arith.constant 63 : index
    %360 = memref.load %arg3[%c63] : memref<144xf32, #tpu.memory_space<smem>>
    %361 = vector.broadcast %360 : f32 to vector<2x256xf32>
    %362 = arith.mulf %361, %347 : vector<2x256xf32>
    %363 = arith.addf %342, %362 : vector<2x256xf32>
    %c64 = arith.constant 64 : index
    %364 = memref.load %arg3[%c64] : memref<144xf32, #tpu.memory_space<smem>>
    %365 = vector.broadcast %364 : f32 to vector<2x256xf32>
    %366 = arith.mulf %365, %1 : vector<2x256xf32>
    %367 = arith.addf %351, %366 : vector<2x256xf32>
    %c65 = arith.constant 65 : index
    %368 = memref.load %arg3[%c65] : memref<144xf32, #tpu.memory_space<smem>>
    %369 = vector.broadcast %368 : f32 to vector<2x256xf32>
    %370 = arith.mulf %369, %1 : vector<2x256xf32>
    %371 = arith.addf %355, %370 : vector<2x256xf32>
    %c66 = arith.constant 66 : index
    %372 = memref.load %arg3[%c66] : memref<144xf32, #tpu.memory_space<smem>>
    %373 = vector.broadcast %372 : f32 to vector<2x256xf32>
    %374 = arith.mulf %373, %1 : vector<2x256xf32>
    %375 = arith.addf %359, %374 : vector<2x256xf32>
    %c67 = arith.constant 67 : index
    %376 = memref.load %arg3[%c67] : memref<144xf32, #tpu.memory_space<smem>>
    %377 = vector.broadcast %376 : f32 to vector<2x256xf32>
    %378 = arith.mulf %377, %1 : vector<2x256xf32>
    %379 = arith.addf %363, %378 : vector<2x256xf32>
    %c68 = arith.constant 68 : index
    %380 = memref.load %arg3[%c68] : memref<144xf32, #tpu.memory_space<smem>>
    %381 = vector.broadcast %380 : f32 to vector<2x256xf32>
    %382 = arith.mulf %381, %3 : vector<2x256xf32>
    %383 = arith.addf %367, %382 : vector<2x256xf32>
    %c69 = arith.constant 69 : index
    %384 = memref.load %arg3[%c69] : memref<144xf32, #tpu.memory_space<smem>>
    %385 = vector.broadcast %384 : f32 to vector<2x256xf32>
    %386 = arith.mulf %385, %3 : vector<2x256xf32>
    %387 = arith.addf %371, %386 : vector<2x256xf32>
    %c70 = arith.constant 70 : index
    %388 = memref.load %arg3[%c70] : memref<144xf32, #tpu.memory_space<smem>>
    %389 = vector.broadcast %388 : f32 to vector<2x256xf32>
    %390 = arith.mulf %389, %3 : vector<2x256xf32>
    %391 = arith.addf %375, %390 : vector<2x256xf32>
    %c71 = arith.constant 71 : index
    %392 = memref.load %arg3[%c71] : memref<144xf32, #tpu.memory_space<smem>>
    %393 = vector.broadcast %392 : f32 to vector<2x256xf32>
    %394 = arith.mulf %393, %3 : vector<2x256xf32>
    %395 = arith.addf %379, %394 : vector<2x256xf32>
    %c72 = arith.constant 72 : index
    %396 = memref.load %arg3[%c72] : memref<144xf32, #tpu.memory_space<smem>>
    %397 = vector.broadcast %396 : f32 to vector<2x256xf32>
    %398 = arith.mulf %397, %5 : vector<2x256xf32>
    %399 = arith.addf %383, %398 : vector<2x256xf32>
    %c73 = arith.constant 73 : index
    %400 = memref.load %arg3[%c73] : memref<144xf32, #tpu.memory_space<smem>>
    %401 = vector.broadcast %400 : f32 to vector<2x256xf32>
    %402 = arith.mulf %401, %5 : vector<2x256xf32>
    %403 = arith.addf %387, %402 : vector<2x256xf32>
    %c74 = arith.constant 74 : index
    %404 = memref.load %arg3[%c74] : memref<144xf32, #tpu.memory_space<smem>>
    %405 = vector.broadcast %404 : f32 to vector<2x256xf32>
    %406 = arith.mulf %405, %5 : vector<2x256xf32>
    %407 = arith.addf %391, %406 : vector<2x256xf32>
    %c75 = arith.constant 75 : index
    %408 = memref.load %arg3[%c75] : memref<144xf32, #tpu.memory_space<smem>>
    %409 = vector.broadcast %408 : f32 to vector<2x256xf32>
    %410 = arith.mulf %409, %5 : vector<2x256xf32>
    %411 = arith.addf %395, %410 : vector<2x256xf32>
    %c76 = arith.constant 76 : index
    %412 = memref.load %arg3[%c76] : memref<144xf32, #tpu.memory_space<smem>>
    %413 = vector.broadcast %412 : f32 to vector<2x256xf32>
    %414 = arith.mulf %413, %7 : vector<2x256xf32>
    %415 = arith.addf %399, %414 : vector<2x256xf32>
    %c77 = arith.constant 77 : index
    %416 = memref.load %arg3[%c77] : memref<144xf32, #tpu.memory_space<smem>>
    %417 = vector.broadcast %416 : f32 to vector<2x256xf32>
    %418 = arith.mulf %417, %7 : vector<2x256xf32>
    %419 = arith.addf %403, %418 : vector<2x256xf32>
    %c78 = arith.constant 78 : index
    %420 = memref.load %arg3[%c78] : memref<144xf32, #tpu.memory_space<smem>>
    %421 = vector.broadcast %420 : f32 to vector<2x256xf32>
    %422 = arith.mulf %421, %7 : vector<2x256xf32>
    %423 = arith.addf %407, %422 : vector<2x256xf32>
    %c79 = arith.constant 79 : index
    %424 = memref.load %arg3[%c79] : memref<144xf32, #tpu.memory_space<smem>>
    %425 = vector.broadcast %424 : f32 to vector<2x256xf32>
    %426 = arith.mulf %425, %7 : vector<2x256xf32>
    %427 = arith.addf %411, %426 : vector<2x256xf32>
    %c5_55 = arith.constant 5 : index
    %c0_56 = arith.constant 0 : index
    %428 = vector.load %arg2[%c5_55, %c0_56] : memref<9x256xf32, #tpu.memory_space<vmem>>, vector<1x256xf32>
    %cst_57 = arith.constant 0.000000e+00 : f32
    %429 = vector.broadcast %cst_57 : f32 to vector<1x256xf32>
    %430 = arith.cmpf one, %428, %429 : vector<1x256xf32>
    %c255_i32 = arith.constant 255 : i32
    %431 = tpu.dynamic_rotate %1 by %c255_i32 dim 1 : vector<2x256xf32>, i32 -> vector<2x256xf32>
    %cst_58 = arith.constant 0.000000e+00 : f32
    %432 = vector.shape_cast %430 : vector<1x256xi1> to vector<1x256xi1>
    %433 = vector.broadcast %432 : vector<1x256xi1> to vector<2x256xi1>
    %434 = vector.broadcast %cst_58 : f32 to vector<2x256xf32>
    %435 = arith.select %433, %431, %434 : vector<2x256xi1>, vector<2x256xf32>
    %c80 = arith.constant 80 : index
    %436 = memref.load %arg3[%c80] : memref<144xf32, #tpu.memory_space<smem>>
    %437 = vector.broadcast %436 : f32 to vector<2x256xf32>
    %438 = arith.mulf %437, %435 : vector<2x256xf32>
    %439 = arith.addf %415, %438 : vector<2x256xf32>
    %c81 = arith.constant 81 : index
    %440 = memref.load %arg3[%c81] : memref<144xf32, #tpu.memory_space<smem>>
    %441 = vector.broadcast %440 : f32 to vector<2x256xf32>
    %442 = arith.mulf %441, %435 : vector<2x256xf32>
    %443 = arith.addf %419, %442 : vector<2x256xf32>
    %c82 = arith.constant 82 : index
    %444 = memref.load %arg3[%c82] : memref<144xf32, #tpu.memory_space<smem>>
    %445 = vector.broadcast %444 : f32 to vector<2x256xf32>
    %446 = arith.mulf %445, %435 : vector<2x256xf32>
    %447 = arith.addf %423, %446 : vector<2x256xf32>
    %c83 = arith.constant 83 : index
    %448 = memref.load %arg3[%c83] : memref<144xf32, #tpu.memory_space<smem>>
    %449 = vector.broadcast %448 : f32 to vector<2x256xf32>
    %450 = arith.mulf %449, %435 : vector<2x256xf32>
    %451 = arith.addf %427, %450 : vector<2x256xf32>
    %c255_i32_59 = arith.constant 255 : i32
    %452 = tpu.dynamic_rotate %3 by %c255_i32_59 dim 1 : vector<2x256xf32>, i32 -> vector<2x256xf32>
    %cst_60 = arith.constant 0.000000e+00 : f32
    %453 = vector.shape_cast %430 : vector<1x256xi1> to vector<1x256xi1>
    %454 = vector.broadcast %453 : vector<1x256xi1> to vector<2x256xi1>
    %455 = vector.broadcast %cst_60 : f32 to vector<2x256xf32>
    %456 = arith.select %454, %452, %455 : vector<2x256xi1>, vector<2x256xf32>
    %c84 = arith.constant 84 : index
    %457 = memref.load %arg3[%c84] : memref<144xf32, #tpu.memory_space<smem>>
    %458 = vector.broadcast %457 : f32 to vector<2x256xf32>
    %459 = arith.mulf %458, %456 : vector<2x256xf32>
    %460 = arith.addf %439, %459 : vector<2x256xf32>
    %c85 = arith.constant 85 : index
    %461 = memref.load %arg3[%c85] : memref<144xf32, #tpu.memory_space<smem>>
    %462 = vector.broadcast %461 : f32 to vector<2x256xf32>
    %463 = arith.mulf %462, %456 : vector<2x256xf32>
    %464 = arith.addf %443, %463 : vector<2x256xf32>
    %c86 = arith.constant 86 : index
    %465 = memref.load %arg3[%c86] : memref<144xf32, #tpu.memory_space<smem>>
    %466 = vector.broadcast %465 : f32 to vector<2x256xf32>
    %467 = arith.mulf %466, %456 : vector<2x256xf32>
    %468 = arith.addf %447, %467 : vector<2x256xf32>
    %c87 = arith.constant 87 : index
    %469 = memref.load %arg3[%c87] : memref<144xf32, #tpu.memory_space<smem>>
    %470 = vector.broadcast %469 : f32 to vector<2x256xf32>
    %471 = arith.mulf %470, %456 : vector<2x256xf32>
    %472 = arith.addf %451, %471 : vector<2x256xf32>
    %c255_i32_61 = arith.constant 255 : i32
    %473 = tpu.dynamic_rotate %5 by %c255_i32_61 dim 1 : vector<2x256xf32>, i32 -> vector<2x256xf32>
    %cst_62 = arith.constant 0.000000e+00 : f32
    %474 = vector.shape_cast %430 : vector<1x256xi1> to vector<1x256xi1>
    %475 = vector.broadcast %474 : vector<1x256xi1> to vector<2x256xi1>
    %476 = vector.broadcast %cst_62 : f32 to vector<2x256xf32>
    %477 = arith.select %475, %473, %476 : vector<2x256xi1>, vector<2x256xf32>
    %c88 = arith.constant 88 : index
    %478 = memref.load %arg3[%c88] : memref<144xf32, #tpu.memory_space<smem>>
    %479 = vector.broadcast %478 : f32 to vector<2x256xf32>
    %480 = arith.mulf %479, %477 : vector<2x256xf32>
    %481 = arith.addf %460, %480 : vector<2x256xf32>
    %c89 = arith.constant 89 : index
    %482 = memref.load %arg3[%c89] : memref<144xf32, #tpu.memory_space<smem>>
    %483 = vector.broadcast %482 : f32 to vector<2x256xf32>
    %484 = arith.mulf %483, %477 : vector<2x256xf32>
    %485 = arith.addf %464, %484 : vector<2x256xf32>
    %c90 = arith.constant 90 : index
    %486 = memref.load %arg3[%c90] : memref<144xf32, #tpu.memory_space<smem>>
    %487 = vector.broadcast %486 : f32 to vector<2x256xf32>
    %488 = arith.mulf %487, %477 : vector<2x256xf32>
    %489 = arith.addf %468, %488 : vector<2x256xf32>
    %c91 = arith.constant 91 : index
    %490 = memref.load %arg3[%c91] : memref<144xf32, #tpu.memory_space<smem>>
    %491 = vector.broadcast %490 : f32 to vector<2x256xf32>
    %492 = arith.mulf %491, %477 : vector<2x256xf32>
    %493 = arith.addf %472, %492 : vector<2x256xf32>
    %c255_i32_63 = arith.constant 255 : i32
    %494 = tpu.dynamic_rotate %7 by %c255_i32_63 dim 1 : vector<2x256xf32>, i32 -> vector<2x256xf32>
    %cst_64 = arith.constant 0.000000e+00 : f32
    %495 = vector.shape_cast %430 : vector<1x256xi1> to vector<1x256xi1>
    %496 = vector.broadcast %495 : vector<1x256xi1> to vector<2x256xi1>
    %497 = vector.broadcast %cst_64 : f32 to vector<2x256xf32>
    %498 = arith.select %496, %494, %497 : vector<2x256xi1>, vector<2x256xf32>
    %c92 = arith.constant 92 : index
    %499 = memref.load %arg3[%c92] : memref<144xf32, #tpu.memory_space<smem>>
    %500 = vector.broadcast %499 : f32 to vector<2x256xf32>
    %501 = arith.mulf %500, %498 : vector<2x256xf32>
    %502 = arith.addf %481, %501 : vector<2x256xf32>
    %c93 = arith.constant 93 : index
    %503 = memref.load %arg3[%c93] : memref<144xf32, #tpu.memory_space<smem>>
    %504 = vector.broadcast %503 : f32 to vector<2x256xf32>
    %505 = arith.mulf %504, %498 : vector<2x256xf32>
    %506 = arith.addf %485, %505 : vector<2x256xf32>
    %c94 = arith.constant 94 : index
    %507 = memref.load %arg3[%c94] : memref<144xf32, #tpu.memory_space<smem>>
    %508 = vector.broadcast %507 : f32 to vector<2x256xf32>
    %509 = arith.mulf %508, %498 : vector<2x256xf32>
    %510 = arith.addf %489, %509 : vector<2x256xf32>
    %c95 = arith.constant 95 : index
    %511 = memref.load %arg3[%c95] : memref<144xf32, #tpu.memory_space<smem>>
    %512 = vector.broadcast %511 : f32 to vector<2x256xf32>
    %513 = arith.mulf %512, %498 : vector<2x256xf32>
    %514 = arith.addf %493, %513 : vector<2x256xf32>
    %c6_65 = arith.constant 6 : index
    %c0_66 = arith.constant 0 : index
    %515 = vector.load %arg2[%c6_65, %c0_66] : memref<9x256xf32, #tpu.memory_space<vmem>>, vector<1x256xf32>
    %cst_67 = arith.constant 0.000000e+00 : f32
    %516 = vector.broadcast %cst_67 : f32 to vector<1x256xf32>
    %517 = arith.cmpf one, %515, %516 : vector<1x256xf32>
    %c241_i32 = arith.constant 241 : i32
    %518 = tpu.dynamic_rotate %1 by %c241_i32 dim 1 : vector<2x256xf32>, i32 -> vector<2x256xf32>
    %cst_68 = arith.constant 0.000000e+00 : f32
    %519 = vector.shape_cast %517 : vector<1x256xi1> to vector<1x256xi1>
    %520 = vector.broadcast %519 : vector<1x256xi1> to vector<2x256xi1>
    %521 = vector.broadcast %cst_68 : f32 to vector<2x256xf32>
    %522 = arith.select %520, %518, %521 : vector<2x256xi1>, vector<2x256xf32>
    %c96 = arith.constant 96 : index
    %523 = memref.load %arg3[%c96] : memref<144xf32, #tpu.memory_space<smem>>
    %524 = vector.broadcast %523 : f32 to vector<2x256xf32>
    %525 = arith.mulf %524, %522 : vector<2x256xf32>
    %526 = arith.addf %502, %525 : vector<2x256xf32>
    %c97 = arith.constant 97 : index
    %527 = memref.load %arg3[%c97] : memref<144xf32, #tpu.memory_space<smem>>
    %528 = vector.broadcast %527 : f32 to vector<2x256xf32>
    %529 = arith.mulf %528, %522 : vector<2x256xf32>
    %530 = arith.addf %506, %529 : vector<2x256xf32>
    %c98 = arith.constant 98 : index
    %531 = memref.load %arg3[%c98] : memref<144xf32, #tpu.memory_space<smem>>
    %532 = vector.broadcast %531 : f32 to vector<2x256xf32>
    %533 = arith.mulf %532, %522 : vector<2x256xf32>
    %534 = arith.addf %510, %533 : vector<2x256xf32>
    %c99 = arith.constant 99 : index
    %535 = memref.load %arg3[%c99] : memref<144xf32, #tpu.memory_space<smem>>
    %536 = vector.broadcast %535 : f32 to vector<2x256xf32>
    %537 = arith.mulf %536, %522 : vector<2x256xf32>
    %538 = arith.addf %514, %537 : vector<2x256xf32>
    %c241_i32_69 = arith.constant 241 : i32
    %539 = tpu.dynamic_rotate %3 by %c241_i32_69 dim 1 : vector<2x256xf32>, i32 -> vector<2x256xf32>
    %cst_70 = arith.constant 0.000000e+00 : f32
    %540 = vector.shape_cast %517 : vector<1x256xi1> to vector<1x256xi1>
    %541 = vector.broadcast %540 : vector<1x256xi1> to vector<2x256xi1>
    %542 = vector.broadcast %cst_70 : f32 to vector<2x256xf32>
    %543 = arith.select %541, %539, %542 : vector<2x256xi1>, vector<2x256xf32>
    %c100 = arith.constant 100 : index
    %544 = memref.load %arg3[%c100] : memref<144xf32, #tpu.memory_space<smem>>
    %545 = vector.broadcast %544 : f32 to vector<2x256xf32>
    %546 = arith.mulf %545, %543 : vector<2x256xf32>
    %547 = arith.addf %526, %546 : vector<2x256xf32>
    %c101 = arith.constant 101 : index
    %548 = memref.load %arg3[%c101] : memref<144xf32, #tpu.memory_space<smem>>
    %549 = vector.broadcast %548 : f32 to vector<2x256xf32>
    %550 = arith.mulf %549, %543 : vector<2x256xf32>
    %551 = arith.addf %530, %550 : vector<2x256xf32>
    %c102 = arith.constant 102 : index
    %552 = memref.load %arg3[%c102] : memref<144xf32, #tpu.memory_space<smem>>
    %553 = vector.broadcast %552 : f32 to vector<2x256xf32>
    %554 = arith.mulf %553, %543 : vector<2x256xf32>
    %555 = arith.addf %534, %554 : vector<2x256xf32>
    %c103 = arith.constant 103 : index
    %556 = memref.load %arg3[%c103] : memref<144xf32, #tpu.memory_space<smem>>
    %557 = vector.broadcast %556 : f32 to vector<2x256xf32>
    %558 = arith.mulf %557, %543 : vector<2x256xf32>
    %559 = arith.addf %538, %558 : vector<2x256xf32>
    %c241_i32_71 = arith.constant 241 : i32
    %560 = tpu.dynamic_rotate %5 by %c241_i32_71 dim 1 : vector<2x256xf32>, i32 -> vector<2x256xf32>
    %cst_72 = arith.constant 0.000000e+00 : f32
    %561 = vector.shape_cast %517 : vector<1x256xi1> to vector<1x256xi1>
    %562 = vector.broadcast %561 : vector<1x256xi1> to vector<2x256xi1>
    %563 = vector.broadcast %cst_72 : f32 to vector<2x256xf32>
    %564 = arith.select %562, %560, %563 : vector<2x256xi1>, vector<2x256xf32>
    %c104 = arith.constant 104 : index
    %565 = memref.load %arg3[%c104] : memref<144xf32, #tpu.memory_space<smem>>
    %566 = vector.broadcast %565 : f32 to vector<2x256xf32>
    %567 = arith.mulf %566, %564 : vector<2x256xf32>
    %568 = arith.addf %547, %567 : vector<2x256xf32>
    %c105 = arith.constant 105 : index
    %569 = memref.load %arg3[%c105] : memref<144xf32, #tpu.memory_space<smem>>
    %570 = vector.broadcast %569 : f32 to vector<2x256xf32>
    %571 = arith.mulf %570, %564 : vector<2x256xf32>
    %572 = arith.addf %551, %571 : vector<2x256xf32>
    %c106 = arith.constant 106 : index
    %573 = memref.load %arg3[%c106] : memref<144xf32, #tpu.memory_space<smem>>
    %574 = vector.broadcast %573 : f32 to vector<2x256xf32>
    %575 = arith.mulf %574, %564 : vector<2x256xf32>
    %576 = arith.addf %555, %575 : vector<2x256xf32>
    %c107 = arith.constant 107 : index
    %577 = memref.load %arg3[%c107] : memref<144xf32, #tpu.memory_space<smem>>
    %578 = vector.broadcast %577 : f32 to vector<2x256xf32>
    %579 = arith.mulf %578, %564 : vector<2x256xf32>
    %580 = arith.addf %559, %579 : vector<2x256xf32>
    %c241_i32_73 = arith.constant 241 : i32
    %581 = tpu.dynamic_rotate %7 by %c241_i32_73 dim 1 : vector<2x256xf32>, i32 -> vector<2x256xf32>
    %cst_74 = arith.constant 0.000000e+00 : f32
    %582 = vector.shape_cast %517 : vector<1x256xi1> to vector<1x256xi1>
    %583 = vector.broadcast %582 : vector<1x256xi1> to vector<2x256xi1>
    %584 = vector.broadcast %cst_74 : f32 to vector<2x256xf32>
    %585 = arith.select %583, %581, %584 : vector<2x256xi1>, vector<2x256xf32>
    %c108 = arith.constant 108 : index
    %586 = memref.load %arg3[%c108] : memref<144xf32, #tpu.memory_space<smem>>
    %587 = vector.broadcast %586 : f32 to vector<2x256xf32>
    %588 = arith.mulf %587, %585 : vector<2x256xf32>
    %589 = arith.addf %568, %588 : vector<2x256xf32>
    %c109 = arith.constant 109 : index
    %590 = memref.load %arg3[%c109] : memref<144xf32, #tpu.memory_space<smem>>
    %591 = vector.broadcast %590 : f32 to vector<2x256xf32>
    %592 = arith.mulf %591, %585 : vector<2x256xf32>
    %593 = arith.addf %572, %592 : vector<2x256xf32>
    %c110 = arith.constant 110 : index
    %594 = memref.load %arg3[%c110] : memref<144xf32, #tpu.memory_space<smem>>
    %595 = vector.broadcast %594 : f32 to vector<2x256xf32>
    %596 = arith.mulf %595, %585 : vector<2x256xf32>
    %597 = arith.addf %576, %596 : vector<2x256xf32>
    %c111 = arith.constant 111 : index
    %598 = memref.load %arg3[%c111] : memref<144xf32, #tpu.memory_space<smem>>
    %599 = vector.broadcast %598 : f32 to vector<2x256xf32>
    %600 = arith.mulf %599, %585 : vector<2x256xf32>
    %601 = arith.addf %580, %600 : vector<2x256xf32>
    %c7_75 = arith.constant 7 : index
    %c0_76 = arith.constant 0 : index
    %602 = vector.load %arg2[%c7_75, %c0_76] : memref<9x256xf32, #tpu.memory_space<vmem>>, vector<1x256xf32>
    %cst_77 = arith.constant 0.000000e+00 : f32
    %603 = vector.broadcast %cst_77 : f32 to vector<1x256xf32>
    %604 = arith.cmpf one, %602, %603 : vector<1x256xf32>
    %c240_i32 = arith.constant 240 : i32
    %605 = tpu.dynamic_rotate %1 by %c240_i32 dim 1 : vector<2x256xf32>, i32 -> vector<2x256xf32>
    %cst_78 = arith.constant 0.000000e+00 : f32
    %606 = vector.shape_cast %604 : vector<1x256xi1> to vector<1x256xi1>
    %607 = vector.broadcast %606 : vector<1x256xi1> to vector<2x256xi1>
    %608 = vector.broadcast %cst_78 : f32 to vector<2x256xf32>
    %609 = arith.select %607, %605, %608 : vector<2x256xi1>, vector<2x256xf32>
    %c112 = arith.constant 112 : index
    %610 = memref.load %arg3[%c112] : memref<144xf32, #tpu.memory_space<smem>>
    %611 = vector.broadcast %610 : f32 to vector<2x256xf32>
    %612 = arith.mulf %611, %609 : vector<2x256xf32>
    %613 = arith.addf %589, %612 : vector<2x256xf32>
    %c113 = arith.constant 113 : index
    %614 = memref.load %arg3[%c113] : memref<144xf32, #tpu.memory_space<smem>>
    %615 = vector.broadcast %614 : f32 to vector<2x256xf32>
    %616 = arith.mulf %615, %609 : vector<2x256xf32>
    %617 = arith.addf %593, %616 : vector<2x256xf32>
    %c114 = arith.constant 114 : index
    %618 = memref.load %arg3[%c114] : memref<144xf32, #tpu.memory_space<smem>>
    %619 = vector.broadcast %618 : f32 to vector<2x256xf32>
    %620 = arith.mulf %619, %609 : vector<2x256xf32>
    %621 = arith.addf %597, %620 : vector<2x256xf32>
    %c115 = arith.constant 115 : index
    %622 = memref.load %arg3[%c115] : memref<144xf32, #tpu.memory_space<smem>>
    %623 = vector.broadcast %622 : f32 to vector<2x256xf32>
    %624 = arith.mulf %623, %609 : vector<2x256xf32>
    %625 = arith.addf %601, %624 : vector<2x256xf32>
    %c240_i32_79 = arith.constant 240 : i32
    %626 = tpu.dynamic_rotate %3 by %c240_i32_79 dim 1 : vector<2x256xf32>, i32 -> vector<2x256xf32>
    %cst_80 = arith.constant 0.000000e+00 : f32
    %627 = vector.shape_cast %604 : vector<1x256xi1> to vector<1x256xi1>
    %628 = vector.broadcast %627 : vector<1x256xi1> to vector<2x256xi1>
    %629 = vector.broadcast %cst_80 : f32 to vector<2x256xf32>
    %630 = arith.select %628, %626, %629 : vector<2x256xi1>, vector<2x256xf32>
    %c116 = arith.constant 116 : index
    %631 = memref.load %arg3[%c116] : memref<144xf32, #tpu.memory_space<smem>>
    %632 = vector.broadcast %631 : f32 to vector<2x256xf32>
    %633 = arith.mulf %632, %630 : vector<2x256xf32>
    %634 = arith.addf %613, %633 : vector<2x256xf32>
    %c117 = arith.constant 117 : index
    %635 = memref.load %arg3[%c117] : memref<144xf32, #tpu.memory_space<smem>>
    %636 = vector.broadcast %635 : f32 to vector<2x256xf32>
    %637 = arith.mulf %636, %630 : vector<2x256xf32>
    %638 = arith.addf %617, %637 : vector<2x256xf32>
    %c118 = arith.constant 118 : index
    %639 = memref.load %arg3[%c118] : memref<144xf32, #tpu.memory_space<smem>>
    %640 = vector.broadcast %639 : f32 to vector<2x256xf32>
    %641 = arith.mulf %640, %630 : vector<2x256xf32>
    %642 = arith.addf %621, %641 : vector<2x256xf32>
    %c119 = arith.constant 119 : index
    %643 = memref.load %arg3[%c119] : memref<144xf32, #tpu.memory_space<smem>>
    %644 = vector.broadcast %643 : f32 to vector<2x256xf32>
    %645 = arith.mulf %644, %630 : vector<2x256xf32>
    %646 = arith.addf %625, %645 : vector<2x256xf32>
    %c240_i32_81 = arith.constant 240 : i32
    %647 = tpu.dynamic_rotate %5 by %c240_i32_81 dim 1 : vector<2x256xf32>, i32 -> vector<2x256xf32>
    %cst_82 = arith.constant 0.000000e+00 : f32
    %648 = vector.shape_cast %604 : vector<1x256xi1> to vector<1x256xi1>
    %649 = vector.broadcast %648 : vector<1x256xi1> to vector<2x256xi1>
    %650 = vector.broadcast %cst_82 : f32 to vector<2x256xf32>
    %651 = arith.select %649, %647, %650 : vector<2x256xi1>, vector<2x256xf32>
    %c120 = arith.constant 120 : index
    %652 = memref.load %arg3[%c120] : memref<144xf32, #tpu.memory_space<smem>>
    %653 = vector.broadcast %652 : f32 to vector<2x256xf32>
    %654 = arith.mulf %653, %651 : vector<2x256xf32>
    %655 = arith.addf %634, %654 : vector<2x256xf32>
    %c121 = arith.constant 121 : index
    %656 = memref.load %arg3[%c121] : memref<144xf32, #tpu.memory_space<smem>>
    %657 = vector.broadcast %656 : f32 to vector<2x256xf32>
    %658 = arith.mulf %657, %651 : vector<2x256xf32>
    %659 = arith.addf %638, %658 : vector<2x256xf32>
    %c122 = arith.constant 122 : index
    %660 = memref.load %arg3[%c122] : memref<144xf32, #tpu.memory_space<smem>>
    %661 = vector.broadcast %660 : f32 to vector<2x256xf32>
    %662 = arith.mulf %661, %651 : vector<2x256xf32>
    %663 = arith.addf %642, %662 : vector<2x256xf32>
    %c123 = arith.constant 123 : index
    %664 = memref.load %arg3[%c123] : memref<144xf32, #tpu.memory_space<smem>>
    %665 = vector.broadcast %664 : f32 to vector<2x256xf32>
    %666 = arith.mulf %665, %651 : vector<2x256xf32>
    %667 = arith.addf %646, %666 : vector<2x256xf32>
    %c240_i32_83 = arith.constant 240 : i32
    %668 = tpu.dynamic_rotate %7 by %c240_i32_83 dim 1 : vector<2x256xf32>, i32 -> vector<2x256xf32>
    %cst_84 = arith.constant 0.000000e+00 : f32
    %669 = vector.shape_cast %604 : vector<1x256xi1> to vector<1x256xi1>
    %670 = vector.broadcast %669 : vector<1x256xi1> to vector<2x256xi1>
    %671 = vector.broadcast %cst_84 : f32 to vector<2x256xf32>
    %672 = arith.select %670, %668, %671 : vector<2x256xi1>, vector<2x256xf32>
    %c124 = arith.constant 124 : index
    %673 = memref.load %arg3[%c124] : memref<144xf32, #tpu.memory_space<smem>>
    %674 = vector.broadcast %673 : f32 to vector<2x256xf32>
    %675 = arith.mulf %674, %672 : vector<2x256xf32>
    %676 = arith.addf %655, %675 : vector<2x256xf32>
    %c125 = arith.constant 125 : index
    %677 = memref.load %arg3[%c125] : memref<144xf32, #tpu.memory_space<smem>>
    %678 = vector.broadcast %677 : f32 to vector<2x256xf32>
    %679 = arith.mulf %678, %672 : vector<2x256xf32>
    %680 = arith.addf %659, %679 : vector<2x256xf32>
    %c126 = arith.constant 126 : index
    %681 = memref.load %arg3[%c126] : memref<144xf32, #tpu.memory_space<smem>>
    %682 = vector.broadcast %681 : f32 to vector<2x256xf32>
    %683 = arith.mulf %682, %672 : vector<2x256xf32>
    %684 = arith.addf %663, %683 : vector<2x256xf32>
    %c127 = arith.constant 127 : index
    %685 = memref.load %arg3[%c127] : memref<144xf32, #tpu.memory_space<smem>>
    %686 = vector.broadcast %685 : f32 to vector<2x256xf32>
    %687 = arith.mulf %686, %672 : vector<2x256xf32>
    %688 = arith.addf %667, %687 : vector<2x256xf32>
    %c8_85 = arith.constant 8 : index
    %c0_86 = arith.constant 0 : index
    %689 = vector.load %arg2[%c8_85, %c0_86] : memref<9x256xf32, #tpu.memory_space<vmem>>, vector<1x256xf32>
    %cst_87 = arith.constant 0.000000e+00 : f32
    %690 = vector.broadcast %cst_87 : f32 to vector<1x256xf32>
    %691 = arith.cmpf one, %689, %690 : vector<1x256xf32>
    %c239_i32 = arith.constant 239 : i32
    %692 = tpu.dynamic_rotate %1 by %c239_i32 dim 1 : vector<2x256xf32>, i32 -> vector<2x256xf32>
    %cst_88 = arith.constant 0.000000e+00 : f32
    %693 = vector.shape_cast %691 : vector<1x256xi1> to vector<1x256xi1>
    %694 = vector.broadcast %693 : vector<1x256xi1> to vector<2x256xi1>
    %695 = vector.broadcast %cst_88 : f32 to vector<2x256xf32>
    %696 = arith.select %694, %692, %695 : vector<2x256xi1>, vector<2x256xf32>
    %c128 = arith.constant 128 : index
    %697 = memref.load %arg3[%c128] : memref<144xf32, #tpu.memory_space<smem>>
    %698 = vector.broadcast %697 : f32 to vector<2x256xf32>
    %699 = arith.mulf %698, %696 : vector<2x256xf32>
    %700 = arith.addf %676, %699 : vector<2x256xf32>
    %c129 = arith.constant 129 : index
    %701 = memref.load %arg3[%c129] : memref<144xf32, #tpu.memory_space<smem>>
    %702 = vector.broadcast %701 : f32 to vector<2x256xf32>
    %703 = arith.mulf %702, %696 : vector<2x256xf32>
    %704 = arith.addf %680, %703 : vector<2x256xf32>
    %c130 = arith.constant 130 : index
    %705 = memref.load %arg3[%c130] : memref<144xf32, #tpu.memory_space<smem>>
    %706 = vector.broadcast %705 : f32 to vector<2x256xf32>
    %707 = arith.mulf %706, %696 : vector<2x256xf32>
    %708 = arith.addf %684, %707 : vector<2x256xf32>
    %c131 = arith.constant 131 : index
    %709 = memref.load %arg3[%c131] : memref<144xf32, #tpu.memory_space<smem>>
    %710 = vector.broadcast %709 : f32 to vector<2x256xf32>
    %711 = arith.mulf %710, %696 : vector<2x256xf32>
    %712 = arith.addf %688, %711 : vector<2x256xf32>
    %c239_i32_89 = arith.constant 239 : i32
    %713 = tpu.dynamic_rotate %3 by %c239_i32_89 dim 1 : vector<2x256xf32>, i32 -> vector<2x256xf32>
    %cst_90 = arith.constant 0.000000e+00 : f32
    %714 = vector.shape_cast %691 : vector<1x256xi1> to vector<1x256xi1>
    %715 = vector.broadcast %714 : vector<1x256xi1> to vector<2x256xi1>
    %716 = vector.broadcast %cst_90 : f32 to vector<2x256xf32>
    %717 = arith.select %715, %713, %716 : vector<2x256xi1>, vector<2x256xf32>
    %c132 = arith.constant 132 : index
    %718 = memref.load %arg3[%c132] : memref<144xf32, #tpu.memory_space<smem>>
    %719 = vector.broadcast %718 : f32 to vector<2x256xf32>
    %720 = arith.mulf %719, %717 : vector<2x256xf32>
    %721 = arith.addf %700, %720 : vector<2x256xf32>
    %c133 = arith.constant 133 : index
    %722 = memref.load %arg3[%c133] : memref<144xf32, #tpu.memory_space<smem>>
    %723 = vector.broadcast %722 : f32 to vector<2x256xf32>
    %724 = arith.mulf %723, %717 : vector<2x256xf32>
    %725 = arith.addf %704, %724 : vector<2x256xf32>
    %c134 = arith.constant 134 : index
    %726 = memref.load %arg3[%c134] : memref<144xf32, #tpu.memory_space<smem>>
    %727 = vector.broadcast %726 : f32 to vector<2x256xf32>
    %728 = arith.mulf %727, %717 : vector<2x256xf32>
    %729 = arith.addf %708, %728 : vector<2x256xf32>
    %c135 = arith.constant 135 : index
    %730 = memref.load %arg3[%c135] : memref<144xf32, #tpu.memory_space<smem>>
    %731 = vector.broadcast %730 : f32 to vector<2x256xf32>
    %732 = arith.mulf %731, %717 : vector<2x256xf32>
    %733 = arith.addf %712, %732 : vector<2x256xf32>
    %c239_i32_91 = arith.constant 239 : i32
    %734 = tpu.dynamic_rotate %5 by %c239_i32_91 dim 1 : vector<2x256xf32>, i32 -> vector<2x256xf32>
    %cst_92 = arith.constant 0.000000e+00 : f32
    %735 = vector.shape_cast %691 : vector<1x256xi1> to vector<1x256xi1>
    %736 = vector.broadcast %735 : vector<1x256xi1> to vector<2x256xi1>
    %737 = vector.broadcast %cst_92 : f32 to vector<2x256xf32>
    %738 = arith.select %736, %734, %737 : vector<2x256xi1>, vector<2x256xf32>
    %c136 = arith.constant 136 : index
    %739 = memref.load %arg3[%c136] : memref<144xf32, #tpu.memory_space<smem>>
    %740 = vector.broadcast %739 : f32 to vector<2x256xf32>
    %741 = arith.mulf %740, %738 : vector<2x256xf32>
    %742 = arith.addf %721, %741 : vector<2x256xf32>
    %c137 = arith.constant 137 : index
    %743 = memref.load %arg3[%c137] : memref<144xf32, #tpu.memory_space<smem>>
    %744 = vector.broadcast %743 : f32 to vector<2x256xf32>
    %745 = arith.mulf %744, %738 : vector<2x256xf32>
    %746 = arith.addf %725, %745 : vector<2x256xf32>
    %c138 = arith.constant 138 : index
    %747 = memref.load %arg3[%c138] : memref<144xf32, #tpu.memory_space<smem>>
    %748 = vector.broadcast %747 : f32 to vector<2x256xf32>
    %749 = arith.mulf %748, %738 : vector<2x256xf32>
    %750 = arith.addf %729, %749 : vector<2x256xf32>
    %c139 = arith.constant 139 : index
    %751 = memref.load %arg3[%c139] : memref<144xf32, #tpu.memory_space<smem>>
    %752 = vector.broadcast %751 : f32 to vector<2x256xf32>
    %753 = arith.mulf %752, %738 : vector<2x256xf32>
    %754 = arith.addf %733, %753 : vector<2x256xf32>
    %c239_i32_93 = arith.constant 239 : i32
    %755 = tpu.dynamic_rotate %7 by %c239_i32_93 dim 1 : vector<2x256xf32>, i32 -> vector<2x256xf32>
    %cst_94 = arith.constant 0.000000e+00 : f32
    %756 = vector.shape_cast %691 : vector<1x256xi1> to vector<1x256xi1>
    %757 = vector.broadcast %756 : vector<1x256xi1> to vector<2x256xi1>
    %758 = vector.broadcast %cst_94 : f32 to vector<2x256xf32>
    %759 = arith.select %757, %755, %758 : vector<2x256xi1>, vector<2x256xf32>
    %c140 = arith.constant 140 : index
    %760 = memref.load %arg3[%c140] : memref<144xf32, #tpu.memory_space<smem>>
    %761 = vector.broadcast %760 : f32 to vector<2x256xf32>
    %762 = arith.mulf %761, %759 : vector<2x256xf32>
    %763 = arith.addf %742, %762 : vector<2x256xf32>
    %c141 = arith.constant 141 : index
    %764 = memref.load %arg3[%c141] : memref<144xf32, #tpu.memory_space<smem>>
    %765 = vector.broadcast %764 : f32 to vector<2x256xf32>
    %766 = arith.mulf %765, %759 : vector<2x256xf32>
    %767 = arith.addf %746, %766 : vector<2x256xf32>
    %c142 = arith.constant 142 : index
    %768 = memref.load %arg3[%c142] : memref<144xf32, #tpu.memory_space<smem>>
    %769 = vector.broadcast %768 : f32 to vector<2x256xf32>
    %770 = arith.mulf %769, %759 : vector<2x256xf32>
    %771 = arith.addf %750, %770 : vector<2x256xf32>
    %c143 = arith.constant 143 : index
    %772 = memref.load %arg3[%c143] : memref<144xf32, #tpu.memory_space<smem>>
    %773 = vector.broadcast %772 : f32 to vector<2x256xf32>
    %774 = arith.mulf %773, %759 : vector<2x256xf32>
    %775 = arith.addf %754, %774 : vector<2x256xf32>
    %cst_95 = arith.constant 0.000000e+00 : f32
    %776 = vector.broadcast %cst_95 : f32 to vector<2x256xf32>
    %777 = arith.maximumf %763, %776 : vector<2x256xf32>
    %cst_96 = arith.constant 0.000000e+00 : f32
    %778 = vector.broadcast %cst_96 : f32 to vector<2x256xf32>
    %779 = arith.maximumf %767, %778 : vector<2x256xf32>
    %cst_97 = arith.constant 0.000000e+00 : f32
    %780 = vector.broadcast %cst_97 : f32 to vector<2x256xf32>
    %781 = arith.maximumf %771, %780 : vector<2x256xf32>
    %cst_98 = arith.constant 0.000000e+00 : f32
    %782 = vector.broadcast %cst_98 : f32 to vector<2x256xf32>
    %783 = arith.maximumf %775, %782 : vector<2x256xf32>
    %c0_99 = arith.constant 0 : index
    %784 = memref.load %arg6[%c0_99] : memref<4xf32, #tpu.memory_space<smem>>
    %785 = vector.broadcast %784 : f32 to vector<2x256xf32>
    %c1_100 = arith.constant 1 : index
    %786 = memref.load %arg6[%c1_100] : memref<4xf32, #tpu.memory_space<smem>>
    %787 = vector.broadcast %786 : f32 to vector<2x256xf32>
    %c2_101 = arith.constant 2 : index
    %788 = memref.load %arg6[%c2_101] : memref<4xf32, #tpu.memory_space<smem>>
    %789 = vector.broadcast %788 : f32 to vector<2x256xf32>
    %c3_102 = arith.constant 3 : index
    %790 = memref.load %arg6[%c3_102] : memref<4xf32, #tpu.memory_space<smem>>
    %791 = vector.broadcast %790 : f32 to vector<2x256xf32>
    %c0_103 = arith.constant 0 : index
    %c0_104 = arith.constant 0 : index
    %792 = vector.load %arg2[%c0_103, %c0_104] : memref<9x256xf32, #tpu.memory_space<vmem>>, vector<1x256xf32>
    %cst_105 = arith.constant 0.000000e+00 : f32
    %793 = vector.broadcast %cst_105 : f32 to vector<1x256xf32>
    %794 = arith.cmpf one, %792, %793 : vector<1x256xf32>
    %c17_i32_106 = arith.constant 17 : i32
    %795 = tpu.dynamic_rotate %777 by %c17_i32_106 dim 1 : vector<2x256xf32>, i32 -> vector<2x256xf32>
    %cst_107 = arith.constant 0.000000e+00 : f32
    %796 = vector.shape_cast %794 : vector<1x256xi1> to vector<1x256xi1>
    %797 = vector.broadcast %796 : vector<1x256xi1> to vector<2x256xi1>
    %798 = vector.broadcast %cst_107 : f32 to vector<2x256xf32>
    %799 = arith.select %797, %795, %798 : vector<2x256xi1>, vector<2x256xf32>
    %c0_108 = arith.constant 0 : index
    %800 = memref.load %arg5[%c0_108] : memref<144xf32, #tpu.memory_space<smem>>
    %801 = vector.broadcast %800 : f32 to vector<2x256xf32>
    %802 = arith.mulf %801, %799 : vector<2x256xf32>
    %803 = arith.addf %785, %802 : vector<2x256xf32>
    %c1_109 = arith.constant 1 : index
    %804 = memref.load %arg5[%c1_109] : memref<144xf32, #tpu.memory_space<smem>>
    %805 = vector.broadcast %804 : f32 to vector<2x256xf32>
    %806 = arith.mulf %805, %799 : vector<2x256xf32>
    %807 = arith.addf %787, %806 : vector<2x256xf32>
    %c2_110 = arith.constant 2 : index
    %808 = memref.load %arg5[%c2_110] : memref<144xf32, #tpu.memory_space<smem>>
    %809 = vector.broadcast %808 : f32 to vector<2x256xf32>
    %810 = arith.mulf %809, %799 : vector<2x256xf32>
    %811 = arith.addf %789, %810 : vector<2x256xf32>
    %c3_111 = arith.constant 3 : index
    %812 = memref.load %arg5[%c3_111] : memref<144xf32, #tpu.memory_space<smem>>
    %813 = vector.broadcast %812 : f32 to vector<2x256xf32>
    %814 = arith.mulf %813, %799 : vector<2x256xf32>
    %815 = arith.addf %791, %814 : vector<2x256xf32>
    %c17_i32_112 = arith.constant 17 : i32
    %816 = tpu.dynamic_rotate %779 by %c17_i32_112 dim 1 : vector<2x256xf32>, i32 -> vector<2x256xf32>
    %cst_113 = arith.constant 0.000000e+00 : f32
    %817 = vector.shape_cast %794 : vector<1x256xi1> to vector<1x256xi1>
    %818 = vector.broadcast %817 : vector<1x256xi1> to vector<2x256xi1>
    %819 = vector.broadcast %cst_113 : f32 to vector<2x256xf32>
    %820 = arith.select %818, %816, %819 : vector<2x256xi1>, vector<2x256xf32>
    %c4_114 = arith.constant 4 : index
    %821 = memref.load %arg5[%c4_114] : memref<144xf32, #tpu.memory_space<smem>>
    %822 = vector.broadcast %821 : f32 to vector<2x256xf32>
    %823 = arith.mulf %822, %820 : vector<2x256xf32>
    %824 = arith.addf %803, %823 : vector<2x256xf32>
    %c5_115 = arith.constant 5 : index
    %825 = memref.load %arg5[%c5_115] : memref<144xf32, #tpu.memory_space<smem>>
    %826 = vector.broadcast %825 : f32 to vector<2x256xf32>
    %827 = arith.mulf %826, %820 : vector<2x256xf32>
    %828 = arith.addf %807, %827 : vector<2x256xf32>
    %c6_116 = arith.constant 6 : index
    %829 = memref.load %arg5[%c6_116] : memref<144xf32, #tpu.memory_space<smem>>
    %830 = vector.broadcast %829 : f32 to vector<2x256xf32>
    %831 = arith.mulf %830, %820 : vector<2x256xf32>
    %832 = arith.addf %811, %831 : vector<2x256xf32>
    %c7_117 = arith.constant 7 : index
    %833 = memref.load %arg5[%c7_117] : memref<144xf32, #tpu.memory_space<smem>>
    %834 = vector.broadcast %833 : f32 to vector<2x256xf32>
    %835 = arith.mulf %834, %820 : vector<2x256xf32>
    %836 = arith.addf %815, %835 : vector<2x256xf32>
    %c17_i32_118 = arith.constant 17 : i32
    %837 = tpu.dynamic_rotate %781 by %c17_i32_118 dim 1 : vector<2x256xf32>, i32 -> vector<2x256xf32>
    %cst_119 = arith.constant 0.000000e+00 : f32
    %838 = vector.shape_cast %794 : vector<1x256xi1> to vector<1x256xi1>
    %839 = vector.broadcast %838 : vector<1x256xi1> to vector<2x256xi1>
    %840 = vector.broadcast %cst_119 : f32 to vector<2x256xf32>
    %841 = arith.select %839, %837, %840 : vector<2x256xi1>, vector<2x256xf32>
    %c8_120 = arith.constant 8 : index
    %842 = memref.load %arg5[%c8_120] : memref<144xf32, #tpu.memory_space<smem>>
    %843 = vector.broadcast %842 : f32 to vector<2x256xf32>
    %844 = arith.mulf %843, %841 : vector<2x256xf32>
    %845 = arith.addf %824, %844 : vector<2x256xf32>
    %c9_121 = arith.constant 9 : index
    %846 = memref.load %arg5[%c9_121] : memref<144xf32, #tpu.memory_space<smem>>
    %847 = vector.broadcast %846 : f32 to vector<2x256xf32>
    %848 = arith.mulf %847, %841 : vector<2x256xf32>
    %849 = arith.addf %828, %848 : vector<2x256xf32>
    %c10_122 = arith.constant 10 : index
    %850 = memref.load %arg5[%c10_122] : memref<144xf32, #tpu.memory_space<smem>>
    %851 = vector.broadcast %850 : f32 to vector<2x256xf32>
    %852 = arith.mulf %851, %841 : vector<2x256xf32>
    %853 = arith.addf %832, %852 : vector<2x256xf32>
    %c11_123 = arith.constant 11 : index
    %854 = memref.load %arg5[%c11_123] : memref<144xf32, #tpu.memory_space<smem>>
    %855 = vector.broadcast %854 : f32 to vector<2x256xf32>
    %856 = arith.mulf %855, %841 : vector<2x256xf32>
    %857 = arith.addf %836, %856 : vector<2x256xf32>
    %c17_i32_124 = arith.constant 17 : i32
    %858 = tpu.dynamic_rotate %783 by %c17_i32_124 dim 1 : vector<2x256xf32>, i32 -> vector<2x256xf32>
    %cst_125 = arith.constant 0.000000e+00 : f32
    %859 = vector.shape_cast %794 : vector<1x256xi1> to vector<1x256xi1>
    %860 = vector.broadcast %859 : vector<1x256xi1> to vector<2x256xi1>
    %861 = vector.broadcast %cst_125 : f32 to vector<2x256xf32>
    %862 = arith.select %860, %858, %861 : vector<2x256xi1>, vector<2x256xf32>
    %c12_126 = arith.constant 12 : index
    %863 = memref.load %arg5[%c12_126] : memref<144xf32, #tpu.memory_space<smem>>
    %864 = vector.broadcast %863 : f32 to vector<2x256xf32>
    %865 = arith.mulf %864, %862 : vector<2x256xf32>
    %866 = arith.addf %845, %865 : vector<2x256xf32>
    %c13_127 = arith.constant 13 : index
    %867 = memref.load %arg5[%c13_127] : memref<144xf32, #tpu.memory_space<smem>>
    %868 = vector.broadcast %867 : f32 to vector<2x256xf32>
    %869 = arith.mulf %868, %862 : vector<2x256xf32>
    %870 = arith.addf %849, %869 : vector<2x256xf32>
    %c14_128 = arith.constant 14 : index
    %871 = memref.load %arg5[%c14_128] : memref<144xf32, #tpu.memory_space<smem>>
    %872 = vector.broadcast %871 : f32 to vector<2x256xf32>
    %873 = arith.mulf %872, %862 : vector<2x256xf32>
    %874 = arith.addf %853, %873 : vector<2x256xf32>
    %c15_129 = arith.constant 15 : index
    %875 = memref.load %arg5[%c15_129] : memref<144xf32, #tpu.memory_space<smem>>
    %876 = vector.broadcast %875 : f32 to vector<2x256xf32>
    %877 = arith.mulf %876, %862 : vector<2x256xf32>
    %878 = arith.addf %857, %877 : vector<2x256xf32>
    %c1_130 = arith.constant 1 : index
    %c0_131 = arith.constant 0 : index
    %879 = vector.load %arg2[%c1_130, %c0_131] : memref<9x256xf32, #tpu.memory_space<vmem>>, vector<1x256xf32>
    %cst_132 = arith.constant 0.000000e+00 : f32
    %880 = vector.broadcast %cst_132 : f32 to vector<1x256xf32>
    %881 = arith.cmpf one, %879, %880 : vector<1x256xf32>
    %c16_i32_133 = arith.constant 16 : i32
    %882 = tpu.dynamic_rotate %777 by %c16_i32_133 dim 1 : vector<2x256xf32>, i32 -> vector<2x256xf32>
    %cst_134 = arith.constant 0.000000e+00 : f32
    %883 = vector.shape_cast %881 : vector<1x256xi1> to vector<1x256xi1>
    %884 = vector.broadcast %883 : vector<1x256xi1> to vector<2x256xi1>
    %885 = vector.broadcast %cst_134 : f32 to vector<2x256xf32>
    %886 = arith.select %884, %882, %885 : vector<2x256xi1>, vector<2x256xf32>
    %c16_135 = arith.constant 16 : index
    %887 = memref.load %arg5[%c16_135] : memref<144xf32, #tpu.memory_space<smem>>
    %888 = vector.broadcast %887 : f32 to vector<2x256xf32>
    %889 = arith.mulf %888, %886 : vector<2x256xf32>
    %890 = arith.addf %866, %889 : vector<2x256xf32>
    %c17_136 = arith.constant 17 : index
    %891 = memref.load %arg5[%c17_136] : memref<144xf32, #tpu.memory_space<smem>>
    %892 = vector.broadcast %891 : f32 to vector<2x256xf32>
    %893 = arith.mulf %892, %886 : vector<2x256xf32>
    %894 = arith.addf %870, %893 : vector<2x256xf32>
    %c18_137 = arith.constant 18 : index
    %895 = memref.load %arg5[%c18_137] : memref<144xf32, #tpu.memory_space<smem>>
    %896 = vector.broadcast %895 : f32 to vector<2x256xf32>
    %897 = arith.mulf %896, %886 : vector<2x256xf32>
    %898 = arith.addf %874, %897 : vector<2x256xf32>
    %c19_138 = arith.constant 19 : index
    %899 = memref.load %arg5[%c19_138] : memref<144xf32, #tpu.memory_space<smem>>
    %900 = vector.broadcast %899 : f32 to vector<2x256xf32>
    %901 = arith.mulf %900, %886 : vector<2x256xf32>
    %902 = arith.addf %878, %901 : vector<2x256xf32>
    %c16_i32_139 = arith.constant 16 : i32
    %903 = tpu.dynamic_rotate %779 by %c16_i32_139 dim 1 : vector<2x256xf32>, i32 -> vector<2x256xf32>
    %cst_140 = arith.constant 0.000000e+00 : f32
    %904 = vector.shape_cast %881 : vector<1x256xi1> to vector<1x256xi1>
    %905 = vector.broadcast %904 : vector<1x256xi1> to vector<2x256xi1>
    %906 = vector.broadcast %cst_140 : f32 to vector<2x256xf32>
    %907 = arith.select %905, %903, %906 : vector<2x256xi1>, vector<2x256xf32>
    %c20_141 = arith.constant 20 : index
    %908 = memref.load %arg5[%c20_141] : memref<144xf32, #tpu.memory_space<smem>>
    %909 = vector.broadcast %908 : f32 to vector<2x256xf32>
    %910 = arith.mulf %909, %907 : vector<2x256xf32>
    %911 = arith.addf %890, %910 : vector<2x256xf32>
    %c21_142 = arith.constant 21 : index
    %912 = memref.load %arg5[%c21_142] : memref<144xf32, #tpu.memory_space<smem>>
    %913 = vector.broadcast %912 : f32 to vector<2x256xf32>
    %914 = arith.mulf %913, %907 : vector<2x256xf32>
    %915 = arith.addf %894, %914 : vector<2x256xf32>
    %c22_143 = arith.constant 22 : index
    %916 = memref.load %arg5[%c22_143] : memref<144xf32, #tpu.memory_space<smem>>
    %917 = vector.broadcast %916 : f32 to vector<2x256xf32>
    %918 = arith.mulf %917, %907 : vector<2x256xf32>
    %919 = arith.addf %898, %918 : vector<2x256xf32>
    %c23_144 = arith.constant 23 : index
    %920 = memref.load %arg5[%c23_144] : memref<144xf32, #tpu.memory_space<smem>>
    %921 = vector.broadcast %920 : f32 to vector<2x256xf32>
    %922 = arith.mulf %921, %907 : vector<2x256xf32>
    %923 = arith.addf %902, %922 : vector<2x256xf32>
    %c16_i32_145 = arith.constant 16 : i32
    %924 = tpu.dynamic_rotate %781 by %c16_i32_145 dim 1 : vector<2x256xf32>, i32 -> vector<2x256xf32>
    %cst_146 = arith.constant 0.000000e+00 : f32
    %925 = vector.shape_cast %881 : vector<1x256xi1> to vector<1x256xi1>
    %926 = vector.broadcast %925 : vector<1x256xi1> to vector<2x256xi1>
    %927 = vector.broadcast %cst_146 : f32 to vector<2x256xf32>
    %928 = arith.select %926, %924, %927 : vector<2x256xi1>, vector<2x256xf32>
    %c24_147 = arith.constant 24 : index
    %929 = memref.load %arg5[%c24_147] : memref<144xf32, #tpu.memory_space<smem>>
    %930 = vector.broadcast %929 : f32 to vector<2x256xf32>
    %931 = arith.mulf %930, %928 : vector<2x256xf32>
    %932 = arith.addf %911, %931 : vector<2x256xf32>
    %c25_148 = arith.constant 25 : index
    %933 = memref.load %arg5[%c25_148] : memref<144xf32, #tpu.memory_space<smem>>
    %934 = vector.broadcast %933 : f32 to vector<2x256xf32>
    %935 = arith.mulf %934, %928 : vector<2x256xf32>
    %936 = arith.addf %915, %935 : vector<2x256xf32>
    %c26_149 = arith.constant 26 : index
    %937 = memref.load %arg5[%c26_149] : memref<144xf32, #tpu.memory_space<smem>>
    %938 = vector.broadcast %937 : f32 to vector<2x256xf32>
    %939 = arith.mulf %938, %928 : vector<2x256xf32>
    %940 = arith.addf %919, %939 : vector<2x256xf32>
    %c27_150 = arith.constant 27 : index
    %941 = memref.load %arg5[%c27_150] : memref<144xf32, #tpu.memory_space<smem>>
    %942 = vector.broadcast %941 : f32 to vector<2x256xf32>
    %943 = arith.mulf %942, %928 : vector<2x256xf32>
    %944 = arith.addf %923, %943 : vector<2x256xf32>
    %c16_i32_151 = arith.constant 16 : i32
    %945 = tpu.dynamic_rotate %783 by %c16_i32_151 dim 1 : vector<2x256xf32>, i32 -> vector<2x256xf32>
    %cst_152 = arith.constant 0.000000e+00 : f32
    %946 = vector.shape_cast %881 : vector<1x256xi1> to vector<1x256xi1>
    %947 = vector.broadcast %946 : vector<1x256xi1> to vector<2x256xi1>
    %948 = vector.broadcast %cst_152 : f32 to vector<2x256xf32>
    %949 = arith.select %947, %945, %948 : vector<2x256xi1>, vector<2x256xf32>
    %c28_153 = arith.constant 28 : index
    %950 = memref.load %arg5[%c28_153] : memref<144xf32, #tpu.memory_space<smem>>
    %951 = vector.broadcast %950 : f32 to vector<2x256xf32>
    %952 = arith.mulf %951, %949 : vector<2x256xf32>
    %953 = arith.addf %932, %952 : vector<2x256xf32>
    %c29_154 = arith.constant 29 : index
    %954 = memref.load %arg5[%c29_154] : memref<144xf32, #tpu.memory_space<smem>>
    %955 = vector.broadcast %954 : f32 to vector<2x256xf32>
    %956 = arith.mulf %955, %949 : vector<2x256xf32>
    %957 = arith.addf %936, %956 : vector<2x256xf32>
    %c30_155 = arith.constant 30 : index
    %958 = memref.load %arg5[%c30_155] : memref<144xf32, #tpu.memory_space<smem>>
    %959 = vector.broadcast %958 : f32 to vector<2x256xf32>
    %960 = arith.mulf %959, %949 : vector<2x256xf32>
    %961 = arith.addf %940, %960 : vector<2x256xf32>
    %c31_156 = arith.constant 31 : index
    %962 = memref.load %arg5[%c31_156] : memref<144xf32, #tpu.memory_space<smem>>
    %963 = vector.broadcast %962 : f32 to vector<2x256xf32>
    %964 = arith.mulf %963, %949 : vector<2x256xf32>
    %965 = arith.addf %944, %964 : vector<2x256xf32>
    %c2_157 = arith.constant 2 : index
    %c0_158 = arith.constant 0 : index
    %966 = vector.load %arg2[%c2_157, %c0_158] : memref<9x256xf32, #tpu.memory_space<vmem>>, vector<1x256xf32>
    %cst_159 = arith.constant 0.000000e+00 : f32
    %967 = vector.broadcast %cst_159 : f32 to vector<1x256xf32>
    %968 = arith.cmpf one, %966, %967 : vector<1x256xf32>
    %c15_i32_160 = arith.constant 15 : i32
    %969 = tpu.dynamic_rotate %777 by %c15_i32_160 dim 1 : vector<2x256xf32>, i32 -> vector<2x256xf32>
    %cst_161 = arith.constant 0.000000e+00 : f32
    %970 = vector.shape_cast %968 : vector<1x256xi1> to vector<1x256xi1>
    %971 = vector.broadcast %970 : vector<1x256xi1> to vector<2x256xi1>
    %972 = vector.broadcast %cst_161 : f32 to vector<2x256xf32>
    %973 = arith.select %971, %969, %972 : vector<2x256xi1>, vector<2x256xf32>
    %c32_162 = arith.constant 32 : index
    %974 = memref.load %arg5[%c32_162] : memref<144xf32, #tpu.memory_space<smem>>
    %975 = vector.broadcast %974 : f32 to vector<2x256xf32>
    %976 = arith.mulf %975, %973 : vector<2x256xf32>
    %977 = arith.addf %953, %976 : vector<2x256xf32>
    %c33_163 = arith.constant 33 : index
    %978 = memref.load %arg5[%c33_163] : memref<144xf32, #tpu.memory_space<smem>>
    %979 = vector.broadcast %978 : f32 to vector<2x256xf32>
    %980 = arith.mulf %979, %973 : vector<2x256xf32>
    %981 = arith.addf %957, %980 : vector<2x256xf32>
    %c34_164 = arith.constant 34 : index
    %982 = memref.load %arg5[%c34_164] : memref<144xf32, #tpu.memory_space<smem>>
    %983 = vector.broadcast %982 : f32 to vector<2x256xf32>
    %984 = arith.mulf %983, %973 : vector<2x256xf32>
    %985 = arith.addf %961, %984 : vector<2x256xf32>
    %c35_165 = arith.constant 35 : index
    %986 = memref.load %arg5[%c35_165] : memref<144xf32, #tpu.memory_space<smem>>
    %987 = vector.broadcast %986 : f32 to vector<2x256xf32>
    %988 = arith.mulf %987, %973 : vector<2x256xf32>
    %989 = arith.addf %965, %988 : vector<2x256xf32>
    %c15_i32_166 = arith.constant 15 : i32
    %990 = tpu.dynamic_rotate %779 by %c15_i32_166 dim 1 : vector<2x256xf32>, i32 -> vector<2x256xf32>
    %cst_167 = arith.constant 0.000000e+00 : f32
    %991 = vector.shape_cast %968 : vector<1x256xi1> to vector<1x256xi1>
    %992 = vector.broadcast %991 : vector<1x256xi1> to vector<2x256xi1>
    %993 = vector.broadcast %cst_167 : f32 to vector<2x256xf32>
    %994 = arith.select %992, %990, %993 : vector<2x256xi1>, vector<2x256xf32>
    %c36_168 = arith.constant 36 : index
    %995 = memref.load %arg5[%c36_168] : memref<144xf32, #tpu.memory_space<smem>>
    %996 = vector.broadcast %995 : f32 to vector<2x256xf32>
    %997 = arith.mulf %996, %994 : vector<2x256xf32>
    %998 = arith.addf %977, %997 : vector<2x256xf32>
    %c37_169 = arith.constant 37 : index
    %999 = memref.load %arg5[%c37_169] : memref<144xf32, #tpu.memory_space<smem>>
    %1000 = vector.broadcast %999 : f32 to vector<2x256xf32>
    %1001 = arith.mulf %1000, %994 : vector<2x256xf32>
    %1002 = arith.addf %981, %1001 : vector<2x256xf32>
    %c38_170 = arith.constant 38 : index
    %1003 = memref.load %arg5[%c38_170] : memref<144xf32, #tpu.memory_space<smem>>
    %1004 = vector.broadcast %1003 : f32 to vector<2x256xf32>
    %1005 = arith.mulf %1004, %994 : vector<2x256xf32>
    %1006 = arith.addf %985, %1005 : vector<2x256xf32>
    %c39_171 = arith.constant 39 : index
    %1007 = memref.load %arg5[%c39_171] : memref<144xf32, #tpu.memory_space<smem>>
    %1008 = vector.broadcast %1007 : f32 to vector<2x256xf32>
    %1009 = arith.mulf %1008, %994 : vector<2x256xf32>
    %1010 = arith.addf %989, %1009 : vector<2x256xf32>
    %c15_i32_172 = arith.constant 15 : i32
    %1011 = tpu.dynamic_rotate %781 by %c15_i32_172 dim 1 : vector<2x256xf32>, i32 -> vector<2x256xf32>
    %cst_173 = arith.constant 0.000000e+00 : f32
    %1012 = vector.shape_cast %968 : vector<1x256xi1> to vector<1x256xi1>
    %1013 = vector.broadcast %1012 : vector<1x256xi1> to vector<2x256xi1>
    %1014 = vector.broadcast %cst_173 : f32 to vector<2x256xf32>
    %1015 = arith.select %1013, %1011, %1014 : vector<2x256xi1>, vector<2x256xf32>
    %c40_174 = arith.constant 40 : index
    %1016 = memref.load %arg5[%c40_174] : memref<144xf32, #tpu.memory_space<smem>>
    %1017 = vector.broadcast %1016 : f32 to vector<2x256xf32>
    %1018 = arith.mulf %1017, %1015 : vector<2x256xf32>
    %1019 = arith.addf %998, %1018 : vector<2x256xf32>
    %c41_175 = arith.constant 41 : index
    %1020 = memref.load %arg5[%c41_175] : memref<144xf32, #tpu.memory_space<smem>>
    %1021 = vector.broadcast %1020 : f32 to vector<2x256xf32>
    %1022 = arith.mulf %1021, %1015 : vector<2x256xf32>
    %1023 = arith.addf %1002, %1022 : vector<2x256xf32>
    %c42_176 = arith.constant 42 : index
    %1024 = memref.load %arg5[%c42_176] : memref<144xf32, #tpu.memory_space<smem>>
    %1025 = vector.broadcast %1024 : f32 to vector<2x256xf32>
    %1026 = arith.mulf %1025, %1015 : vector<2x256xf32>
    %1027 = arith.addf %1006, %1026 : vector<2x256xf32>
    %c43_177 = arith.constant 43 : index
    %1028 = memref.load %arg5[%c43_177] : memref<144xf32, #tpu.memory_space<smem>>
    %1029 = vector.broadcast %1028 : f32 to vector<2x256xf32>
    %1030 = arith.mulf %1029, %1015 : vector<2x256xf32>
    %1031 = arith.addf %1010, %1030 : vector<2x256xf32>
    %c15_i32_178 = arith.constant 15 : i32
    %1032 = tpu.dynamic_rotate %783 by %c15_i32_178 dim 1 : vector<2x256xf32>, i32 -> vector<2x256xf32>
    %cst_179 = arith.constant 0.000000e+00 : f32
    %1033 = vector.shape_cast %968 : vector<1x256xi1> to vector<1x256xi1>
    %1034 = vector.broadcast %1033 : vector<1x256xi1> to vector<2x256xi1>
    %1035 = vector.broadcast %cst_179 : f32 to vector<2x256xf32>
    %1036 = arith.select %1034, %1032, %1035 : vector<2x256xi1>, vector<2x256xf32>
    %c44_180 = arith.constant 44 : index
    %1037 = memref.load %arg5[%c44_180] : memref<144xf32, #tpu.memory_space<smem>>
    %1038 = vector.broadcast %1037 : f32 to vector<2x256xf32>
    %1039 = arith.mulf %1038, %1036 : vector<2x256xf32>
    %1040 = arith.addf %1019, %1039 : vector<2x256xf32>
    %c45_181 = arith.constant 45 : index
    %1041 = memref.load %arg5[%c45_181] : memref<144xf32, #tpu.memory_space<smem>>
    %1042 = vector.broadcast %1041 : f32 to vector<2x256xf32>
    %1043 = arith.mulf %1042, %1036 : vector<2x256xf32>
    %1044 = arith.addf %1023, %1043 : vector<2x256xf32>
    %c46_182 = arith.constant 46 : index
    %1045 = memref.load %arg5[%c46_182] : memref<144xf32, #tpu.memory_space<smem>>
    %1046 = vector.broadcast %1045 : f32 to vector<2x256xf32>
    %1047 = arith.mulf %1046, %1036 : vector<2x256xf32>
    %1048 = arith.addf %1027, %1047 : vector<2x256xf32>
    %c47_183 = arith.constant 47 : index
    %1049 = memref.load %arg5[%c47_183] : memref<144xf32, #tpu.memory_space<smem>>
    %1050 = vector.broadcast %1049 : f32 to vector<2x256xf32>
    %1051 = arith.mulf %1050, %1036 : vector<2x256xf32>
    %1052 = arith.addf %1031, %1051 : vector<2x256xf32>
    %c3_184 = arith.constant 3 : index
    %c0_185 = arith.constant 0 : index
    %1053 = vector.load %arg2[%c3_184, %c0_185] : memref<9x256xf32, #tpu.memory_space<vmem>>, vector<1x256xf32>
    %cst_186 = arith.constant 0.000000e+00 : f32
    %1054 = vector.broadcast %cst_186 : f32 to vector<1x256xf32>
    %1055 = arith.cmpf one, %1053, %1054 : vector<1x256xf32>
    %c1_i32_187 = arith.constant 1 : i32
    %1056 = tpu.dynamic_rotate %777 by %c1_i32_187 dim 1 : vector<2x256xf32>, i32 -> vector<2x256xf32>
    %cst_188 = arith.constant 0.000000e+00 : f32
    %1057 = vector.shape_cast %1055 : vector<1x256xi1> to vector<1x256xi1>
    %1058 = vector.broadcast %1057 : vector<1x256xi1> to vector<2x256xi1>
    %1059 = vector.broadcast %cst_188 : f32 to vector<2x256xf32>
    %1060 = arith.select %1058, %1056, %1059 : vector<2x256xi1>, vector<2x256xf32>
    %c48_189 = arith.constant 48 : index
    %1061 = memref.load %arg5[%c48_189] : memref<144xf32, #tpu.memory_space<smem>>
    %1062 = vector.broadcast %1061 : f32 to vector<2x256xf32>
    %1063 = arith.mulf %1062, %1060 : vector<2x256xf32>
    %1064 = arith.addf %1040, %1063 : vector<2x256xf32>
    %c49_190 = arith.constant 49 : index
    %1065 = memref.load %arg5[%c49_190] : memref<144xf32, #tpu.memory_space<smem>>
    %1066 = vector.broadcast %1065 : f32 to vector<2x256xf32>
    %1067 = arith.mulf %1066, %1060 : vector<2x256xf32>
    %1068 = arith.addf %1044, %1067 : vector<2x256xf32>
    %c50_191 = arith.constant 50 : index
    %1069 = memref.load %arg5[%c50_191] : memref<144xf32, #tpu.memory_space<smem>>
    %1070 = vector.broadcast %1069 : f32 to vector<2x256xf32>
    %1071 = arith.mulf %1070, %1060 : vector<2x256xf32>
    %1072 = arith.addf %1048, %1071 : vector<2x256xf32>
    %c51_192 = arith.constant 51 : index
    %1073 = memref.load %arg5[%c51_192] : memref<144xf32, #tpu.memory_space<smem>>
    %1074 = vector.broadcast %1073 : f32 to vector<2x256xf32>
    %1075 = arith.mulf %1074, %1060 : vector<2x256xf32>
    %1076 = arith.addf %1052, %1075 : vector<2x256xf32>
    %c1_i32_193 = arith.constant 1 : i32
    %1077 = tpu.dynamic_rotate %779 by %c1_i32_193 dim 1 : vector<2x256xf32>, i32 -> vector<2x256xf32>
    %cst_194 = arith.constant 0.000000e+00 : f32
    %1078 = vector.shape_cast %1055 : vector<1x256xi1> to vector<1x256xi1>
    %1079 = vector.broadcast %1078 : vector<1x256xi1> to vector<2x256xi1>
    %1080 = vector.broadcast %cst_194 : f32 to vector<2x256xf32>
    %1081 = arith.select %1079, %1077, %1080 : vector<2x256xi1>, vector<2x256xf32>
    %c52_195 = arith.constant 52 : index
    %1082 = memref.load %arg5[%c52_195] : memref<144xf32, #tpu.memory_space<smem>>
    %1083 = vector.broadcast %1082 : f32 to vector<2x256xf32>
    %1084 = arith.mulf %1083, %1081 : vector<2x256xf32>
    %1085 = arith.addf %1064, %1084 : vector<2x256xf32>
    %c53_196 = arith.constant 53 : index
    %1086 = memref.load %arg5[%c53_196] : memref<144xf32, #tpu.memory_space<smem>>
    %1087 = vector.broadcast %1086 : f32 to vector<2x256xf32>
    %1088 = arith.mulf %1087, %1081 : vector<2x256xf32>
    %1089 = arith.addf %1068, %1088 : vector<2x256xf32>
    %c54_197 = arith.constant 54 : index
    %1090 = memref.load %arg5[%c54_197] : memref<144xf32, #tpu.memory_space<smem>>
    %1091 = vector.broadcast %1090 : f32 to vector<2x256xf32>
    %1092 = arith.mulf %1091, %1081 : vector<2x256xf32>
    %1093 = arith.addf %1072, %1092 : vector<2x256xf32>
    %c55_198 = arith.constant 55 : index
    %1094 = memref.load %arg5[%c55_198] : memref<144xf32, #tpu.memory_space<smem>>
    %1095 = vector.broadcast %1094 : f32 to vector<2x256xf32>
    %1096 = arith.mulf %1095, %1081 : vector<2x256xf32>
    %1097 = arith.addf %1076, %1096 : vector<2x256xf32>
    %c1_i32_199 = arith.constant 1 : i32
    %1098 = tpu.dynamic_rotate %781 by %c1_i32_199 dim 1 : vector<2x256xf32>, i32 -> vector<2x256xf32>
    %cst_200 = arith.constant 0.000000e+00 : f32
    %1099 = vector.shape_cast %1055 : vector<1x256xi1> to vector<1x256xi1>
    %1100 = vector.broadcast %1099 : vector<1x256xi1> to vector<2x256xi1>
    %1101 = vector.broadcast %cst_200 : f32 to vector<2x256xf32>
    %1102 = arith.select %1100, %1098, %1101 : vector<2x256xi1>, vector<2x256xf32>
    %c56_201 = arith.constant 56 : index
    %1103 = memref.load %arg5[%c56_201] : memref<144xf32, #tpu.memory_space<smem>>
    %1104 = vector.broadcast %1103 : f32 to vector<2x256xf32>
    %1105 = arith.mulf %1104, %1102 : vector<2x256xf32>
    %1106 = arith.addf %1085, %1105 : vector<2x256xf32>
    %c57_202 = arith.constant 57 : index
    %1107 = memref.load %arg5[%c57_202] : memref<144xf32, #tpu.memory_space<smem>>
    %1108 = vector.broadcast %1107 : f32 to vector<2x256xf32>
    %1109 = arith.mulf %1108, %1102 : vector<2x256xf32>
    %1110 = arith.addf %1089, %1109 : vector<2x256xf32>
    %c58_203 = arith.constant 58 : index
    %1111 = memref.load %arg5[%c58_203] : memref<144xf32, #tpu.memory_space<smem>>
    %1112 = vector.broadcast %1111 : f32 to vector<2x256xf32>
    %1113 = arith.mulf %1112, %1102 : vector<2x256xf32>
    %1114 = arith.addf %1093, %1113 : vector<2x256xf32>
    %c59_204 = arith.constant 59 : index
    %1115 = memref.load %arg5[%c59_204] : memref<144xf32, #tpu.memory_space<smem>>
    %1116 = vector.broadcast %1115 : f32 to vector<2x256xf32>
    %1117 = arith.mulf %1116, %1102 : vector<2x256xf32>
    %1118 = arith.addf %1097, %1117 : vector<2x256xf32>
    %c1_i32_205 = arith.constant 1 : i32
    %1119 = tpu.dynamic_rotate %783 by %c1_i32_205 dim 1 : vector<2x256xf32>, i32 -> vector<2x256xf32>
    %cst_206 = arith.constant 0.000000e+00 : f32
    %1120 = vector.shape_cast %1055 : vector<1x256xi1> to vector<1x256xi1>
    %1121 = vector.broadcast %1120 : vector<1x256xi1> to vector<2x256xi1>
    %1122 = vector.broadcast %cst_206 : f32 to vector<2x256xf32>
    %1123 = arith.select %1121, %1119, %1122 : vector<2x256xi1>, vector<2x256xf32>
    %c60_207 = arith.constant 60 : index
    %1124 = memref.load %arg5[%c60_207] : memref<144xf32, #tpu.memory_space<smem>>
    %1125 = vector.broadcast %1124 : f32 to vector<2x256xf32>
    %1126 = arith.mulf %1125, %1123 : vector<2x256xf32>
    %1127 = arith.addf %1106, %1126 : vector<2x256xf32>
    %c61_208 = arith.constant 61 : index
    %1128 = memref.load %arg5[%c61_208] : memref<144xf32, #tpu.memory_space<smem>>
    %1129 = vector.broadcast %1128 : f32 to vector<2x256xf32>
    %1130 = arith.mulf %1129, %1123 : vector<2x256xf32>
    %1131 = arith.addf %1110, %1130 : vector<2x256xf32>
    %c62_209 = arith.constant 62 : index
    %1132 = memref.load %arg5[%c62_209] : memref<144xf32, #tpu.memory_space<smem>>
    %1133 = vector.broadcast %1132 : f32 to vector<2x256xf32>
    %1134 = arith.mulf %1133, %1123 : vector<2x256xf32>
    %1135 = arith.addf %1114, %1134 : vector<2x256xf32>
    %c63_210 = arith.constant 63 : index
    %1136 = memref.load %arg5[%c63_210] : memref<144xf32, #tpu.memory_space<smem>>
    %1137 = vector.broadcast %1136 : f32 to vector<2x256xf32>
    %1138 = arith.mulf %1137, %1123 : vector<2x256xf32>
    %1139 = arith.addf %1118, %1138 : vector<2x256xf32>
    %c64_211 = arith.constant 64 : index
    %1140 = memref.load %arg5[%c64_211] : memref<144xf32, #tpu.memory_space<smem>>
    %1141 = vector.broadcast %1140 : f32 to vector<2x256xf32>
    %1142 = arith.mulf %1141, %777 : vector<2x256xf32>
    %1143 = arith.addf %1127, %1142 : vector<2x256xf32>
    %c65_212 = arith.constant 65 : index
    %1144 = memref.load %arg5[%c65_212] : memref<144xf32, #tpu.memory_space<smem>>
    %1145 = vector.broadcast %1144 : f32 to vector<2x256xf32>
    %1146 = arith.mulf %1145, %777 : vector<2x256xf32>
    %1147 = arith.addf %1131, %1146 : vector<2x256xf32>
    %c66_213 = arith.constant 66 : index
    %1148 = memref.load %arg5[%c66_213] : memref<144xf32, #tpu.memory_space<smem>>
    %1149 = vector.broadcast %1148 : f32 to vector<2x256xf32>
    %1150 = arith.mulf %1149, %777 : vector<2x256xf32>
    %1151 = arith.addf %1135, %1150 : vector<2x256xf32>
    %c67_214 = arith.constant 67 : index
    %1152 = memref.load %arg5[%c67_214] : memref<144xf32, #tpu.memory_space<smem>>
    %1153 = vector.broadcast %1152 : f32 to vector<2x256xf32>
    %1154 = arith.mulf %1153, %777 : vector<2x256xf32>
    %1155 = arith.addf %1139, %1154 : vector<2x256xf32>
    %c68_215 = arith.constant 68 : index
    %1156 = memref.load %arg5[%c68_215] : memref<144xf32, #tpu.memory_space<smem>>
    %1157 = vector.broadcast %1156 : f32 to vector<2x256xf32>
    %1158 = arith.mulf %1157, %779 : vector<2x256xf32>
    %1159 = arith.addf %1143, %1158 : vector<2x256xf32>
    %c69_216 = arith.constant 69 : index
    %1160 = memref.load %arg5[%c69_216] : memref<144xf32, #tpu.memory_space<smem>>
    %1161 = vector.broadcast %1160 : f32 to vector<2x256xf32>
    %1162 = arith.mulf %1161, %779 : vector<2x256xf32>
    %1163 = arith.addf %1147, %1162 : vector<2x256xf32>
    %c70_217 = arith.constant 70 : index
    %1164 = memref.load %arg5[%c70_217] : memref<144xf32, #tpu.memory_space<smem>>
    %1165 = vector.broadcast %1164 : f32 to vector<2x256xf32>
    %1166 = arith.mulf %1165, %779 : vector<2x256xf32>
    %1167 = arith.addf %1151, %1166 : vector<2x256xf32>
    %c71_218 = arith.constant 71 : index
    %1168 = memref.load %arg5[%c71_218] : memref<144xf32, #tpu.memory_space<smem>>
    %1169 = vector.broadcast %1168 : f32 to vector<2x256xf32>
    %1170 = arith.mulf %1169, %779 : vector<2x256xf32>
    %1171 = arith.addf %1155, %1170 : vector<2x256xf32>
    %c72_219 = arith.constant 72 : index
    %1172 = memref.load %arg5[%c72_219] : memref<144xf32, #tpu.memory_space<smem>>
    %1173 = vector.broadcast %1172 : f32 to vector<2x256xf32>
    %1174 = arith.mulf %1173, %781 : vector<2x256xf32>
    %1175 = arith.addf %1159, %1174 : vector<2x256xf32>
    %c73_220 = arith.constant 73 : index
    %1176 = memref.load %arg5[%c73_220] : memref<144xf32, #tpu.memory_space<smem>>
    %1177 = vector.broadcast %1176 : f32 to vector<2x256xf32>
    %1178 = arith.mulf %1177, %781 : vector<2x256xf32>
    %1179 = arith.addf %1163, %1178 : vector<2x256xf32>
    %c74_221 = arith.constant 74 : index
    %1180 = memref.load %arg5[%c74_221] : memref<144xf32, #tpu.memory_space<smem>>
    %1181 = vector.broadcast %1180 : f32 to vector<2x256xf32>
    %1182 = arith.mulf %1181, %781 : vector<2x256xf32>
    %1183 = arith.addf %1167, %1182 : vector<2x256xf32>
    %c75_222 = arith.constant 75 : index
    %1184 = memref.load %arg5[%c75_222] : memref<144xf32, #tpu.memory_space<smem>>
    %1185 = vector.broadcast %1184 : f32 to vector<2x256xf32>
    %1186 = arith.mulf %1185, %781 : vector<2x256xf32>
    %1187 = arith.addf %1171, %1186 : vector<2x256xf32>
    %c76_223 = arith.constant 76 : index
    %1188 = memref.load %arg5[%c76_223] : memref<144xf32, #tpu.memory_space<smem>>
    %1189 = vector.broadcast %1188 : f32 to vector<2x256xf32>
    %1190 = arith.mulf %1189, %783 : vector<2x256xf32>
    %1191 = arith.addf %1175, %1190 : vector<2x256xf32>
    %c77_224 = arith.constant 77 : index
    %1192 = memref.load %arg5[%c77_224] : memref<144xf32, #tpu.memory_space<smem>>
    %1193 = vector.broadcast %1192 : f32 to vector<2x256xf32>
    %1194 = arith.mulf %1193, %783 : vector<2x256xf32>
    %1195 = arith.addf %1179, %1194 : vector<2x256xf32>
    %c78_225 = arith.constant 78 : index
    %1196 = memref.load %arg5[%c78_225] : memref<144xf32, #tpu.memory_space<smem>>
    %1197 = vector.broadcast %1196 : f32 to vector<2x256xf32>
    %1198 = arith.mulf %1197, %783 : vector<2x256xf32>
    %1199 = arith.addf %1183, %1198 : vector<2x256xf32>
    %c79_226 = arith.constant 79 : index
    %1200 = memref.load %arg5[%c79_226] : memref<144xf32, #tpu.memory_space<smem>>
    %1201 = vector.broadcast %1200 : f32 to vector<2x256xf32>
    %1202 = arith.mulf %1201, %783 : vector<2x256xf32>
    %1203 = arith.addf %1187, %1202 : vector<2x256xf32>
    %c5_227 = arith.constant 5 : index
    %c0_228 = arith.constant 0 : index
    %1204 = vector.load %arg2[%c5_227, %c0_228] : memref<9x256xf32, #tpu.memory_space<vmem>>, vector<1x256xf32>
    %cst_229 = arith.constant 0.000000e+00 : f32
    %1205 = vector.broadcast %cst_229 : f32 to vector<1x256xf32>
    %1206 = arith.cmpf one, %1204, %1205 : vector<1x256xf32>
    %c255_i32_230 = arith.constant 255 : i32
    %1207 = tpu.dynamic_rotate %777 by %c255_i32_230 dim 1 : vector<2x256xf32>, i32 -> vector<2x256xf32>
    %cst_231 = arith.constant 0.000000e+00 : f32
    %1208 = vector.shape_cast %1206 : vector<1x256xi1> to vector<1x256xi1>
    %1209 = vector.broadcast %1208 : vector<1x256xi1> to vector<2x256xi1>
    %1210 = vector.broadcast %cst_231 : f32 to vector<2x256xf32>
    %1211 = arith.select %1209, %1207, %1210 : vector<2x256xi1>, vector<2x256xf32>
    %c80_232 = arith.constant 80 : index
    %1212 = memref.load %arg5[%c80_232] : memref<144xf32, #tpu.memory_space<smem>>
    %1213 = vector.broadcast %1212 : f32 to vector<2x256xf32>
    %1214 = arith.mulf %1213, %1211 : vector<2x256xf32>
    %1215 = arith.addf %1191, %1214 : vector<2x256xf32>
    %c81_233 = arith.constant 81 : index
    %1216 = memref.load %arg5[%c81_233] : memref<144xf32, #tpu.memory_space<smem>>
    %1217 = vector.broadcast %1216 : f32 to vector<2x256xf32>
    %1218 = arith.mulf %1217, %1211 : vector<2x256xf32>
    %1219 = arith.addf %1195, %1218 : vector<2x256xf32>
    %c82_234 = arith.constant 82 : index
    %1220 = memref.load %arg5[%c82_234] : memref<144xf32, #tpu.memory_space<smem>>
    %1221 = vector.broadcast %1220 : f32 to vector<2x256xf32>
    %1222 = arith.mulf %1221, %1211 : vector<2x256xf32>
    %1223 = arith.addf %1199, %1222 : vector<2x256xf32>
    %c83_235 = arith.constant 83 : index
    %1224 = memref.load %arg5[%c83_235] : memref<144xf32, #tpu.memory_space<smem>>
    %1225 = vector.broadcast %1224 : f32 to vector<2x256xf32>
    %1226 = arith.mulf %1225, %1211 : vector<2x256xf32>
    %1227 = arith.addf %1203, %1226 : vector<2x256xf32>
    %c255_i32_236 = arith.constant 255 : i32
    %1228 = tpu.dynamic_rotate %779 by %c255_i32_236 dim 1 : vector<2x256xf32>, i32 -> vector<2x256xf32>
    %cst_237 = arith.constant 0.000000e+00 : f32
    %1229 = vector.shape_cast %1206 : vector<1x256xi1> to vector<1x256xi1>
    %1230 = vector.broadcast %1229 : vector<1x256xi1> to vector<2x256xi1>
    %1231 = vector.broadcast %cst_237 : f32 to vector<2x256xf32>
    %1232 = arith.select %1230, %1228, %1231 : vector<2x256xi1>, vector<2x256xf32>
    %c84_238 = arith.constant 84 : index
    %1233 = memref.load %arg5[%c84_238] : memref<144xf32, #tpu.memory_space<smem>>
    %1234 = vector.broadcast %1233 : f32 to vector<2x256xf32>
    %1235 = arith.mulf %1234, %1232 : vector<2x256xf32>
    %1236 = arith.addf %1215, %1235 : vector<2x256xf32>
    %c85_239 = arith.constant 85 : index
    %1237 = memref.load %arg5[%c85_239] : memref<144xf32, #tpu.memory_space<smem>>
    %1238 = vector.broadcast %1237 : f32 to vector<2x256xf32>
    %1239 = arith.mulf %1238, %1232 : vector<2x256xf32>
    %1240 = arith.addf %1219, %1239 : vector<2x256xf32>
    %c86_240 = arith.constant 86 : index
    %1241 = memref.load %arg5[%c86_240] : memref<144xf32, #tpu.memory_space<smem>>
    %1242 = vector.broadcast %1241 : f32 to vector<2x256xf32>
    %1243 = arith.mulf %1242, %1232 : vector<2x256xf32>
    %1244 = arith.addf %1223, %1243 : vector<2x256xf32>
    %c87_241 = arith.constant 87 : index
    %1245 = memref.load %arg5[%c87_241] : memref<144xf32, #tpu.memory_space<smem>>
    %1246 = vector.broadcast %1245 : f32 to vector<2x256xf32>
    %1247 = arith.mulf %1246, %1232 : vector<2x256xf32>
    %1248 = arith.addf %1227, %1247 : vector<2x256xf32>
    %c255_i32_242 = arith.constant 255 : i32
    %1249 = tpu.dynamic_rotate %781 by %c255_i32_242 dim 1 : vector<2x256xf32>, i32 -> vector<2x256xf32>
    %cst_243 = arith.constant 0.000000e+00 : f32
    %1250 = vector.shape_cast %1206 : vector<1x256xi1> to vector<1x256xi1>
    %1251 = vector.broadcast %1250 : vector<1x256xi1> to vector<2x256xi1>
    %1252 = vector.broadcast %cst_243 : f32 to vector<2x256xf32>
    %1253 = arith.select %1251, %1249, %1252 : vector<2x256xi1>, vector<2x256xf32>
    %c88_244 = arith.constant 88 : index
    %1254 = memref.load %arg5[%c88_244] : memref<144xf32, #tpu.memory_space<smem>>
    %1255 = vector.broadcast %1254 : f32 to vector<2x256xf32>
    %1256 = arith.mulf %1255, %1253 : vector<2x256xf32>
    %1257 = arith.addf %1236, %1256 : vector<2x256xf32>
    %c89_245 = arith.constant 89 : index
    %1258 = memref.load %arg5[%c89_245] : memref<144xf32, #tpu.memory_space<smem>>
    %1259 = vector.broadcast %1258 : f32 to vector<2x256xf32>
    %1260 = arith.mulf %1259, %1253 : vector<2x256xf32>
    %1261 = arith.addf %1240, %1260 : vector<2x256xf32>
    %c90_246 = arith.constant 90 : index
    %1262 = memref.load %arg5[%c90_246] : memref<144xf32, #tpu.memory_space<smem>>
    %1263 = vector.broadcast %1262 : f32 to vector<2x256xf32>
    %1264 = arith.mulf %1263, %1253 : vector<2x256xf32>
    %1265 = arith.addf %1244, %1264 : vector<2x256xf32>
    %c91_247 = arith.constant 91 : index
    %1266 = memref.load %arg5[%c91_247] : memref<144xf32, #tpu.memory_space<smem>>
    %1267 = vector.broadcast %1266 : f32 to vector<2x256xf32>
    %1268 = arith.mulf %1267, %1253 : vector<2x256xf32>
    %1269 = arith.addf %1248, %1268 : vector<2x256xf32>
    %c255_i32_248 = arith.constant 255 : i32
    %1270 = tpu.dynamic_rotate %783 by %c255_i32_248 dim 1 : vector<2x256xf32>, i32 -> vector<2x256xf32>
    %cst_249 = arith.constant 0.000000e+00 : f32
    %1271 = vector.shape_cast %1206 : vector<1x256xi1> to vector<1x256xi1>
    %1272 = vector.broadcast %1271 : vector<1x256xi1> to vector<2x256xi1>
    %1273 = vector.broadcast %cst_249 : f32 to vector<2x256xf32>
    %1274 = arith.select %1272, %1270, %1273 : vector<2x256xi1>, vector<2x256xf32>
    %c92_250 = arith.constant 92 : index
    %1275 = memref.load %arg5[%c92_250] : memref<144xf32, #tpu.memory_space<smem>>
    %1276 = vector.broadcast %1275 : f32 to vector<2x256xf32>
    %1277 = arith.mulf %1276, %1274 : vector<2x256xf32>
    %1278 = arith.addf %1257, %1277 : vector<2x256xf32>
    %c93_251 = arith.constant 93 : index
    %1279 = memref.load %arg5[%c93_251] : memref<144xf32, #tpu.memory_space<smem>>
    %1280 = vector.broadcast %1279 : f32 to vector<2x256xf32>
    %1281 = arith.mulf %1280, %1274 : vector<2x256xf32>
    %1282 = arith.addf %1261, %1281 : vector<2x256xf32>
    %c94_252 = arith.constant 94 : index
    %1283 = memref.load %arg5[%c94_252] : memref<144xf32, #tpu.memory_space<smem>>
    %1284 = vector.broadcast %1283 : f32 to vector<2x256xf32>
    %1285 = arith.mulf %1284, %1274 : vector<2x256xf32>
    %1286 = arith.addf %1265, %1285 : vector<2x256xf32>
    %c95_253 = arith.constant 95 : index
    %1287 = memref.load %arg5[%c95_253] : memref<144xf32, #tpu.memory_space<smem>>
    %1288 = vector.broadcast %1287 : f32 to vector<2x256xf32>
    %1289 = arith.mulf %1288, %1274 : vector<2x256xf32>
    %1290 = arith.addf %1269, %1289 : vector<2x256xf32>
    %c6_254 = arith.constant 6 : index
    %c0_255 = arith.constant 0 : index
    %1291 = vector.load %arg2[%c6_254, %c0_255] : memref<9x256xf32, #tpu.memory_space<vmem>>, vector<1x256xf32>
    %cst_256 = arith.constant 0.000000e+00 : f32
    %1292 = vector.broadcast %cst_256 : f32 to vector<1x256xf32>
    %1293 = arith.cmpf one, %1291, %1292 : vector<1x256xf32>
    %c241_i32_257 = arith.constant 241 : i32
    %1294 = tpu.dynamic_rotate %777 by %c241_i32_257 dim 1 : vector<2x256xf32>, i32 -> vector<2x256xf32>
    %cst_258 = arith.constant 0.000000e+00 : f32
    %1295 = vector.shape_cast %1293 : vector<1x256xi1> to vector<1x256xi1>
    %1296 = vector.broadcast %1295 : vector<1x256xi1> to vector<2x256xi1>
    %1297 = vector.broadcast %cst_258 : f32 to vector<2x256xf32>
    %1298 = arith.select %1296, %1294, %1297 : vector<2x256xi1>, vector<2x256xf32>
    %c96_259 = arith.constant 96 : index
    %1299 = memref.load %arg5[%c96_259] : memref<144xf32, #tpu.memory_space<smem>>
    %1300 = vector.broadcast %1299 : f32 to vector<2x256xf32>
    %1301 = arith.mulf %1300, %1298 : vector<2x256xf32>
    %1302 = arith.addf %1278, %1301 : vector<2x256xf32>
    %c97_260 = arith.constant 97 : index
    %1303 = memref.load %arg5[%c97_260] : memref<144xf32, #tpu.memory_space<smem>>
    %1304 = vector.broadcast %1303 : f32 to vector<2x256xf32>
    %1305 = arith.mulf %1304, %1298 : vector<2x256xf32>
    %1306 = arith.addf %1282, %1305 : vector<2x256xf32>
    %c98_261 = arith.constant 98 : index
    %1307 = memref.load %arg5[%c98_261] : memref<144xf32, #tpu.memory_space<smem>>
    %1308 = vector.broadcast %1307 : f32 to vector<2x256xf32>
    %1309 = arith.mulf %1308, %1298 : vector<2x256xf32>
    %1310 = arith.addf %1286, %1309 : vector<2x256xf32>
    %c99_262 = arith.constant 99 : index
    %1311 = memref.load %arg5[%c99_262] : memref<144xf32, #tpu.memory_space<smem>>
    %1312 = vector.broadcast %1311 : f32 to vector<2x256xf32>
    %1313 = arith.mulf %1312, %1298 : vector<2x256xf32>
    %1314 = arith.addf %1290, %1313 : vector<2x256xf32>
    %c241_i32_263 = arith.constant 241 : i32
    %1315 = tpu.dynamic_rotate %779 by %c241_i32_263 dim 1 : vector<2x256xf32>, i32 -> vector<2x256xf32>
    %cst_264 = arith.constant 0.000000e+00 : f32
    %1316 = vector.shape_cast %1293 : vector<1x256xi1> to vector<1x256xi1>
    %1317 = vector.broadcast %1316 : vector<1x256xi1> to vector<2x256xi1>
    %1318 = vector.broadcast %cst_264 : f32 to vector<2x256xf32>
    %1319 = arith.select %1317, %1315, %1318 : vector<2x256xi1>, vector<2x256xf32>
    %c100_265 = arith.constant 100 : index
    %1320 = memref.load %arg5[%c100_265] : memref<144xf32, #tpu.memory_space<smem>>
    %1321 = vector.broadcast %1320 : f32 to vector<2x256xf32>
    %1322 = arith.mulf %1321, %1319 : vector<2x256xf32>
    %1323 = arith.addf %1302, %1322 : vector<2x256xf32>
    %c101_266 = arith.constant 101 : index
    %1324 = memref.load %arg5[%c101_266] : memref<144xf32, #tpu.memory_space<smem>>
    %1325 = vector.broadcast %1324 : f32 to vector<2x256xf32>
    %1326 = arith.mulf %1325, %1319 : vector<2x256xf32>
    %1327 = arith.addf %1306, %1326 : vector<2x256xf32>
    %c102_267 = arith.constant 102 : index
    %1328 = memref.load %arg5[%c102_267] : memref<144xf32, #tpu.memory_space<smem>>
    %1329 = vector.broadcast %1328 : f32 to vector<2x256xf32>
    %1330 = arith.mulf %1329, %1319 : vector<2x256xf32>
    %1331 = arith.addf %1310, %1330 : vector<2x256xf32>
    %c103_268 = arith.constant 103 : index
    %1332 = memref.load %arg5[%c103_268] : memref<144xf32, #tpu.memory_space<smem>>
    %1333 = vector.broadcast %1332 : f32 to vector<2x256xf32>
    %1334 = arith.mulf %1333, %1319 : vector<2x256xf32>
    %1335 = arith.addf %1314, %1334 : vector<2x256xf32>
    %c241_i32_269 = arith.constant 241 : i32
    %1336 = tpu.dynamic_rotate %781 by %c241_i32_269 dim 1 : vector<2x256xf32>, i32 -> vector<2x256xf32>
    %cst_270 = arith.constant 0.000000e+00 : f32
    %1337 = vector.shape_cast %1293 : vector<1x256xi1> to vector<1x256xi1>
    %1338 = vector.broadcast %1337 : vector<1x256xi1> to vector<2x256xi1>
    %1339 = vector.broadcast %cst_270 : f32 to vector<2x256xf32>
    %1340 = arith.select %1338, %1336, %1339 : vector<2x256xi1>, vector<2x256xf32>
    %c104_271 = arith.constant 104 : index
    %1341 = memref.load %arg5[%c104_271] : memref<144xf32, #tpu.memory_space<smem>>
    %1342 = vector.broadcast %1341 : f32 to vector<2x256xf32>
    %1343 = arith.mulf %1342, %1340 : vector<2x256xf32>
    %1344 = arith.addf %1323, %1343 : vector<2x256xf32>
    %c105_272 = arith.constant 105 : index
    %1345 = memref.load %arg5[%c105_272] : memref<144xf32, #tpu.memory_space<smem>>
    %1346 = vector.broadcast %1345 : f32 to vector<2x256xf32>
    %1347 = arith.mulf %1346, %1340 : vector<2x256xf32>
    %1348 = arith.addf %1327, %1347 : vector<2x256xf32>
    %c106_273 = arith.constant 106 : index
    %1349 = memref.load %arg5[%c106_273] : memref<144xf32, #tpu.memory_space<smem>>
    %1350 = vector.broadcast %1349 : f32 to vector<2x256xf32>
    %1351 = arith.mulf %1350, %1340 : vector<2x256xf32>
    %1352 = arith.addf %1331, %1351 : vector<2x256xf32>
    %c107_274 = arith.constant 107 : index
    %1353 = memref.load %arg5[%c107_274] : memref<144xf32, #tpu.memory_space<smem>>
    %1354 = vector.broadcast %1353 : f32 to vector<2x256xf32>
    %1355 = arith.mulf %1354, %1340 : vector<2x256xf32>
    %1356 = arith.addf %1335, %1355 : vector<2x256xf32>
    %c241_i32_275 = arith.constant 241 : i32
    %1357 = tpu.dynamic_rotate %783 by %c241_i32_275 dim 1 : vector<2x256xf32>, i32 -> vector<2x256xf32>
    %cst_276 = arith.constant 0.000000e+00 : f32
    %1358 = vector.shape_cast %1293 : vector<1x256xi1> to vector<1x256xi1>
    %1359 = vector.broadcast %1358 : vector<1x256xi1> to vector<2x256xi1>
    %1360 = vector.broadcast %cst_276 : f32 to vector<2x256xf32>
    %1361 = arith.select %1359, %1357, %1360 : vector<2x256xi1>, vector<2x256xf32>
    %c108_277 = arith.constant 108 : index
    %1362 = memref.load %arg5[%c108_277] : memref<144xf32, #tpu.memory_space<smem>>
    %1363 = vector.broadcast %1362 : f32 to vector<2x256xf32>
    %1364 = arith.mulf %1363, %1361 : vector<2x256xf32>
    %1365 = arith.addf %1344, %1364 : vector<2x256xf32>
    %c109_278 = arith.constant 109 : index
    %1366 = memref.load %arg5[%c109_278] : memref<144xf32, #tpu.memory_space<smem>>
    %1367 = vector.broadcast %1366 : f32 to vector<2x256xf32>
    %1368 = arith.mulf %1367, %1361 : vector<2x256xf32>
    %1369 = arith.addf %1348, %1368 : vector<2x256xf32>
    %c110_279 = arith.constant 110 : index
    %1370 = memref.load %arg5[%c110_279] : memref<144xf32, #tpu.memory_space<smem>>
    %1371 = vector.broadcast %1370 : f32 to vector<2x256xf32>
    %1372 = arith.mulf %1371, %1361 : vector<2x256xf32>
    %1373 = arith.addf %1352, %1372 : vector<2x256xf32>
    %c111_280 = arith.constant 111 : index
    %1374 = memref.load %arg5[%c111_280] : memref<144xf32, #tpu.memory_space<smem>>
    %1375 = vector.broadcast %1374 : f32 to vector<2x256xf32>
    %1376 = arith.mulf %1375, %1361 : vector<2x256xf32>
    %1377 = arith.addf %1356, %1376 : vector<2x256xf32>
    %c7_281 = arith.constant 7 : index
    %c0_282 = arith.constant 0 : index
    %1378 = vector.load %arg2[%c7_281, %c0_282] : memref<9x256xf32, #tpu.memory_space<vmem>>, vector<1x256xf32>
    %cst_283 = arith.constant 0.000000e+00 : f32
    %1379 = vector.broadcast %cst_283 : f32 to vector<1x256xf32>
    %1380 = arith.cmpf one, %1378, %1379 : vector<1x256xf32>
    %c240_i32_284 = arith.constant 240 : i32
    %1381 = tpu.dynamic_rotate %777 by %c240_i32_284 dim 1 : vector<2x256xf32>, i32 -> vector<2x256xf32>
    %cst_285 = arith.constant 0.000000e+00 : f32
    %1382 = vector.shape_cast %1380 : vector<1x256xi1> to vector<1x256xi1>
    %1383 = vector.broadcast %1382 : vector<1x256xi1> to vector<2x256xi1>
    %1384 = vector.broadcast %cst_285 : f32 to vector<2x256xf32>
    %1385 = arith.select %1383, %1381, %1384 : vector<2x256xi1>, vector<2x256xf32>
    %c112_286 = arith.constant 112 : index
    %1386 = memref.load %arg5[%c112_286] : memref<144xf32, #tpu.memory_space<smem>>
    %1387 = vector.broadcast %1386 : f32 to vector<2x256xf32>
    %1388 = arith.mulf %1387, %1385 : vector<2x256xf32>
    %1389 = arith.addf %1365, %1388 : vector<2x256xf32>
    %c113_287 = arith.constant 113 : index
    %1390 = memref.load %arg5[%c113_287] : memref<144xf32, #tpu.memory_space<smem>>
    %1391 = vector.broadcast %1390 : f32 to vector<2x256xf32>
    %1392 = arith.mulf %1391, %1385 : vector<2x256xf32>
    %1393 = arith.addf %1369, %1392 : vector<2x256xf32>
    %c114_288 = arith.constant 114 : index
    %1394 = memref.load %arg5[%c114_288] : memref<144xf32, #tpu.memory_space<smem>>
    %1395 = vector.broadcast %1394 : f32 to vector<2x256xf32>
    %1396 = arith.mulf %1395, %1385 : vector<2x256xf32>
    %1397 = arith.addf %1373, %1396 : vector<2x256xf32>
    %c115_289 = arith.constant 115 : index
    %1398 = memref.load %arg5[%c115_289] : memref<144xf32, #tpu.memory_space<smem>>
    %1399 = vector.broadcast %1398 : f32 to vector<2x256xf32>
    %1400 = arith.mulf %1399, %1385 : vector<2x256xf32>
    %1401 = arith.addf %1377, %1400 : vector<2x256xf32>
    %c240_i32_290 = arith.constant 240 : i32
    %1402 = tpu.dynamic_rotate %779 by %c240_i32_290 dim 1 : vector<2x256xf32>, i32 -> vector<2x256xf32>
    %cst_291 = arith.constant 0.000000e+00 : f32
    %1403 = vector.shape_cast %1380 : vector<1x256xi1> to vector<1x256xi1>
    %1404 = vector.broadcast %1403 : vector<1x256xi1> to vector<2x256xi1>
    %1405 = vector.broadcast %cst_291 : f32 to vector<2x256xf32>
    %1406 = arith.select %1404, %1402, %1405 : vector<2x256xi1>, vector<2x256xf32>
    %c116_292 = arith.constant 116 : index
    %1407 = memref.load %arg5[%c116_292] : memref<144xf32, #tpu.memory_space<smem>>
    %1408 = vector.broadcast %1407 : f32 to vector<2x256xf32>
    %1409 = arith.mulf %1408, %1406 : vector<2x256xf32>
    %1410 = arith.addf %1389, %1409 : vector<2x256xf32>
    %c117_293 = arith.constant 117 : index
    %1411 = memref.load %arg5[%c117_293] : memref<144xf32, #tpu.memory_space<smem>>
    %1412 = vector.broadcast %1411 : f32 to vector<2x256xf32>
    %1413 = arith.mulf %1412, %1406 : vector<2x256xf32>
    %1414 = arith.addf %1393, %1413 : vector<2x256xf32>
    %c118_294 = arith.constant 118 : index
    %1415 = memref.load %arg5[%c118_294] : memref<144xf32, #tpu.memory_space<smem>>
    %1416 = vector.broadcast %1415 : f32 to vector<2x256xf32>
    %1417 = arith.mulf %1416, %1406 : vector<2x256xf32>
    %1418 = arith.addf %1397, %1417 : vector<2x256xf32>
    %c119_295 = arith.constant 119 : index
    %1419 = memref.load %arg5[%c119_295] : memref<144xf32, #tpu.memory_space<smem>>
    %1420 = vector.broadcast %1419 : f32 to vector<2x256xf32>
    %1421 = arith.mulf %1420, %1406 : vector<2x256xf32>
    %1422 = arith.addf %1401, %1421 : vector<2x256xf32>
    %c240_i32_296 = arith.constant 240 : i32
    %1423 = tpu.dynamic_rotate %781 by %c240_i32_296 dim 1 : vector<2x256xf32>, i32 -> vector<2x256xf32>
    %cst_297 = arith.constant 0.000000e+00 : f32
    %1424 = vector.shape_cast %1380 : vector<1x256xi1> to vector<1x256xi1>
    %1425 = vector.broadcast %1424 : vector<1x256xi1> to vector<2x256xi1>
    %1426 = vector.broadcast %cst_297 : f32 to vector<2x256xf32>
    %1427 = arith.select %1425, %1423, %1426 : vector<2x256xi1>, vector<2x256xf32>
    %c120_298 = arith.constant 120 : index
    %1428 = memref.load %arg5[%c120_298] : memref<144xf32, #tpu.memory_space<smem>>
    %1429 = vector.broadcast %1428 : f32 to vector<2x256xf32>
    %1430 = arith.mulf %1429, %1427 : vector<2x256xf32>
    %1431 = arith.addf %1410, %1430 : vector<2x256xf32>
    %c121_299 = arith.constant 121 : index
    %1432 = memref.load %arg5[%c121_299] : memref<144xf32, #tpu.memory_space<smem>>
    %1433 = vector.broadcast %1432 : f32 to vector<2x256xf32>
    %1434 = arith.mulf %1433, %1427 : vector<2x256xf32>
    %1435 = arith.addf %1414, %1434 : vector<2x256xf32>
    %c122_300 = arith.constant 122 : index
    %1436 = memref.load %arg5[%c122_300] : memref<144xf32, #tpu.memory_space<smem>>
    %1437 = vector.broadcast %1436 : f32 to vector<2x256xf32>
    %1438 = arith.mulf %1437, %1427 : vector<2x256xf32>
    %1439 = arith.addf %1418, %1438 : vector<2x256xf32>
    %c123_301 = arith.constant 123 : index
    %1440 = memref.load %arg5[%c123_301] : memref<144xf32, #tpu.memory_space<smem>>
    %1441 = vector.broadcast %1440 : f32 to vector<2x256xf32>
    %1442 = arith.mulf %1441, %1427 : vector<2x256xf32>
    %1443 = arith.addf %1422, %1442 : vector<2x256xf32>
    %c240_i32_302 = arith.constant 240 : i32
    %1444 = tpu.dynamic_rotate %783 by %c240_i32_302 dim 1 : vector<2x256xf32>, i32 -> vector<2x256xf32>
    %cst_303 = arith.constant 0.000000e+00 : f32
    %1445 = vector.shape_cast %1380 : vector<1x256xi1> to vector<1x256xi1>
    %1446 = vector.broadcast %1445 : vector<1x256xi1> to vector<2x256xi1>
    %1447 = vector.broadcast %cst_303 : f32 to vector<2x256xf32>
    %1448 = arith.select %1446, %1444, %1447 : vector<2x256xi1>, vector<2x256xf32>
    %c124_304 = arith.constant 124 : index
    %1449 = memref.load %arg5[%c124_304] : memref<144xf32, #tpu.memory_space<smem>>
    %1450 = vector.broadcast %1449 : f32 to vector<2x256xf32>
    %1451 = arith.mulf %1450, %1448 : vector<2x256xf32>
    %1452 = arith.addf %1431, %1451 : vector<2x256xf32>
    %c125_305 = arith.constant 125 : index
    %1453 = memref.load %arg5[%c125_305] : memref<144xf32, #tpu.memory_space<smem>>
    %1454 = vector.broadcast %1453 : f32 to vector<2x256xf32>
    %1455 = arith.mulf %1454, %1448 : vector<2x256xf32>
    %1456 = arith.addf %1435, %1455 : vector<2x256xf32>
    %c126_306 = arith.constant 126 : index
    %1457 = memref.load %arg5[%c126_306] : memref<144xf32, #tpu.memory_space<smem>>
    %1458 = vector.broadcast %1457 : f32 to vector<2x256xf32>
    %1459 = arith.mulf %1458, %1448 : vector<2x256xf32>
    %1460 = arith.addf %1439, %1459 : vector<2x256xf32>
    %c127_307 = arith.constant 127 : index
    %1461 = memref.load %arg5[%c127_307] : memref<144xf32, #tpu.memory_space<smem>>
    %1462 = vector.broadcast %1461 : f32 to vector<2x256xf32>
    %1463 = arith.mulf %1462, %1448 : vector<2x256xf32>
    %1464 = arith.addf %1443, %1463 : vector<2x256xf32>
    %c8_308 = arith.constant 8 : index
    %c0_309 = arith.constant 0 : index
    %1465 = vector.load %arg2[%c8_308, %c0_309] : memref<9x256xf32, #tpu.memory_space<vmem>>, vector<1x256xf32>
    %cst_310 = arith.constant 0.000000e+00 : f32
    %1466 = vector.broadcast %cst_310 : f32 to vector<1x256xf32>
    %1467 = arith.cmpf one, %1465, %1466 : vector<1x256xf32>
    %c239_i32_311 = arith.constant 239 : i32
    %1468 = tpu.dynamic_rotate %777 by %c239_i32_311 dim 1 : vector<2x256xf32>, i32 -> vector<2x256xf32>
    %cst_312 = arith.constant 0.000000e+00 : f32
    %1469 = vector.shape_cast %1467 : vector<1x256xi1> to vector<1x256xi1>
    %1470 = vector.broadcast %1469 : vector<1x256xi1> to vector<2x256xi1>
    %1471 = vector.broadcast %cst_312 : f32 to vector<2x256xf32>
    %1472 = arith.select %1470, %1468, %1471 : vector<2x256xi1>, vector<2x256xf32>
    %c128_313 = arith.constant 128 : index
    %1473 = memref.load %arg5[%c128_313] : memref<144xf32, #tpu.memory_space<smem>>
    %1474 = vector.broadcast %1473 : f32 to vector<2x256xf32>
    %1475 = arith.mulf %1474, %1472 : vector<2x256xf32>
    %1476 = arith.addf %1452, %1475 : vector<2x256xf32>
    %c129_314 = arith.constant 129 : index
    %1477 = memref.load %arg5[%c129_314] : memref<144xf32, #tpu.memory_space<smem>>
    %1478 = vector.broadcast %1477 : f32 to vector<2x256xf32>
    %1479 = arith.mulf %1478, %1472 : vector<2x256xf32>
    %1480 = arith.addf %1456, %1479 : vector<2x256xf32>
    %c130_315 = arith.constant 130 : index
    %1481 = memref.load %arg5[%c130_315] : memref<144xf32, #tpu.memory_space<smem>>
    %1482 = vector.broadcast %1481 : f32 to vector<2x256xf32>
    %1483 = arith.mulf %1482, %1472 : vector<2x256xf32>
    %1484 = arith.addf %1460, %1483 : vector<2x256xf32>
    %c131_316 = arith.constant 131 : index
    %1485 = memref.load %arg5[%c131_316] : memref<144xf32, #tpu.memory_space<smem>>
    %1486 = vector.broadcast %1485 : f32 to vector<2x256xf32>
    %1487 = arith.mulf %1486, %1472 : vector<2x256xf32>
    %1488 = arith.addf %1464, %1487 : vector<2x256xf32>
    %c239_i32_317 = arith.constant 239 : i32
    %1489 = tpu.dynamic_rotate %779 by %c239_i32_317 dim 1 : vector<2x256xf32>, i32 -> vector<2x256xf32>
    %cst_318 = arith.constant 0.000000e+00 : f32
    %1490 = vector.shape_cast %1467 : vector<1x256xi1> to vector<1x256xi1>
    %1491 = vector.broadcast %1490 : vector<1x256xi1> to vector<2x256xi1>
    %1492 = vector.broadcast %cst_318 : f32 to vector<2x256xf32>
    %1493 = arith.select %1491, %1489, %1492 : vector<2x256xi1>, vector<2x256xf32>
    %c132_319 = arith.constant 132 : index
    %1494 = memref.load %arg5[%c132_319] : memref<144xf32, #tpu.memory_space<smem>>
    %1495 = vector.broadcast %1494 : f32 to vector<2x256xf32>
    %1496 = arith.mulf %1495, %1493 : vector<2x256xf32>
    %1497 = arith.addf %1476, %1496 : vector<2x256xf32>
    %c133_320 = arith.constant 133 : index
    %1498 = memref.load %arg5[%c133_320] : memref<144xf32, #tpu.memory_space<smem>>
    %1499 = vector.broadcast %1498 : f32 to vector<2x256xf32>
    %1500 = arith.mulf %1499, %1493 : vector<2x256xf32>
    %1501 = arith.addf %1480, %1500 : vector<2x256xf32>
    %c134_321 = arith.constant 134 : index
    %1502 = memref.load %arg5[%c134_321] : memref<144xf32, #tpu.memory_space<smem>>
    %1503 = vector.broadcast %1502 : f32 to vector<2x256xf32>
    %1504 = arith.mulf %1503, %1493 : vector<2x256xf32>
    %1505 = arith.addf %1484, %1504 : vector<2x256xf32>
    %c135_322 = arith.constant 135 : index
    %1506 = memref.load %arg5[%c135_322] : memref<144xf32, #tpu.memory_space<smem>>
    %1507 = vector.broadcast %1506 : f32 to vector<2x256xf32>
    %1508 = arith.mulf %1507, %1493 : vector<2x256xf32>
    %1509 = arith.addf %1488, %1508 : vector<2x256xf32>
    %c239_i32_323 = arith.constant 239 : i32
    %1510 = tpu.dynamic_rotate %781 by %c239_i32_323 dim 1 : vector<2x256xf32>, i32 -> vector<2x256xf32>
    %cst_324 = arith.constant 0.000000e+00 : f32
    %1511 = vector.shape_cast %1467 : vector<1x256xi1> to vector<1x256xi1>
    %1512 = vector.broadcast %1511 : vector<1x256xi1> to vector<2x256xi1>
    %1513 = vector.broadcast %cst_324 : f32 to vector<2x256xf32>
    %1514 = arith.select %1512, %1510, %1513 : vector<2x256xi1>, vector<2x256xf32>
    %c136_325 = arith.constant 136 : index
    %1515 = memref.load %arg5[%c136_325] : memref<144xf32, #tpu.memory_space<smem>>
    %1516 = vector.broadcast %1515 : f32 to vector<2x256xf32>
    %1517 = arith.mulf %1516, %1514 : vector<2x256xf32>
    %1518 = arith.addf %1497, %1517 : vector<2x256xf32>
    %c137_326 = arith.constant 137 : index
    %1519 = memref.load %arg5[%c137_326] : memref<144xf32, #tpu.memory_space<smem>>
    %1520 = vector.broadcast %1519 : f32 to vector<2x256xf32>
    %1521 = arith.mulf %1520, %1514 : vector<2x256xf32>
    %1522 = arith.addf %1501, %1521 : vector<2x256xf32>
    %c138_327 = arith.constant 138 : index
    %1523 = memref.load %arg5[%c138_327] : memref<144xf32, #tpu.memory_space<smem>>
    %1524 = vector.broadcast %1523 : f32 to vector<2x256xf32>
    %1525 = arith.mulf %1524, %1514 : vector<2x256xf32>
    %1526 = arith.addf %1505, %1525 : vector<2x256xf32>
    %c139_328 = arith.constant 139 : index
    %1527 = memref.load %arg5[%c139_328] : memref<144xf32, #tpu.memory_space<smem>>
    %1528 = vector.broadcast %1527 : f32 to vector<2x256xf32>
    %1529 = arith.mulf %1528, %1514 : vector<2x256xf32>
    %1530 = arith.addf %1509, %1529 : vector<2x256xf32>
    %c239_i32_329 = arith.constant 239 : i32
    %1531 = tpu.dynamic_rotate %783 by %c239_i32_329 dim 1 : vector<2x256xf32>, i32 -> vector<2x256xf32>
    %cst_330 = arith.constant 0.000000e+00 : f32
    %1532 = vector.shape_cast %1467 : vector<1x256xi1> to vector<1x256xi1>
    %1533 = vector.broadcast %1532 : vector<1x256xi1> to vector<2x256xi1>
    %1534 = vector.broadcast %cst_330 : f32 to vector<2x256xf32>
    %1535 = arith.select %1533, %1531, %1534 : vector<2x256xi1>, vector<2x256xf32>
    %c140_331 = arith.constant 140 : index
    %1536 = memref.load %arg5[%c140_331] : memref<144xf32, #tpu.memory_space<smem>>
    %1537 = vector.broadcast %1536 : f32 to vector<2x256xf32>
    %1538 = arith.mulf %1537, %1535 : vector<2x256xf32>
    %1539 = arith.addf %1518, %1538 : vector<2x256xf32>
    %c141_332 = arith.constant 141 : index
    %1540 = memref.load %arg5[%c141_332] : memref<144xf32, #tpu.memory_space<smem>>
    %1541 = vector.broadcast %1540 : f32 to vector<2x256xf32>
    %1542 = arith.mulf %1541, %1535 : vector<2x256xf32>
    %1543 = arith.addf %1522, %1542 : vector<2x256xf32>
    %c142_333 = arith.constant 142 : index
    %1544 = memref.load %arg5[%c142_333] : memref<144xf32, #tpu.memory_space<smem>>
    %1545 = vector.broadcast %1544 : f32 to vector<2x256xf32>
    %1546 = arith.mulf %1545, %1535 : vector<2x256xf32>
    %1547 = arith.addf %1526, %1546 : vector<2x256xf32>
    %c143_334 = arith.constant 143 : index
    %1548 = memref.load %arg5[%c143_334] : memref<144xf32, #tpu.memory_space<smem>>
    %1549 = vector.broadcast %1548 : f32 to vector<2x256xf32>
    %1550 = arith.mulf %1549, %1535 : vector<2x256xf32>
    %1551 = arith.addf %1530, %1550 : vector<2x256xf32>
    %1552 = arith.addf %1, %1539 : vector<2x256xf32>
    %c0_335 = arith.constant 0 : index
    %c0_336 = arith.constant 0 : index
    %c0_337 = arith.constant 0 : index
    %1553 = vector.load %arg7[%c0_335, %c0_336, %c0_337] : memref<4x2x256xf32, #tpu.memory_space<vmem>>, vector<1x2x256xf32>
    %1554 = vector.shape_cast %1553 : vector<1x2x256xf32> to vector<2x256xf32>
    %1555 = vector.shape_cast %1552 : vector<2x256xf32> to vector<1x2x256xf32>
    tpu.vector_store %arg7[%c0_335, %c0_336, %c0_337], %1555 {strides = array<i32>} : memref<4x2x256xf32, #tpu.memory_space<vmem>>, vector<1x2x256xf32>,
    %1556 = arith.addf %3, %1543 : vector<2x256xf32>
    %c1_338 = arith.constant 1 : index
    %c0_339 = arith.constant 0 : index
    %c0_340 = arith.constant 0 : index
    %1557 = vector.load %arg7[%c1_338, %c0_339, %c0_340] : memref<4x2x256xf32, #tpu.memory_space<vmem>>, vector<1x2x256xf32>
    %1558 = vector.shape_cast %1557 : vector<1x2x256xf32> to vector<2x256xf32>
    %1559 = vector.shape_cast %1556 : vector<2x256xf32> to vector<1x2x256xf32>
    tpu.vector_store %arg7[%c1_338, %c0_339, %c0_340], %1559 {strides = array<i32>} : memref<4x2x256xf32, #tpu.memory_space<vmem>>, vector<1x2x256xf32>,
    %1560 = arith.addf %5, %1547 : vector<2x256xf32>
    %c2_341 = arith.constant 2 : index
    %c0_342 = arith.constant 0 : index
    %c0_343 = arith.constant 0 : index
    %1561 = vector.load %arg7[%c2_341, %c0_342, %c0_343] : memref<4x2x256xf32, #tpu.memory_space<vmem>>, vector<1x2x256xf32>
    %1562 = vector.shape_cast %1561 : vector<1x2x256xf32> to vector<2x256xf32>
    %1563 = vector.shape_cast %1560 : vector<2x256xf32> to vector<1x2x256xf32>
    tpu.vector_store %arg7[%c2_341, %c0_342, %c0_343], %1563 {strides = array<i32>} : memref<4x2x256xf32, #tpu.memory_space<vmem>>, vector<1x2x256xf32>,
    %1564 = arith.addf %7, %1551 : vector<2x256xf32>
    %c3_344 = arith.constant 3 : index
    %c0_345 = arith.constant 0 : index
    %c0_346 = arith.constant 0 : index
    %1565 = vector.load %arg7[%c3_344, %c0_345, %c0_346] : memref<4x2x256xf32, #tpu.memory_space<vmem>>, vector<1x2x256xf32>
    %1566 = vector.shape_cast %1565 : vector<1x2x256xf32> to vector<2x256xf32>
    %1567 = vector.shape_cast %1564 : vector<2x256xf32> to vector<1x2x256xf32>
    tpu.vector_store %arg7[%c3_344, %c0_345, %c0_346], %1567 {strides = array<i32>} : memref<4x2x256xf32, #tpu.memory_space<vmem>>, vector<1x2x256xf32>,
    return
  }
  func.func @transform_0(%arg0: i32) -> (i32, i32, i32) {
    %c0_i32 = arith.constant 0 : i32
    %c0_i32_0 = arith.constant 0 : i32
    %c0_i32_1 = arith.constant 0 : i32
    return %c0_i32, %arg0, %c0_i32_0 : i32, i32, i32
  }
  func.func @transform_1(%arg0: i32) -> (i32, i32) {
    %c0_i32 = arith.constant 0 : i32
    %c0_i32_0 = arith.constant 0 : i32
    %c0_i32_1 = arith.constant 0 : i32
    return %c0_i32, %c0_i32_0 : i32, i32
  }
  func.func @transform_2(%arg0: i32) -> i32 {
    %c0_i32 = arith.constant 0 : i32
    %c0_i32_0 = arith.constant 0 : i32
    return %c0_i32 : i32
  }
  func.func @transform_3(%arg0: i32) -> i32 {
    %c0_i32 = arith.constant 0 : i32
    %c0_i32_0 = arith.constant 0 : i32
    return %c0_i32 : i32
  }
  func.func @transform_4(%arg0: i32) -> i32 {
    %c0_i32 = arith.constant 0 : i32
    %c0_i32_0 = arith.constant 0 : i32
    return %c0_i32 : i32
  }
  func.func @transform_5(%arg0: i32) -> i32 {
    %c0_i32 = arith.constant 0 : i32
    %c0_i32_0 = arith.constant 0 : i32
    return %c0_i32 : i32
  }
  func.func @transform_6(%arg0: i32) -> (i32, i32, i32) {
    %c0_i32 = arith.constant 0 : i32
    %c0_i32_0 = arith.constant 0 : i32
    %c0_i32_1 = arith.constant 0 : i32
    return %c0_i32, %arg0, %c0_i32_0 : i32, i32, i32
  }
}

</mosaic_0001>

<llo_original>
// kernel: tpu_custom_call.1
$region0: #{tpu_custom_call.1}
  #allocation0 [shape = 'u32[]', space=smem, size = 0x4, offset = 0x4, fixed_abs, tag = 'smem constant byte address 0x4 - core index']
  #allocation1 [shape = 'u32[72,128]{1,0:T(1,128)}', space=vmem, size = 0x9000, scoped, tag = 'internal scratch']
  %s0 = inlined_call_operand.hbm [shape: f32[4,2,256], index: 0, kind: input, shape index: {}]
  %s1 = inlined_call_operand.hbm [shape: f32[9,256], index: 1, kind: input, shape index: {}]
  %s2 = inlined_call_operand.hbm [shape: f32[144], index: 2, kind: input, shape index: {}]
  %s3 = inlined_call_operand.vmem [shape: f32[4], index: 3, kind: input, shape index: {}]
  %s4 = inlined_call_operand.vmem [shape: f32[144], index: 4, kind: input, shape index: {}]
  %s5 = inlined_call_operand.vmem [shape: f32[4], index: 5, kind: input, shape index: {}]
  %s6 = inlined_call_operand.hbm [shape: f32[4,2,256], index: 6, kind: output, shape index: {}]
  %s7 = sld [smem:[#allocation0]]
  $region58: #{tpu_custom_call.1} parent=0
    _
  %s9 = ssub.s32 1, %s7
  %s10 = scalar_select 0, %s9, %s7
  $region1: #{tpu_custom_call.1} parent=0
    #allocation2 [shape = 'u8[8192]{0}', space=vmem, size = 0x2000, scoped, tag = 'input window, operand 0, single buffered']
    #allocation3 [shape = 's32[1]{0}', space=sflag, size = 0x4, scoped, tag = 'scoped memory for tpu_custom_call.1']
    #allocation4 [shape = 's32[1]{0}', space=sflag, size = 0x4, scoped, tag = 'scoped memory for tpu_custom_call.1']
    #allocation5 [shape = 's32[1]{0}', space=sflag, size = 0x4, scoped, tag = 'scoped memory for tpu_custom_call.1']
    #allocation6 [shape = 's32[1]{0}', space=sflag, size = 0x4, scoped, tag = 'scoped memory for tpu_custom_call.1']
    #allocation7 [shape = 'u8[16384]{0}', space=vmem, size = 0x4000, scoped, tag = 'input window, operand 1, single buffered']
    #allocation8 [shape = 's32[1]{0}', space=sflag, size = 0x4, scoped, tag = 'scoped memory for tpu_custom_call.1']
    #allocation9 [shape = 'u8[1024]{0}', space=smem, size = 0x400, scoped, tag = 'input window, operand 2, single buffered']
    #allocation10 [shape = 'u8[512]{0}', space=smem, size = 0x200, scoped, tag = 'input window, operand 3, single buffered']
    #allocation11 [shape = 'u8[1024]{0}', space=smem, size = 0x400, scoped, tag = 'input window, operand 4, single buffered']
    #allocation12 [shape = 's32[1]{0}', space=sflag, size = 0x4, scoped, tag = 'scoped memory for tpu_custom_call.1']
    #allocation13 [shape = 'u8[512]{0}', space=smem, size = 0x200, scoped, tag = 'input window, operand 5, single buffered']
    #allocation14 [shape = 'u8[8192]{0}', space=vmem, size = 0x2000, scoped, tag = 'output window, operand 0, single buffered']
    %11 = vsyncpa [#allocation3], 0
    %12 = vsyncpa [#allocation8], 0
    %13 = vsyncpa [#allocation5], 0
    %14 = vsyncpa [#allocation6], 0
    %15 = vsyncpa [#allocation12], 0
    %16 = vsyncpa [#allocation4], 0
    // Predicated region
    $region2: #{tpu_custom_call.1} parent=1 // pred_check
      _
    $region3: #{tpu_custom_call.1} parent=1 // pred_check_branch
      %18 = sbr.rel (0) target = $region5
    $region4: #{tpu_custom_call.1} parent=1 // pred_region
      %20 = vsyncadd [#allocation3], 0
      %s21 = sshll.u32 %s0, 4
      %s22 = int_to_ptr.hbm [resolvable:$true] %s21
      %s23 = sshll.u32 [#allocation2], 4
      %s24 = int_to_ptr.vmem [resolvable:$true] %s23
      %29 = dma.hbm_to_vmem [thread:$0]  %s22, 256, %s24, [#allocation3], 64, 64, 4
    $region5: #{tpu_custom_call.1} parent=1 // pred_fallthru
      _
    // Predicated region
    $region6: #{tpu_custom_call.1} parent=1 // pred_check
      _
    $region7: #{tpu_custom_call.1} parent=1 // pred_check_branch
      %31 = sbr.rel (0) target = $region9
    $region8: #{tpu_custom_call.1} parent=1 // pred_region
      %33 = vsyncadd [#allocation8], 0
      %s34 = sshll.u32 %s1, 4
      %s35 = int_to_ptr.hbm [resolvable:$true] %s34
      %s36 = sshll.u32 [#allocation7], 4
      %s37 = int_to_ptr.vmem [resolvable:$true] %s36
      %42 = dma.hbm_to_vmem [thread:$0]  %s35, 512, %s37, [#allocation8], 256, 256, 16
    $region9: #{tpu_custom_call.1} parent=1 // pred_fallthru
      _
    // Predicated region
    $region10: #{tpu_custom_call.1} parent=1 // pred_check
      _
    $region11: #{tpu_custom_call.1} parent=1 // pred_check_branch
      %44 = sbr.rel (0) target = $region13
    $region12: #{tpu_custom_call.1} parent=1 // pred_region
      %46 = vsyncadd [#allocation5], 0
      %s48 = sshll.u32 %s2, 4
      %s49 = int_to_ptr.hbm [resolvable:$true] %s48
      %51 = dma.hbm_to_smem %s49, 32, [#allocation9], [#allocation5]
    $region13: #{tpu_custom_call.1} parent=1 // pred_fallthru
      _
    // Predicated region
    $region14: #{tpu_custom_call.1} parent=1 // pred_check
      _
    $region15: #{tpu_custom_call.1} parent=1 // pred_check_branch
      %53 = sbr.rel (0) target = $region17
    $region16: #{tpu_custom_call.1} parent=1 // pred_region
      %55 = vsyncadd [#allocation6], 0
      %s57 = sshll.u32 %s3, 4
      %s58 = int_to_ptr.vmem [resolvable:$true] %s57
      %60 = dma.vmem_to_smem %s58, 16, [#allocation10], [#allocation6]
    $region17: #{tpu_custom_call.1} parent=1 // pred_fallthru
      _
    // Predicated region
    $region18: #{tpu_custom_call.1} parent=1 // pred_check
      _
    $region19: #{tpu_custom_call.1} parent=1 // pred_check_branch
      %62 = sbr.rel (0) target = $region21
    $region20: #{tpu_custom_call.1} parent=1 // pred_region
      %64 = vsyncadd [#allocation12], 0
      %s66 = sshll.u32 %s4, 4
      %s67 = int_to_ptr.vmem [resolvable:$true] %s66
      %69 = dma.vmem_to_smem %s67, 32, [#allocation11], [#allocation12]
    $region21: #{tpu_custom_call.1} parent=1 // pred_fallthru
      _
    // Predicated region
    $region22: #{tpu_custom_call.1} parent=1 // pred_check
      _
    $region23: #{tpu_custom_call.1} parent=1 // pred_check_branch
      %71 = sbr.rel (0) target = $region25
    $region24: #{tpu_custom_call.1} parent=1 // pred_region
      %73 = vsyncadd [#allocation12], 0
      %s75 = sshll.u32 %s5, 4
      %s76 = int_to_ptr.vmem [resolvable:$true] %s75
      %78 = dma.vmem_to_smem %s76, 16, [#allocation13], [#allocation12]
    $region25: #{tpu_custom_call.1} parent=1 // pred_fallthru
      _
    // Predicated region
    $region26: #{tpu_custom_call.1} parent=1 // pred_check
      _
    $region27: #{tpu_custom_call.1} parent=1 // pred_check_branch
      %80 = sbr.rel (0) target = $region29
    $region28: #{tpu_custom_call.1} parent=1 // pred_region
      %82 = dma.done [#allocation3], 256
    $region29: #{tpu_custom_call.1} parent=1 // pred_fallthru
      _
    // Predicated region
    $region30: #{tpu_custom_call.1} parent=1 // pred_check
      _
    $region31: #{tpu_custom_call.1} parent=1 // pred_check_branch
      %84 = sbr.rel (0) target = $region33
    $region32: #{tpu_custom_call.1} parent=1 // pred_region
      %86 = dma.done [#allocation8], 512
    $region33: #{tpu_custom_call.1} parent=1 // pred_fallthru
      _
    // Predicated region
    $region34: #{tpu_custom_call.1} parent=1 // pred_check
      _
    $region35: #{tpu_custom_call.1} parent=1 // pred_check_branch
      %88 = sbr.rel (0) target = $region37
    $region36: #{tpu_custom_call.1} parent=1 // pred_region
      %90 = dma.done [#allocation5], 32
    $region37: #{tpu_custom_call.1} parent=1 // pred_fallthru
      _
    // Predicated region
    $region38: #{tpu_custom_call.1} parent=1 // pred_check
      _
    $region39: #{tpu_custom_call.1} parent=1 // pred_check_branch
      %92 = sbr.rel (0) target = $region41
    $region40: #{tpu_custom_call.1} parent=1 // pred_region
      %94 = dma.done [#allocation6], 16
    $region41: #{tpu_custom_call.1} parent=1 // pred_fallthru
      _
    // Predicated region
    $region42: #{tpu_custom_call.1} parent=1 // pred_check
      _
    $region43: #{tpu_custom_call.1} parent=1 // pred_check_branch
      %96 = sbr.rel (0) target = $region45
    $region44: #{tpu_custom_call.1} parent=1 // pred_region
      %98 = dma.done [#allocation12], 32
    $region45: #{tpu_custom_call.1} parent=1 // pred_fallthru
      _
    // Predicated region
    $region46: #{tpu_custom_call.1} parent=1 // pred_check
      _
    $region47: #{tpu_custom_call.1} parent=1 // pred_check_branch
      %100 = sbr.rel (0) target = $region49
    $region48: #{tpu_custom_call.1} parent=1 // pred_region
      %102 = dma.done [#allocation12], 16
    $region49: #{tpu_custom_call.1} parent=1 // pred_fallthru
      _
    %103 = sfence
    %v104 = vld [vmem:[#allocation2] sm:$0xf]
    %s105 = scalar_lea.vmem [#allocation2], 4
    %v106 = vld [vmem:[%s105] sm:$0xf]
    %s107 = scalar_lea.vmem [#allocation2], 8
    %v108 = vld [vmem:[%s107] sm:$0xf]
    %s109 = scalar_lea.vmem [#allocation2], 12
    %v110 = vld [vmem:[%s109] sm:$0xf]
    %s111 = sld [smem:[#allocation10]]
    %v112 = vstv %s111
    %s113 = sld [smem:[#allocation10 + $0x1]]
    %v114 = vstv %s113
    %s115 = sld [smem:[#allocation10 + $0x2]]
    %v116 = vstv %s115
    %s117 = sld [smem:[#allocation10 + $0x3]]
    %v118 = vstv %s117
    %v119 = vld [vmem:[#allocation7] ss:$8 sm:$0x3]
    %vm120 = vcmp.ne.f32.partialorder %v119, 0.0
    %122 = vst [vmem:[#allocation1] ss:$4 sm:$0xff] %v104
    %v123 = vld.sshfl [vmem:[#allocation1] sm:$0xff pattern:$0x73625140]
    %v124 = vld.sshfl [vmem:[#allocation1 + $0x8] sm:$0xff pattern:$0x73625140]
    %127 = vrot.lane.b32.xlu0 %v123, 17
    %v128 = vpop.permute.xlu0 %127
    %129 = vrot.lane.b32.xlu0 %v124, 17
    %v130 = vpop.permute.xlu0 %129
    %v131 = vlaneseq
    %v132 = vand.u32 %v131, 127
    %vm133 = vcmp.lt.s32.totalorder %v132, 17
    %v134 = vsel %vm133, %v128, %v130
    %v135 = vsel %vm133, %v130, %v128
    %v136 = vsel %vm120, 1, 0
    %v137 = vperm.slane %v136, 0
    %v138 = vperm.slane %v136, 1
    %vm139 = vcmp.eq.s32.totalorder %v137, 1
    %vm140 = vcmp.eq.s32.totalorder %v138, 1
    %v141 = vsel %vm139, %v135, 0.0
    %v142 = vsel %vm140, %v134, 0.0
    %s143 = sld [smem:[#allocation9]]
    %v144 = vstv %s143
    %v145 = vmul.f32 %v144, %v141
    %v146 = vmul.f32 %v144, %v142
    %v147 = vadd.f32 %v112, %v145
    %v148 = vadd.f32 %v112, %v146
    %s149 = sld [smem:[#allocation9 + $0x1]]
    %v150 = vstv %s149
    %v151 = vmul.f32 %v150, %v141
    %v152 = vmul.f32 %v150, %v142
    %v153 = vadd.f32 %v114, %v151
    %v154 = vadd.f32 %v114, %v152
    %s155 = sld [smem:[#allocation9 + $0x2]]
    %v156 = vstv %s155
    %v157 = vmul.f32 %v156, %v141
    %v158 = vmul.f32 %v156, %v142
    %v159 = vadd.f32 %v116, %v157
    %v160 = vadd.f32 %v116, %v158
    %s161 = sld [smem:[#allocation9 + $0x3]]
    %v162 = vstv %s161
    %v163 = vmul.f32 %v162, %v141
    %v164 = vmul.f32 %v162, %v142
    %v165 = vadd.f32 %v118, %v163
    %v166 = vadd.f32 %v118, %v164
    %168 = vst [vmem:[#allocation1] ss:$4 sm:$0xff] %v106
    %v169 = vld.sshfl [vmem:[#allocation1] sm:$0xff pattern:$0x73625140]
    %v170 = vld.sshfl [vmem:[#allocation1 + $0x8] sm:$0xff pattern:$0x73625140]
    %173 = vrot.lane.b32.xlu0 %v169, 17
    %v174 = vpop.permute.xlu0 %173
    %175 = vrot.lane.b32.xlu0 %v170, 17
    %v176 = vpop.permute.xlu0 %175
    %v177 = vsel %vm133, %v174, %v176
    %v178 = vsel %vm133, %v176, %v174
    %v179 = vsel %vm139, %v178, 0.0
    %v180 = vsel %vm140, %v177, 0.0
    %s181 = sld [smem:[#allocation9 + $0x4]]
    %v182 = vstv %s181
    %v183 = vmul.f32 %v182, %v179
    %v184 = vmul.f32 %v182, %v180
    %v185 = vadd.f32 %v147, %v183
    %v186 = vadd.f32 %v148, %v184
    %s187 = sld [smem:[#allocation9 + $0x5]]
    %v188 = vstv %s187
    %v189 = vmul.f32 %v188, %v179
    %v190 = vmul.f32 %v188, %v180
    %v191 = vadd.f32 %v153, %v189
    %v192 = vadd.f32 %v154, %v190
    %s193 = sld [smem:[#allocation9 + $0x6]]
    %v194 = vstv %s193
    %v195 = vmul.f32 %v194, %v179
    %v196 = vmul.f32 %v194, %v180
    %v197 = vadd.f32 %v159, %v195
    %v198 = vadd.f32 %v160, %v196
    %s199 = sld [smem:[#allocation9 + $0x7]]
    %v200 = vstv %s199
    %v201 = vmul.f32 %v200, %v179
    %v202 = vmul.f32 %v200, %v180
    %v203 = vadd.f32 %v165, %v201
    %v204 = vadd.f32 %v166, %v202
    %206 = vst [vmem:[#allocation1] ss:$4 sm:$0xff] %v108
    %v207 = vld.sshfl [vmem:[#allocation1] sm:$0xff pattern:$0x73625140]
    %v208 = vld.sshfl [vmem:[#allocation1 + $0x8] sm:$0xff pattern:$0x73625140]
    %211 = vrot.lane.b32.xlu0 %v207, 17
    %v212 = vpop.permute.xlu0 %211
    %213 = vrot.lane.b32.xlu0 %v208, 17
    %v214 = vpop.permute.xlu0 %213
    %v215 = vsel %vm133, %v212, %v214
    %v216 = vsel %vm133, %v214, %v212
    %v217 = vsel %vm139, %v216, 0.0
    %v218 = vsel %vm140, %v215, 0.0
    %s219 = sld [smem:[#allocation9 + $0x8]]
    %v220 = vstv %s219
    %v221 = vmul.f32 %v220, %v217
    %v222 = vmul.f32 %v220, %v218
    %v223 = vadd.f32 %v185, %v221
    %v224 = vadd.f32 %v186, %v222
    %s225 = sld [smem:[#allocation9 + $0x9]]
    %v226 = vstv %s225
    %v227 = vmul.f32 %v226, %v217
    %v228 = vmul.f32 %v226, %v218
    %v229 = vadd.f32 %v191, %v227
    %v230 = vadd.f32 %v192, %v228
    %s231 = sld [smem:[#allocation9 + $0xa]]
    %v232 = vstv %s231
    %v233 = vmul.f32 %v232, %v217
    %v234 = vmul.f32 %v232, %v218
    %v235 = vadd.f32 %v197, %v233
    %v236 = vadd.f32 %v198, %v234
    %s237 = sld [smem:[#allocation9 + $0xb]]
    %v238 = vstv %s237
    %v239 = vmul.f32 %v238, %v217
    %v240 = vmul.f32 %v238, %v218
    %v241 = vadd.f32 %v203, %v239
    %v242 = vadd.f32 %v204, %v240
    %244 = vst [vmem:[#allocation1] ss:$4 sm:$0xff] %v110
    %v245 = vld.sshfl [vmem:[#allocation1] sm:$0xff pattern:$0x73625140]
    %v246 = vld.sshfl [vmem:[#allocation1 + $0x8] sm:$0xff pattern:$0x73625140]
    %249 = vrot.lane.b32.xlu0 %v245, 17
    %v250 = vpop.permute.xlu0 %249
    %251 = vrot.lane.b32.xlu0 %v246, 17
    %v252 = vpop.permute.xlu0 %251
    %v253 = vsel %vm133, %v250, %v252
    %v254 = vsel %vm133, %v252, %v250
    %v255 = vsel %vm139, %v254, 0.0
    %v256 = vsel %vm140, %v253, 0.0
    %s257 = sld [smem:[#allocation9 + $0xc]]
    %v258 = vstv %s257
    %v259 = vmul.f32 %v258, %v255
    %v260 = vmul.f32 %v258, %v256
    %v261 = vadd.f32 %v223, %v259
    %v262 = vadd.f32 %v224, %v260
    %s263 = sld [smem:[#allocation9 + $0xd]]
    %v264 = vstv %s263
    %v265 = vmul.f32 %v264, %v255
    %v266 = vmul.f32 %v264, %v256
    %v267 = vadd.f32 %v229, %v265
    %v268 = vadd.f32 %v230, %v266
    %s269 = sld [smem:[#allocation9 + $0xe]]
    %v270 = vstv %s269
    %v271 = vmul.f32 %v270, %v255
    %v272 = vmul.f32 %v270, %v256
    %v273 = vadd.f32 %v235, %v271
    %v274 = vadd.f32 %v236, %v272
    %s275 = sld [smem:[#allocation9 + $0xf]]
    %v276 = vstv %s275
    %v277 = vmul.f32 %v276, %v255
    %v278 = vmul.f32 %v276, %v256
    %v279 = vadd.f32 %v241, %v277
    %v280 = vadd.f32 %v242, %v278
    %s281 = scalar_lea.vmem [#allocation7], 1
    %v282 = vld [vmem:[%s281] ss:$8 sm:$0x3]
    %vm283 = vcmp.ne.f32.partialorder %v282, 0.0
    %284 = vst [vmem:[#allocation1] ss:$4 sm:$0xff] %v104
    %v285 = vld.sshfl [vmem:[#allocation1] sm:$0xff pattern:$0x73625140]
    %v286 = vld.sshfl [vmem:[#allocation1 + $0x8] sm:$0xff pattern:$0x73625140]
    %289 = vrot.lane.b32.xlu0 %v285, 16
    %v290 = vpop.permute.xlu0 %289
    %291 = vrot.lane.b32.xlu0 %v286, 16
    %v292 = vpop.permute.xlu0 %291
    %vm293 = vcmp.lt.s32.totalorder %v132, 16
    %v294 = vsel %vm293, %v290, %v292
    %v295 = vsel %vm293, %v292, %v290
    %v296 = vsel %vm283, 1, 0
    %v297 = vperm.slane %v296, 0
    %v298 = vperm.slane %v296, 1
    %vm299 = vcmp.eq.s32.totalorder %v297, 1
    %vm300 = vcmp.eq.s32.totalorder %v298, 1
    %v301 = vsel %vm299, %v295, 0.0
    %v302 = vsel %vm300, %v294, 0.0
    %s303 = sld [smem:[#allocation9 + $0x10]]
    %v304 = vstv %s303
    %v305 = vmul.f32 %v304, %v301
    %v306 = vmul.f32 %v304, %v302
    %v307 = vadd.f32 %v261, %v305
    %v308 = vadd.f32 %v262, %v306
    %s309 = sld [smem:[#allocation9 + $0x11]]
    %v310 = vstv %s309
    %v311 = vmul.f32 %v310, %v301
    %v312 = vmul.f32 %v310, %v302
    %v313 = vadd.f32 %v267, %v311
    %v314 = vadd.f32 %v268, %v312
    %s315 = sld [smem:[#allocation9 + $0x12]]
    %v316 = vstv %s315
    %v317 = vmul.f32 %v316, %v301
    %v318 = vmul.f32 %v316, %v302
    %v319 = vadd.f32 %v273, %v317
    %v320 = vadd.f32 %v274, %v318
    %s321 = sld [smem:[#allocation9 + $0x13]]
    %v322 = vstv %s321
    %v323 = vmul.f32 %v322, %v301
    %v324 = vmul.f32 %v322, %v302
    %v325 = vadd.f32 %v279, %v323
    %v326 = vadd.f32 %v280, %v324
    %327 = vst [vmem:[#allocation1] ss:$4 sm:$0xff] %v106
    %v328 = vld.sshfl [vmem:[#allocation1] sm:$0xff pattern:$0x73625140]
    %v329 = vld.sshfl [vmem:[#allocation1 + $0x8] sm:$0xff pattern:$0x73625140]
    %332 = vrot.lane.b32.xlu0 %v328, 16
    %v333 = vpop.permute.xlu0 %332
    %334 = vrot.lane.b32.xlu0 %v329, 16
    %v335 = vpop.permute.xlu0 %334
    %v336 = vsel %vm293, %v333, %v335
    %v337 = vsel %vm293, %v335, %v333
    %v338 = vsel %vm299, %v337, 0.0
    %v339 = vsel %vm300, %v336, 0.0
    %s340 = sld [smem:[#allocation9 + $0x14]]
    %v341 = vstv %s340
    %v342 = vmul.f32 %v341, %v338
    %v343 = vmul.f32 %v341, %v339
    %v344 = vadd.f32 %v307, %v342
    %v345 = vadd.f32 %v308, %v343
    %s346 = sld [smem:[#allocation9 + $0x15]]
    %v347 = vstv %s346
    %v348 = vmul.f32 %v347, %v338
    %v349 = vmul.f32 %v347, %v339
    %v350 = vadd.f32 %v313, %v348
    %v351 = vadd.f32 %v314, %v349
    %s352 = sld [smem:[#allocation9 + $0x16]]
    %v353 = vstv %s352
    %v354 = vmul.f32 %v353, %v338
    %v355 = vmul.f32 %v353, %v339
    %v356 = vadd.f32 %v319, %v354
    %v357 = vadd.f32 %v320, %v355
    %s358 = sld [smem:[#allocation9 + $0x17]]
    %v359 = vstv %s358
    %v360 = vmul.f32 %v359, %v338
    %v361 = vmul.f32 %v359, %v339
    %v362 = vadd.f32 %v325, %v360
    %v363 = vadd.f32 %v326, %v361
    %364 = vst [vmem:[#allocation1] ss:$4 sm:$0xff] %v108
    %v365 = vld.sshfl [vmem:[#allocation1] sm:$0xff pattern:$0x73625140]
    %v366 = vld.sshfl [vmem:[#allocation1 + $0x8] sm:$0xff pattern:$0x73625140]
    %369 = vrot.lane.b32.xlu0 %v365, 16
    %v370 = vpop.permute.xlu0 %369
    %371 = vrot.lane.b32.xlu0 %v366, 16
    %v372 = vpop.permute.xlu0 %371
    %v373 = vsel %vm293, %v370, %v372
    %v374 = vsel %vm293, %v372, %v370
    %v375 = vsel %vm299, %v374, 0.0
    %v376 = vsel %vm300, %v373, 0.0
    %s377 = sld [smem:[#allocation9 + $0x18]]
    %v378 = vstv %s377
    %v379 = vmul.f32 %v378, %v375
    %v380 = vmul.f32 %v378, %v376
    %v381 = vadd.f32 %v344, %v379
    %v382 = vadd.f32 %v345, %v380
    %s383 = sld [smem:[#allocation9 + $0x19]]
    %v384 = vstv %s383
    %v385 = vmul.f32 %v384, %v375
    %v386 = vmul.f32 %v384, %v376
    %v387 = vadd.f32 %v350, %v385
    %v388 = vadd.f32 %v351, %v386
    %s389 = sld [smem:[#allocation9 + $0x1a]]
    %v390 = vstv %s389
    %v391 = vmul.f32 %v390, %v375
    %v392 = vmul.f32 %v390, %v376
    %v393 = vadd.f32 %v356, %v391
    %v394 = vadd.f32 %v357, %v392
    %s395 = sld [smem:[#allocation9 + $0x1b]]
    %v396 = vstv %s395
    %v397 = vmul.f32 %v396, %v375
    %v398 = vmul.f32 %v396, %v376
    %v399 = vadd.f32 %v362, %v397
    %v400 = vadd.f32 %v363, %v398
    %401 = vst [vmem:[#allocation1] ss:$4 sm:$0xff] %v110
    %v402 = vld.sshfl [vmem:[#allocation1] sm:$0xff pattern:$0x73625140]
    %v403 = vld.sshfl [vmem:[#allocation1 + $0x8] sm:$0xff pattern:$0x73625140]
    %406 = vrot.lane.b32.xlu0 %v402, 16
    %v407 = vpop.permute.xlu0 %406
    %408 = vrot.lane.b32.xlu0 %v403, 16
    %v409 = vpop.permute.xlu0 %408
    %v410 = vsel %vm293, %v407, %v409
    %v411 = vsel %vm293, %v409, %v407
    %v412 = vsel %vm299, %v411, 0.0
    %v413 = vsel %vm300, %v410, 0.0
    %s414 = sld [smem:[#allocation9 + $0x1c]]
    %v415 = vstv %s414
    %v416 = vmul.f32 %v415, %v412
    %v417 = vmul.f32 %v415, %v413
    %v418 = vadd.f32 %v381, %v416
    %v419 = vadd.f32 %v382, %v417
    %s420 = sld [smem:[#allocation9 + $0x1d]]
    %v421 = vstv %s420
    %v422 = vmul.f32 %v421, %v412
    %v423 = vmul.f32 %v421, %v413
    %v424 = vadd.f32 %v387, %v422
    %v425 = vadd.f32 %v388, %v423
    %s426 = sld [smem:[#allocation9 + $0x1e]]
    %v427 = vstv %s426
    %v428 = vmul.f32 %v427, %v412
    %v429 = vmul.f32 %v427, %v413
    %v430 = vadd.f32 %v393, %v428
    %v431 = vadd.f32 %v394, %v429
    %s432 = sld [smem:[#allocation9 + $0x1f]]
    %v433 = vstv %s432
    %v434 = vmul.f32 %v433, %v412
    %v435 = vmul.f32 %v433, %v413
    %v436 = vadd.f32 %v399, %v434
    %v437 = vadd.f32 %v400, %v435
    %s438 = scalar_lea.vmem [#allocation7], 2
    %v439 = vld [vmem:[%s438] ss:$8 sm:$0x3]
    %vm440 = vcmp.ne.f32.partialorder %v439, 0.0
    %441 = vst [vmem:[#allocation1] ss:$4 sm:$0xff] %v104
    %v442 = vld.sshfl [vmem:[#allocation1] sm:$0xff pattern:$0x73625140]
    %v443 = vld.sshfl [vmem:[#allocation1 + $0x8] sm:$0xff pattern:$0x73625140]
    %446 = vrot.lane.b32.xlu0 %v442, 15
    %v447 = vpop.permute.xlu0 %446
    %448 = vrot.lane.b32.xlu0 %v443, 15
    %v449 = vpop.permute.xlu0 %448
    %vm450 = vcmp.lt.s32.totalorder %v132, 15
    %v451 = vsel %vm450, %v447, %v449
    %v452 = vsel %vm450, %v449, %v447
    %v453 = vsel %vm440, 1, 0
    %v454 = vperm.slane %v453, 0
    %v455 = vperm.slane %v453, 1
    %vm456 = vcmp.eq.s32.totalorder %v454, 1
    %vm457 = vcmp.eq.s32.totalorder %v455, 1
    %v458 = vsel %vm456, %v452, 0.0
    %v459 = vsel %vm457, %v451, 0.0
    %s460 = sld [smem:[#allocation9 + $0x20]]
    %v461 = vstv %s460
    %v462 = vmul.f32 %v461, %v458
    %v463 = vmul.f32 %v461, %v459
    %v464 = vadd.f32 %v418, %v462
    %v465 = vadd.f32 %v419, %v463
    %s466 = sld [smem:[#allocation9 + $0x21]]
    %v467 = vstv %s466
    %v468 = vmul.f32 %v467, %v458
    %v469 = vmul.f32 %v467, %v459
    %v470 = vadd.f32 %v424, %v468
    %v471 = vadd.f32 %v425, %v469
    %s472 = sld [smem:[#allocation9 + $0x22]]
    %v473 = vstv %s472
    %v474 = vmul.f32 %v473, %v458
    %v475 = vmul.f32 %v473, %v459
    %v476 = vadd.f32 %v430, %v474
    %v477 = vadd.f32 %v431, %v475
    %s478 = sld [smem:[#allocation9 + $0x23]]
    %v479 = vstv %s478
    %v480 = vmul.f32 %v479, %v458
    %v481 = vmul.f32 %v479, %v459
    %v482 = vadd.f32 %v436, %v480
    %v483 = vadd.f32 %v437, %v481
    %484 = vst [vmem:[#allocation1] ss:$4 sm:$0xff] %v106
    %v485 = vld.sshfl [vmem:[#allocation1] sm:$0xff pattern:$0x73625140]
    %v486 = vld.sshfl [vmem:[#allocation1 + $0x8] sm:$0xff pattern:$0x73625140]
    %489 = vrot.lane.b32.xlu0 %v485, 15
    %v490 = vpop.permute.xlu0 %489
    %491 = vrot.lane.b32.xlu0 %v486, 15
    %v492 = vpop.permute.xlu0 %491
    %v493 = vsel %vm450, %v490, %v492
    %v494 = vsel %vm450, %v492, %v490
    %v495 = vsel %vm456, %v494, 0.0
    %v496 = vsel %vm457, %v493, 0.0
    %s497 = sld [smem:[#allocation9 + $0x24]]
    %v498 = vstv %s497
    %v499 = vmul.f32 %v498, %v495
    %v500 = vmul.f32 %v498, %v496
    %v501 = vadd.f32 %v464, %v499
    %v502 = vadd.f32 %v465, %v500
    %s503 = sld [smem:[#allocation9 + $0x25]]
    %v504 = vstv %s503
    %v505 = vmul.f32 %v504, %v495
    %v506 = vmul.f32 %v504, %v496
    %v507 = vadd.f32 %v470, %v505
    %v508 = vadd.f32 %v471, %v506
    %s509 = sld [smem:[#allocation9 + $0x26]]
    %v510 = vstv %s509
    %v511 = vmul.f32 %v510, %v495
    %v512 = vmul.f32 %v510, %v496
    %v513 = vadd.f32 %v476, %v511
    %v514 = vadd.f32 %v477, %v512
    %s515 = sld [smem:[#allocation9 + $0x27]]
    %v516 = vstv %s515
    %v517 = vmul.f32 %v516, %v495
    %v518 = vmul.f32 %v516, %v496
    %v519 = vadd.f32 %v482, %v517
    %v520 = vadd.f32 %v483, %v518
    %521 = vst [vmem:[#allocation1] ss:$4 sm:$0xff] %v108
    %v522 = vld.sshfl [vmem:[#allocation1] sm:$0xff pattern:$0x73625140]
    %v523 = vld.sshfl [vmem:[#allocation1 + $0x8] sm:$0xff pattern:$0x73625140]
    %526 = vrot.lane.b32.xlu0 %v522, 15
    %v527 = vpop.permute.xlu0 %526
    %528 = vrot.lane.b32.xlu0 %v523, 15
    %v529 = vpop.permute.xlu0 %528
    %v530 = vsel %vm450, %v527, %v529
    %v531 = vsel %vm450, %v529, %v527
    %v532 = vsel %vm456, %v531, 0.0
    %v533 = vsel %vm457, %v530, 0.0
    %s534 = sld [smem:[#allocation9 + $0x28]]
    %v535 = vstv %s534
    %v536 = vmul.f32 %v535, %v532
    %v537 = vmul.f32 %v535, %v533
    %v538 = vadd.f32 %v501, %v536
    %v539 = vadd.f32 %v502, %v537
    %s540 = sld [smem:[#allocation9 + $0x29]]
    %v541 = vstv %s540
    %v542 = vmul.f32 %v541, %v532
    %v543 = vmul.f32 %v541, %v533
    %v544 = vadd.f32 %v507, %v542
    %v545 = vadd.f32 %v508, %v543
    %s546 = sld [smem:[#allocation9 + $0x2a]]
    %v547 = vstv %s546
    %v548 = vmul.f32 %v547, %v532
    %v549 = vmul.f32 %v547, %v533
    %v550 = vadd.f32 %v513, %v548
    %v551 = vadd.f32 %v514, %v549
    %s552 = sld [smem:[#allocation9 + $0x2b]]
    %v553 = vstv %s552
    %v554 = vmul.f32 %v553, %v532
    %v555 = vmul.f32 %v553, %v533
    %v556 = vadd.f32 %v519, %v554
    %v557 = vadd.f32 %v520, %v555
    %558 = vst [vmem:[#allocation1] ss:$4 sm:$0xff] %v110
    %v559 = vld.sshfl [vmem:[#allocation1] sm:$0xff pattern:$0x73625140]
    %v560 = vld.sshfl [vmem:[#allocation1 + $0x8] sm:$0xff pattern:$0x73625140]
    %563 = vrot.lane.b32.xlu0 %v559, 15
    %v564 = vpop.permute.xlu0 %563
    %565 = vrot.lane.b32.xlu0 %v560, 15
    %v566 = vpop.permute.xlu0 %565
    %v567 = vsel %vm450, %v564, %v566
    %v568 = vsel %vm450, %v566, %v564
    %v569 = vsel %vm456, %v568, 0.0
    %v570 = vsel %vm457, %v567, 0.0
    %s571 = sld [smem:[#allocation9 + $0x2c]]
    %v572 = vstv %s571
    %v573 = vmul.f32 %v572, %v569
    %v574 = vmul.f32 %v572, %v570
    %v575 = vadd.f32 %v538, %v573
    %v576 = vadd.f32 %v539, %v574
    %s577 = sld [smem:[#allocation9 + $0x2d]]
    %v578 = vstv %s577
    %v579 = vmul.f32 %v578, %v569
    %v580 = vmul.f32 %v578, %v570
    %v581 = vadd.f32 %v544, %v579
    %v582 = vadd.f32 %v545, %v580
    %s583 = sld [smem:[#allocation9 + $0x2e]]
    %v584 = vstv %s583
    %v585 = vmul.f32 %v584, %v569
    %v586 = vmul.f32 %v584, %v570
    %v587 = vadd.f32 %v550, %v585
    %v588 = vadd.f32 %v551, %v586
    %s589 = sld [smem:[#allocation9 + $0x2f]]
    %v590 = vstv %s589
    %v591 = vmul.f32 %v590, %v569
    %v592 = vmul.f32 %v590, %v570
    %v593 = vadd.f32 %v556, %v591
    %v594 = vadd.f32 %v557, %v592
    %s595 = scalar_lea.vmem [#allocation7], 3
    %v596 = vld [vmem:[%s595] ss:$8 sm:$0x3]
    %vm597 = vcmp.ne.f32.partialorder %v596, 0.0
    %598 = vst [vmem:[#allocation1] ss:$4 sm:$0xff] %v104
    %v599 = vld.sshfl [vmem:[#allocation1] sm:$0xff pattern:$0x73625140]
    %v600 = vld.sshfl [vmem:[#allocation1 + $0x8] sm:$0xff pattern:$0x73625140]
    %603 = vrot.lane.b32.xlu0 %v599, 1
    %v604 = vpop.permute.xlu0 %603
    %605 = vrot.lane.b32.xlu0 %v600, 1
    %v606 = vpop.permute.xlu0 %605
    %vm607 = vcmp.lt.s32.totalorder %v132, 1
    %v608 = vsel %vm607, %v604, %v606
    %v609 = vsel %vm607, %v606, %v604
    %v610 = vsel %vm597, 1, 0
    %v611 = vperm.slane %v610, 0
    %v612 = vperm.slane %v610, 1
    %vm613 = vcmp.eq.s32.totalorder %v611, 1
    %vm614 = vcmp.eq.s32.totalorder %v612, 1
    %v615 = vsel %vm613, %v609, 0.0
    %v616 = vsel %vm614, %v608, 0.0
    %s617 = sld [smem:[#allocation9 + $0x30]]
    %v618 = vstv %s617
    %v619 = vmul.f32 %v618, %v615
    %v620 = vmul.f32 %v618, %v616
    %v621 = vadd.f32 %v575, %v619
    %v622 = vadd.f32 %v576, %v620
    %s623 = sld [smem:[#allocation9 + $0x31]]
    %v624 = vstv %s623
    %v625 = vmul.f32 %v624, %v615
    %v626 = vmul.f32 %v624, %v616
    %v627 = vadd.f32 %v581, %v625
    %v628 = vadd.f32 %v582, %v626
    %s629 = sld [smem:[#allocation9 + $0x32]]
    %v630 = vstv %s629
    %v631 = vmul.f32 %v630, %v615
    %v632 = vmul.f32 %v630, %v616
    %v633 = vadd.f32 %v587, %v631
    %v634 = vadd.f32 %v588, %v632
    %s635 = sld [smem:[#allocation9 + $0x33]]
    %v636 = vstv %s635
    %v637 = vmul.f32 %v636, %v615
    %v638 = vmul.f32 %v636, %v616
    %v639 = vadd.f32 %v593, %v637
    %v640 = vadd.f32 %v594, %v638
    %641 = vst [vmem:[#allocation1] ss:$4 sm:$0xff] %v106
    %v642 = vld.sshfl [vmem:[#allocation1] sm:$0xff pattern:$0x73625140]
    %v643 = vld.sshfl [vmem:[#allocation1 + $0x8] sm:$0xff pattern:$0x73625140]
    %646 = vrot.lane.b32.xlu0 %v642, 1
    %v647 = vpop.permute.xlu0 %646
    %648 = vrot.lane.b32.xlu0 %v643, 1
    %v649 = vpop.permute.xlu0 %648
    %v650 = vsel %vm607, %v647, %v649
    %v651 = vsel %vm607, %v649, %v647
    %v652 = vsel %vm613, %v651, 0.0
    %v653 = vsel %vm614, %v650, 0.0
    %s654 = sld [smem:[#allocation9 + $0x34]]
    %v655 = vstv %s654
    %v656 = vmul.f32 %v655, %v652
    %v657 = vmul.f32 %v655, %v653
    %v658 = vadd.f32 %v621, %v656
    %v659 = vadd.f32 %v622, %v657
    %s660 = sld [smem:[#allocation9 + $0x35]]
    %v661 = vstv %s660
    %v662 = vmul.f32 %v661, %v652
    %v663 = vmul.f32 %v661, %v653
    %v664 = vadd.f32 %v627, %v662
    %v665 = vadd.f32 %v628, %v663
    %s666 = sld [smem:[#allocation9 + $0x36]]
    %v667 = vstv %s666
    %v668 = vmul.f32 %v667, %v652
    %v669 = vmul.f32 %v667, %v653
    %v670 = vadd.f32 %v633, %v668
    %v671 = vadd.f32 %v634, %v669
    %s672 = sld [smem:[#allocation9 + $0x37]]
    %v673 = vstv %s672
    %v674 = vmul.f32 %v673, %v652
    %v675 = vmul.f32 %v673, %v653
    %v676 = vadd.f32 %v639, %v674
    %v677 = vadd.f32 %v640, %v675
    %678 = vst [vmem:[#allocation1] ss:$4 sm:$0xff] %v108
    %v679 = vld.sshfl [vmem:[#allocation1] sm:$0xff pattern:$0x73625140]
    %v680 = vld.sshfl [vmem:[#allocation1 + $0x8] sm:$0xff pattern:$0x73625140]
    %683 = vrot.lane.b32.xlu0 %v679, 1
    %v684 = vpop.permute.xlu0 %683
    %685 = vrot.lane.b32.xlu0 %v680, 1
    %v686 = vpop.permute.xlu0 %685
    %v687 = vsel %vm607, %v684, %v686
    %v688 = vsel %vm607, %v686, %v684
    %v689 = vsel %vm613, %v688, 0.0
    %v690 = vsel %vm614, %v687, 0.0
    %s691 = sld [smem:[#allocation9 + $0x38]]
    %v692 = vstv %s691
    %v693 = vmul.f32 %v692, %v689
    %v694 = vmul.f32 %v692, %v690
    %v695 = vadd.f32 %v658, %v693
    %v696 = vadd.f32 %v659, %v694
    %s697 = sld [smem:[#allocation9 + $0x39]]
    %v698 = vstv %s697
    %v699 = vmul.f32 %v698, %v689
    %v700 = vmul.f32 %v698, %v690
    %v701 = vadd.f32 %v664, %v699
    %v702 = vadd.f32 %v665, %v700
    %s703 = sld [smem:[#allocation9 + $0x3a]]
    %v704 = vstv %s703
    %v705 = vmul.f32 %v704, %v689
    %v706 = vmul.f32 %v704, %v690
    %v707 = vadd.f32 %v670, %v705
    %v708 = vadd.f32 %v671, %v706
    %s709 = sld [smem:[#allocation9 + $0x3b]]
    %v710 = vstv %s709
    %v711 = vmul.f32 %v710, %v689
    %v712 = vmul.f32 %v710, %v690
    %v713 = vadd.f32 %v676, %v711
    %v714 = vadd.f32 %v677, %v712
    %715 = vst [vmem:[#allocation1] ss:$4 sm:$0xff] %v110
    %v716 = vld.sshfl [vmem:[#allocation1] sm:$0xff pattern:$0x73625140]
    %v717 = vld.sshfl [vmem:[#allocation1 + $0x8] sm:$0xff pattern:$0x73625140]
    %720 = vrot.lane.b32.xlu0 %v716, 1
    %v721 = vpop.permute.xlu0 %720
    %722 = vrot.lane.b32.xlu0 %v717, 1
    %v723 = vpop.permute.xlu0 %722
    %v724 = vsel %vm607, %v721, %v723
    %v725 = vsel %vm607, %v723, %v721
    %v726 = vsel %vm613, %v725, 0.0
    %v727 = vsel %vm614, %v724, 0.0
    %s728 = sld [smem:[#allocation9 + $0x3c]]
    %v729 = vstv %s728
    %v730 = vmul.f32 %v729, %v726
    %v731 = vmul.f32 %v729, %v727
    %v732 = vadd.f32 %v695, %v730
    %v733 = vadd.f32 %v696, %v731
    %s734 = sld [smem:[#allocation9 + $0x3d]]
    %v735 = vstv %s734
    %v736 = vmul.f32 %v735, %v726
    %v737 = vmul.f32 %v735, %v727
    %v738 = vadd.f32 %v701, %v736
    %v739 = vadd.f32 %v702, %v737
    %s740 = sld [smem:[#allocation9 + $0x3e]]
    %v741 = vstv %s740
    %v742 = vmul.f32 %v741, %v726
    %v743 = vmul.f32 %v741, %v727
    %v744 = vadd.f32 %v707, %v742
    %v745 = vadd.f32 %v708, %v743
    %s746 = sld [smem:[#allocation9 + $0x3f]]
    %v747 = vstv %s746
    %v748 = vmul.f32 %v747, %v726
    %v749 = vmul.f32 %v747, %v727
    %v750 = vadd.f32 %v713, %v748
    %v751 = vadd.f32 %v714, %v749
    %s752 = sld [smem:[#allocation9 + $0x40]]
    %v753 = vstv %s752
    %v754 = vmul.f32 %v753, %v104
    %756 = vst [vmem:[#allocation1] ss:$4 sm:$0xff] %v754
    %v757 = vld.sshfl [vmem:[#allocation1] sm:$0xff pattern:$0x73625140]
    %v758 = vld.sshfl [vmem:[#allocation1 + $0x8] sm:$0xff pattern:$0x73625140]
    %v761 = vadd.f32 %v732, %v757
    %v762 = vadd.f32 %v733, %v758
    %s763 = sld [smem:[#allocation9 + $0x41]]
    %v764 = vstv %s763
    %v765 = vmul.f32 %v764, %v104
    %767 = vst [vmem:[#allocation1] ss:$4 sm:$0xff] %v765
    %v768 = vld.sshfl [vmem:[#allocation1] sm:$0xff pattern:$0x73625140]
    %v769 = vld.sshfl [vmem:[#allocation1 + $0x8] sm:$0xff pattern:$0x73625140]
    %v772 = vadd.f32 %v738, %v768
    %v773 = vadd.f32 %v739, %v769
    %s774 = sld [smem:[#allocation9 + $0x42]]
    %v775 = vstv %s774
    %v776 = vmul.f32 %v775, %v104
    %778 = vst [vmem:[#allocation1] ss:$4 sm:$0xff] %v776
    %v779 = vld.sshfl [vmem:[#allocation1] sm:$0xff pattern:$0x73625140]
    %v780 = vld.sshfl [vmem:[#allocation1 + $0x8] sm:$0xff pattern:$0x73625140]
    %v783 = vadd.f32 %v744, %v779
    %v784 = vadd.f32 %v745, %v780
    %s785 = sld [smem:[#allocation9 + $0x43]]
    %v786 = vstv %s785
    %v787 = vmul.f32 %v786, %v104
    %789 = vst [vmem:[#allocation1] ss:$4 sm:$0xff] %v787
    %v790 = vld.sshfl [vmem:[#allocation1] sm:$0xff pattern:$0x73625140]
    %v791 = vld.sshfl [vmem:[#allocation1 + $0x8] sm:$0xff pattern:$0x73625140]
    %v794 = vadd.f32 %v750, %v790
    %v795 = vadd.f32 %v751, %v791
    %s796 = sld [smem:[#allocation9 + $0x44]]
    %v797 = vstv %s796
    %v798 = vmul.f32 %v797, %v106
    %800 = vst [vmem:[#allocation1] ss:$4 sm:$0xff] %v798
    %v801 = vld.sshfl [vmem:[#allocation1] sm:$0xff pattern:$0x73625140]
    %v802 = vld.sshfl [vmem:[#allocation1 + $0x8] sm:$0xff pattern:$0x73625140]
    %v805 = vadd.f32 %v761, %v801
    %v806 = vadd.f32 %v762, %v802
    %s807 = sld [smem:[#allocation9 + $0x45]]
    %v808 = vstv %s807
    %v809 = vmul.f32 %v808, %v106
    %811 = vst [vmem:[#allocation1] ss:$4 sm:$0xff] %v809
    %v812 = vld.sshfl [vmem:[#allocation1] sm:$0xff pattern:$0x73625140]
    %v813 = vld.sshfl [vmem:[#allocation1 + $0x8] sm:$0xff pattern:$0x73625140]
    %v816 = vadd.f32 %v772, %v812
    %v817 = vadd.f32 %v773, %v813
    %s818 = sld [smem:[#allocation9 + $0x46]]
    %v819 = vstv %s818
    %v820 = vmul.f32 %v819, %v106
    %822 = vst [vmem:[#allocation1] ss:$4 sm:$0xff] %v820
    %v823 = vld.sshfl [vmem:[#allocation1] sm:$0xff pattern:$0x73625140]
    %v824 = vld.sshfl [vmem:[#allocation1 + $0x8] sm:$0xff pattern:$0x73625140]
    %v827 = vadd.f32 %v783, %v823
    %v828 = vadd.f32 %v784, %v824
    %s829 = sld [smem:[#allocation9 + $0x47]]
    %v830 = vstv %s829
    %v831 = vmul.f32 %v830, %v106
    %833 = vst [vmem:[#allocation1] ss:$4 sm:$0xff] %v831
    %v834 = vld.sshfl [vmem:[#allocation1] sm:$0xff pattern:$0x73625140]
    %v835 = vld.sshfl [vmem:[#allocation1 + $0x8] sm:$0xff pattern:$0x73625140]
    %v838 = vadd.f32 %v794, %v834
    %v839 = vadd.f32 %v795, %v835
    %s840 = sld [smem:[#allocation9 + $0x48]]
    %v841 = vstv %s840
    %v842 = vmul.f32 %v841, %v108
    %844 = vst [vmem:[#allocation1] ss:$4 sm:$0xff] %v842
    %v845 = vld.sshfl [vmem:[#allocation1] sm:$0xff pattern:$0x73625140]
    %v846 = vld.sshfl [vmem:[#allocation1 + $0x8] sm:$0xff pattern:$0x73625140]
    %v849 = vadd.f32 %v805, %v845
    %v850 = vadd.f32 %v806, %v846
    %s851 = sld [smem:[#allocation9 + $0x49]]
    %v852 = vstv %s851
    %v853 = vmul.f32 %v852, %v108
    %855 = vst [vmem:[#allocation1] ss:$4 sm:$0xff] %v853
    %v856 = vld.sshfl [vmem:[#allocation1] sm:$0xff pattern:$0x73625140]
    %v857 = vld.sshfl [vmem:[#allocation1 + $0x8] sm:$0xff pattern:$0x73625140]
    %v860 = vadd.f32 %v816, %v856
    %v861 = vadd.f32 %v817, %v857
    %s862 = sld [smem:[#allocation9 + $0x4a]]
    %v863 = vstv %s862
    %v864 = vmul.f32 %v863, %v108
    %866 = vst [vmem:[#allocation1] ss:$4 sm:$0xff] %v864
    %v867 = vld.sshfl [vmem:[#allocation1] sm:$0xff pattern:$0x73625140]
    %v868 = vld.sshfl [vmem:[#allocation1 + $0x8] sm:$0xff pattern:$0x73625140]
    %v871 = vadd.f32 %v827, %v867
    %v872 = vadd.f32 %v828, %v868
    %s873 = sld [smem:[#allocation9 + $0x4b]]
    %v874 = vstv %s873
    %v875 = vmul.f32 %v874, %v108
    %877 = vst [vmem:[#allocation1] ss:$4 sm:$0xff] %v875
    %v878 = vld.sshfl [vmem:[#allocation1] sm:$0xff pattern:$0x73625140]
    %v879 = vld.sshfl [vmem:[#allocation1 + $0x8] sm:$0xff pattern:$0x73625140]
    %v882 = vadd.f32 %v838, %v878
    %v883 = vadd.f32 %v839, %v879
    %s884 = sld [smem:[#allocation9 + $0x4c]]
    %v885 = vstv %s884
    %v886 = vmul.f32 %v885, %v110
    %888 = vst [vmem:[#allocation1] ss:$4 sm:$0xff] %v886
    %v889 = vld.sshfl [vmem:[#allocation1] sm:$0xff pattern:$0x73625140]
    %v890 = vld.sshfl [vmem:[#allocation1 + $0x8] sm:$0xff pattern:$0x73625140]
    %v893 = vadd.f32 %v849, %v889
    %v894 = vadd.f32 %v850, %v890
    %s895 = sld [smem:[#allocation9 + $0x4d]]
    %v896 = vstv %s895
    %v897 = vmul.f32 %v896, %v110
    %899 = vst [vmem:[#allocation1] ss:$4 sm:$0xff] %v897
    %v900 = vld.sshfl [vmem:[#allocation1] sm:$0xff pattern:$0x73625140]
    %v901 = vld.sshfl [vmem:[#allocation1 + $0x8] sm:$0xff pattern:$0x73625140]
    %v904 = vadd.f32 %v860, %v900
    %v905 = vadd.f32 %v861, %v901
    %s906 = sld [smem:[#allocation9 + $0x4e]]
    %v907 = vstv %s906
    %v908 = vmul.f32 %v907, %v110
    %910 = vst [vmem:[#allocation1] ss:$4 sm:$0xff] %v908
    %v911 = vld.sshfl [vmem:[#allocation1] sm:$0xff pattern:$0x73625140]
    %v912 = vld.sshfl [vmem:[#allocation1 + $0x8] sm:$0xff pattern:$0x73625140]
    %v915 = vadd.f32 %v871, %v911
    %v916 = vadd.f32 %v872, %v912
    %s917 = sld [smem:[#allocation9 + $0x4f]]
    %v918 = vstv %s917
    %v919 = vmul.f32 %v918, %v110
    %921 = vst [vmem:[#allocation1] ss:$4 sm:$0xff] %v919
    %v922 = vld.sshfl [vmem:[#allocation1] sm:$0xff pattern:$0x73625140]
    %v923 = vld.sshfl [vmem:[#allocation1 + $0x8] sm:$0xff pattern:$0x73625140]
    %v926 = vadd.f32 %v882, %v922
    %v927 = vadd.f32 %v883, %v923
    %s928 = scalar_lea.vmem [#allocation7], 5
    %v929 = vld [vmem:[%s928] ss:$8 sm:$0x3]
    %vm930 = vcmp.ne.f32.partialorder %v929, 0.0
    %931 = vst [vmem:[#allocation1] ss:$4 sm:$0xff] %v104
    %v932 = vld.sshfl [vmem:[#allocation1] sm:$0xff pattern:$0x73625140]
    %v933 = vld.sshfl [vmem:[#allocation1 + $0x8] sm:$0xff pattern:$0x73625140]
    %936 = vrot.lane.b32.xlu0 %v932, 127
    %v937 = vpop.permute.xlu0 %936
    %938 = vrot.lane.b32.xlu0 %v933, 127
    %v939 = vpop.permute.xlu0 %938
    %vm940 = vcmp.lt.s32.totalorder %v132, 127
    %v941 = vsel %vm940, %v937, %v939
    %v942 = vsel %vm940, %v939, %v937
    %v943 = vsel %vm930, 1, 0
    %v944 = vperm.slane %v943, 0
    %v945 = vperm.slane %v943, 1
    %vm946 = vcmp.eq.s32.totalorder %v944, 1
    %vm947 = vcmp.eq.s32.totalorder %v945, 1
    %v948 = vsel %vm946, %v941, 0.0
    %v949 = vsel %vm947, %v942, 0.0
    %s950 = sld [smem:[#allocation9 + $0x50]]
    %v951 = vstv %s950
    %v952 = vmul.f32 %v951, %v948
    %v953 = vmul.f32 %v951, %v949
    %v954 = vadd.f32 %v893, %v952
    %v955 = vadd.f32 %v894, %v953
    %s956 = sld [smem:[#allocation9 + $0x51]]
    %v957 = vstv %s956
    %v958 = vmul.f32 %v957, %v948
    %v959 = vmul.f32 %v957, %v949
    %v960 = vadd.f32 %v904, %v958
    %v961 = vadd.f32 %v905, %v959
    %s962 = sld [smem:[#allocation9 + $0x52]]
    %v963 = vstv %s962
    %v964 = vmul.f32 %v963, %v948
    %v965 = vmul.f32 %v963, %v949
    %v966 = vadd.f32 %v915, %v964
    %v967 = vadd.f32 %v916, %v965
    %s968 = sld [smem:[#allocation9 + $0x53]]
    %v969 = vstv %s968
    %v970 = vmul.f32 %v969, %v948
    %v971 = vmul.f32 %v969, %v949
    %v972 = vadd.f32 %v926, %v970
    %v973 = vadd.f32 %v927, %v971
    %974 = vst [vmem:[#allocation1] ss:$4 sm:$0xff] %v106
    %v975 = vld.sshfl [vmem:[#allocation1] sm:$0xff pattern:$0x73625140]
    %v976 = vld.sshfl [vmem:[#allocation1 + $0x8] sm:$0xff pattern:$0x73625140]
    %979 = vrot.lane.b32.xlu0 %v975, 127
    %v980 = vpop.permute.xlu0 %979
    %981 = vrot.lane.b32.xlu0 %v976, 127
    %v982 = vpop.permute.xlu0 %981
    %v983 = vsel %vm940, %v980, %v982
    %v984 = vsel %vm940, %v982, %v980
    %v985 = vsel %vm946, %v983, 0.0
    %v986 = vsel %vm947, %v984, 0.0
    %s987 = sld [smem:[#allocation9 + $0x54]]
    %v988 = vstv %s987
    %v989 = vmul.f32 %v988, %v985
    %v990 = vmul.f32 %v988, %v986
    %v991 = vadd.f32 %v954, %v989
    %v992 = vadd.f32 %v955, %v990
    %s993 = sld [smem:[#allocation9 + $0x55]]
    %v994 = vstv %s993
    %v995 = vmul.f32 %v994, %v985
    %v996 = vmul.f32 %v994, %v986
    %v997 = vadd.f32 %v960, %v995
    %v998 = vadd.f32 %v961, %v996
    %s999 = sld [smem:[#allocation9 + $0x56]]
    %v1000 = vstv %s999
    %v1001 = vmul.f32 %v1000, %v985
    %v1002 = vmul.f32 %v1000, %v986
    %v1003 = vadd.f32 %v966, %v1001
    %v1004 = vadd.f32 %v967, %v1002
    %s1005 = sld [smem:[#allocation9 + $0x57]]
    %v1006 = vstv %s1005
    %v1007 = vmul.f32 %v1006, %v985
    %v1008 = vmul.f32 %v1006, %v986
    %v1009 = vadd.f32 %v972, %v1007
    %v1010 = vadd.f32 %v973, %v1008
    %1011 = vst [vmem:[#allocation1] ss:$4 sm:$0xff] %v108
    %v1012 = vld.sshfl [vmem:[#allocation1] sm:$0xff pattern:$0x73625140]
    %v1013 = vld.sshfl [vmem:[#allocation1 + $0x8] sm:$0xff pattern:$0x73625140]
    %1016 = vrot.lane.b32.xlu0 %v1012, 127
    %v1017 = vpop.permute.xlu0 %1016
    %1018 = vrot.lane.b32.xlu0 %v1013, 127
    %v1019 = vpop.permute.xlu0 %1018
    %v1020 = vsel %vm940, %v1017, %v1019
    %v1021 = vsel %vm940, %v1019, %v1017
    %v1022 = vsel %vm946, %v1020, 0.0
    %v1023 = vsel %vm947, %v1021, 0.0
    %s1024 = sld [smem:[#allocation9 + $0x58]]
    %v1025 = vstv %s1024
    %v1026 = vmul.f32 %v1025, %v1022
    %v1027 = vmul.f32 %v1025, %v1023
    %v1028 = vadd.f32 %v991, %v1026
    %v1029 = vadd.f32 %v992, %v1027
    %s1030 = sld [smem:[#allocation9 + $0x59]]
    %v1031 = vstv %s1030
    %v1032 = vmul.f32 %v1031, %v1022
    %v1033 = vmul.f32 %v1031, %v1023
    %v1034 = vadd.f32 %v997, %v1032
    %v1035 = vadd.f32 %v998, %v1033
    %s1036 = sld [smem:[#allocation9 + $0x5a]]
    %v1037 = vstv %s1036
    %v1038 = vmul.f32 %v1037, %v1022
    %v1039 = vmul.f32 %v1037, %v1023
    %v1040 = vadd.f32 %v1003, %v1038
    %v1041 = vadd.f32 %v1004, %v1039
    %s1042 = sld [smem:[#allocation9 + $0x5b]]
    %v1043 = vstv %s1042
    %v1044 = vmul.f32 %v1043, %v1022
    %v1045 = vmul.f32 %v1043, %v1023
    %v1046 = vadd.f32 %v1009, %v1044
    %v1047 = vadd.f32 %v1010, %v1045
    %1048 = vst [vmem:[#allocation1] ss:$4 sm:$0xff] %v110
    %v1049 = vld.sshfl [vmem:[#allocation1] sm:$0xff pattern:$0x73625140]
    %v1050 = vld.sshfl [vmem:[#allocation1 + $0x8] sm:$0xff pattern:$0x73625140]
    %1053 = vrot.lane.b32.xlu0 %v1049, 127
    %v1054 = vpop.permute.xlu0 %1053
    %1055 = vrot.lane.b32.xlu0 %v1050, 127
    %v1056 = vpop.permute.xlu0 %1055
    %v1057 = vsel %vm940, %v1054, %v1056
    %v1058 = vsel %vm940, %v1056, %v1054
    %v1059 = vsel %vm946, %v1057, 0.0
    %v1060 = vsel %vm947, %v1058, 0.0
    %s1061 = sld [smem:[#allocation9 + $0x5c]]
    %v1062 = vstv %s1061
    %v1063 = vmul.f32 %v1062, %v1059
    %v1064 = vmul.f32 %v1062, %v1060
    %v1065 = vadd.f32 %v1028, %v1063
    %v1066 = vadd.f32 %v1029, %v1064
    %s1067 = sld [smem:[#allocation9 + $0x5d]]
    %v1068 = vstv %s1067
    %v1069 = vmul.f32 %v1068, %v1059
    %v1070 = vmul.f32 %v1068, %v1060
    %v1071 = vadd.f32 %v1034, %v1069
    %v1072 = vadd.f32 %v1035, %v1070
    %s1073 = sld [smem:[#allocation9 + $0x5e]]
    %v1074 = vstv %s1073
    %v1075 = vmul.f32 %v1074, %v1059
    %v1076 = vmul.f32 %v1074, %v1060
    %v1077 = vadd.f32 %v1040, %v1075
    %v1078 = vadd.f32 %v1041, %v1076
    %s1079 = sld [smem:[#allocation9 + $0x5f]]
    %v1080 = vstv %s1079
    %v1081 = vmul.f32 %v1080, %v1059
    %v1082 = vmul.f32 %v1080, %v1060
    %v1083 = vadd.f32 %v1046, %v1081
    %v1084 = vadd.f32 %v1047, %v1082
    %s1085 = scalar_lea.vmem [#allocation7], 6
    %v1086 = vld [vmem:[%s1085] ss:$8 sm:$0x3]
    %vm1087 = vcmp.ne.f32.partialorder %v1086, 0.0
    %1088 = vst [vmem:[#allocation1] ss:$4 sm:$0xff] %v104
    %v1089 = vld.sshfl [vmem:[#allocation1] sm:$0xff pattern:$0x73625140]
    %v1090 = vld.sshfl [vmem:[#allocation1 + $0x8] sm:$0xff pattern:$0x73625140]
    %1093 = vrot.lane.b32.xlu0 %v1089, 113
    %v1094 = vpop.permute.xlu0 %1093
    %1095 = vrot.lane.b32.xlu0 %v1090, 113
    %v1096 = vpop.permute.xlu0 %1095
    %vm1097 = vcmp.lt.s32.totalorder %v132, 113
    %v1098 = vsel %vm1097, %v1094, %v1096
    %v1099 = vsel %vm1097, %v1096, %v1094
    %v1100 = vsel %vm1087, 1, 0
    %v1101 = vperm.slane %v1100, 0
    %v1102 = vperm.slane %v1100, 1
    %vm1103 = vcmp.eq.s32.totalorder %v1101, 1
    %vm1104 = vcmp.eq.s32.totalorder %v1102, 1
    %v1105 = vsel %vm1103, %v1098, 0.0
    %v1106 = vsel %vm1104, %v1099, 0.0
    %s1107 = sld [smem:[#allocation9 + $0x60]]
    %v1108 = vstv %s1107
    %v1109 = vmul.f32 %v1108, %v1105
    %v1110 = vmul.f32 %v1108, %v1106
    %v1111 = vadd.f32 %v1065, %v1109
    %v1112 = vadd.f32 %v1066, %v1110
    %s1113 = sld [smem:[#allocation9 + $0x61]]
    %v1114 = vstv %s1113
    %v1115 = vmul.f32 %v1114, %v1105
    %v1116 = vmul.f32 %v1114, %v1106
    %v1117 = vadd.f32 %v1071, %v1115
    %v1118 = vadd.f32 %v1072, %v1116
    %s1119 = sld [smem:[#allocation9 + $0x62]]
    %v1120 = vstv %s1119
    %v1121 = vmul.f32 %v1120, %v1105
    %v1122 = vmul.f32 %v1120, %v1106
    %v1123 = vadd.f32 %v1077, %v1121
    %v1124 = vadd.f32 %v1078, %v1122
    %s1125 = sld [smem:[#allocation9 + $0x63]]
    %v1126 = vstv %s1125
    %v1127 = vmul.f32 %v1126, %v1105
    %v1128 = vmul.f32 %v1126, %v1106
    %v1129 = vadd.f32 %v1083, %v1127
    %v1130 = vadd.f32 %v1084, %v1128
    %1131 = vst [vmem:[#allocation1] ss:$4 sm:$0xff] %v106
    %v1132 = vld.sshfl [vmem:[#allocation1] sm:$0xff pattern:$0x73625140]
    %v1133 = vld.sshfl [vmem:[#allocation1 + $0x8] sm:$0xff pattern:$0x73625140]
    %1136 = vrot.lane.b32.xlu0 %v1132, 113
    %v1137 = vpop.permute.xlu0 %1136
    %1138 = vrot.lane.b32.xlu0 %v1133, 113
    %v1139 = vpop.permute.xlu0 %1138
    %v1140 = vsel %vm1097, %v1137, %v1139
    %v1141 = vsel %vm1097, %v1139, %v1137
    %v1142 = vsel %vm1103, %v1140, 0.0
    %v1143 = vsel %vm1104, %v1141, 0.0
    %s1144 = sld [smem:[#allocation9 + $0x64]]
    %v1145 = vstv %s1144
    %v1146 = vmul.f32 %v1145, %v1142
    %v1147 = vmul.f32 %v1145, %v1143
    %v1148 = vadd.f32 %v1111, %v1146
    %v1149 = vadd.f32 %v1112, %v1147
    %s1150 = sld [smem:[#allocation9 + $0x65]]
    %v1151 = vstv %s1150
    %v1152 = vmul.f32 %v1151, %v1142
    %v1153 = vmul.f32 %v1151, %v1143
    %v1154 = vadd.f32 %v1117, %v1152
    %v1155 = vadd.f32 %v1118, %v1153
    %s1156 = sld [smem:[#allocation9 + $0x66]]
    %v1157 = vstv %s1156
    %v1158 = vmul.f32 %v1157, %v1142
    %v1159 = vmul.f32 %v1157, %v1143
    %v1160 = vadd.f32 %v1123, %v1158
    %v1161 = vadd.f32 %v1124, %v1159
    %s1162 = sld [smem:[#allocation9 + $0x67]]
    %v1163 = vstv %s1162
    %v1164 = vmul.f32 %v1163, %v1142
    %v1165 = vmul.f32 %v1163, %v1143
    %v1166 = vadd.f32 %v1129, %v1164
    %v1167 = vadd.f32 %v1130, %v1165
    %1168 = vst [vmem:[#allocation1] ss:$4 sm:$0xff] %v108
    %v1169 = vld.sshfl [vmem:[#allocation1] sm:$0xff pattern:$0x73625140]
    %v1170 = vld.sshfl [vmem:[#allocation1 + $0x8] sm:$0xff pattern:$0x73625140]
    %1173 = vrot.lane.b32.xlu0 %v1169, 113
    %v1174 = vpop.permute.xlu0 %1173
    %1175 = vrot.lane.b32.xlu0 %v1170, 113
    %v1176 = vpop.permute.xlu0 %1175
    %v1177 = vsel %vm1097, %v1174, %v1176
    %v1178 = vsel %vm1097, %v1176, %v1174
    %v1179 = vsel %vm1103, %v1177, 0.0
    %v1180 = vsel %vm1104, %v1178, 0.0
    %s1181 = sld [smem:[#allocation9 + $0x68]]
    %v1182 = vstv %s1181
    %v1183 = vmul.f32 %v1182, %v1179
    %v1184 = vmul.f32 %v1182, %v1180
    %v1185 = vadd.f32 %v1148, %v1183
    %v1186 = vadd.f32 %v1149, %v1184
    %s1187 = sld [smem:[#allocation9 + $0x69]]
    %v1188 = vstv %s1187
    %v1189 = vmul.f32 %v1188, %v1179
    %v1190 = vmul.f32 %v1188, %v1180
    %v1191 = vadd.f32 %v1154, %v1189
    %v1192 = vadd.f32 %v1155, %v1190
    %s1193 = sld [smem:[#allocation9 + $0x6a]]
    %v1194 = vstv %s1193
    %v1195 = vmul.f32 %v1194, %v1179
    %v1196 = vmul.f32 %v1194, %v1180
    %v1197 = vadd.f32 %v1160, %v1195
    %v1198 = vadd.f32 %v1161, %v1196
    %s1199 = sld [smem:[#allocation9 + $0x6b]]
    %v1200 = vstv %s1199
    %v1201 = vmul.f32 %v1200, %v1179
    %v1202 = vmul.f32 %v1200, %v1180
    %v1203 = vadd.f32 %v1166, %v1201
    %v1204 = vadd.f32 %v1167, %v1202
    %1205 = vst [vmem:[#allocation1] ss:$4 sm:$0xff] %v110
    %v1206 = vld.sshfl [vmem:[#allocation1] sm:$0xff pattern:$0x73625140]
    %v1207 = vld.sshfl [vmem:[#allocation1 + $0x8] sm:$0xff pattern:$0x73625140]
    %1210 = vrot.lane.b32.xlu0 %v1206, 113
    %v1211 = vpop.permute.xlu0 %1210
    %1212 = vrot.lane.b32.xlu0 %v1207, 113
    %v1213 = vpop.permute.xlu0 %1212
    %v1214 = vsel %vm1097, %v1211, %v1213
    %v1215 = vsel %vm1097, %v1213, %v1211
    %v1216 = vsel %vm1103, %v1214, 0.0
    %v1217 = vsel %vm1104, %v1215, 0.0
    %s1218 = sld [smem:[#allocation9 + $0x6c]]
    %v1219 = vstv %s1218
    %v1220 = vmul.f32 %v1219, %v1216
    %v1221 = vmul.f32 %v1219, %v1217
    %v1222 = vadd.f32 %v1185, %v1220
    %v1223 = vadd.f32 %v1186, %v1221
    %s1224 = sld [smem:[#allocation9 + $0x6d]]
    %v1225 = vstv %s1224
    %v1226 = vmul.f32 %v1225, %v1216
    %v1227 = vmul.f32 %v1225, %v1217
    %v1228 = vadd.f32 %v1191, %v1226
    %v1229 = vadd.f32 %v1192, %v1227
    %s1230 = sld [smem:[#allocation9 + $0x6e]]
    %v1231 = vstv %s1230
    %v1232 = vmul.f32 %v1231, %v1216
    %v1233 = vmul.f32 %v1231, %v1217
    %v1234 = vadd.f32 %v1197, %v1232
    %v1235 = vadd.f32 %v1198, %v1233
    %s1236 = sld [smem:[#allocation9 + $0x6f]]
    %v1237 = vstv %s1236
    %v1238 = vmul.f32 %v1237, %v1216
    %v1239 = vmul.f32 %v1237, %v1217
    %v1240 = vadd.f32 %v1203, %v1238
    %v1241 = vadd.f32 %v1204, %v1239
    %s1242 = scalar_lea.vmem [#allocation7], 7
    %v1243 = vld [vmem:[%s1242] ss:$8 sm:$0x3]
    %vm1244 = vcmp.ne.f32.partialorder %v1243, 0.0
    %1245 = vst [vmem:[#allocation1] ss:$4 sm:$0xff] %v104
    %v1246 = vld.sshfl [vmem:[#allocation1] sm:$0xff pattern:$0x73625140]
    %v1247 = vld.sshfl [vmem:[#allocation1 + $0x8] sm:$0xff pattern:$0x73625140]
    %1250 = vrot.lane.b32.xlu0 %v1246, 112
    %v1251 = vpop.permute.xlu0 %1250
    %1252 = vrot.lane.b32.xlu0 %v1247, 112
    %v1253 = vpop.permute.xlu0 %1252
    %vm1254 = vcmp.lt.s32.totalorder %v132, 112
    %v1255 = vsel %vm1254, %v1251, %v1253
    %v1256 = vsel %vm1254, %v1253, %v1251
    %v1257 = vsel %vm1244, 1, 0
    %v1258 = vperm.slane %v1257, 0
    %v1259 = vperm.slane %v1257, 1
    %vm1260 = vcmp.eq.s32.totalorder %v1258, 1
    %vm1261 = vcmp.eq.s32.totalorder %v1259, 1
    %v1262 = vsel %vm1260, %v1255, 0.0
    %v1263 = vsel %vm1261, %v1256, 0.0
    %s1264 = sld [smem:[#allocation9 + $0x70]]
    %v1265 = vstv %s1264
    %v1266 = vmul.f32 %v1265, %v1262
    %v1267 = vmul.f32 %v1265, %v1263
    %v1268 = vadd.f32 %v1222, %v1266
    %v1269 = vadd.f32 %v1223, %v1267
    %s1270 = sld [smem:[#allocation9 + $0x71]]
    %v1271 = vstv %s1270
    %v1272 = vmul.f32 %v1271, %v1262
    %v1273 = vmul.f32 %v1271, %v1263
    %v1274 = vadd.f32 %v1228, %v1272
    %v1275 = vadd.f32 %v1229, %v1273
    %s1276 = sld [smem:[#allocation9 + $0x72]]
    %v1277 = vstv %s1276
    %v1278 = vmul.f32 %v1277, %v1262
    %v1279 = vmul.f32 %v1277, %v1263
    %v1280 = vadd.f32 %v1234, %v1278
    %v1281 = vadd.f32 %v1235, %v1279
    %s1282 = sld [smem:[#allocation9 + $0x73]]
    %v1283 = vstv %s1282
    %v1284 = vmul.f32 %v1283, %v1262
    %v1285 = vmul.f32 %v1283, %v1263
    %v1286 = vadd.f32 %v1240, %v1284
    %v1287 = vadd.f32 %v1241, %v1285
    %1288 = vst [vmem:[#allocation1] ss:$4 sm:$0xff] %v106
    %v1289 = vld.sshfl [vmem:[#allocation1] sm:$0xff pattern:$0x73625140]
    %v1290 = vld.sshfl [vmem:[#allocation1 + $0x8] sm:$0xff pattern:$0x73625140]
    %1293 = vrot.lane.b32.xlu0 %v1289, 112
    %v1294 = vpop.permute.xlu0 %1293
    %1295 = vrot.lane.b32.xlu0 %v1290, 112
    %v1296 = vpop.permute.xlu0 %1295
    %v1297 = vsel %vm1254, %v1294, %v1296
    %v1298 = vsel %vm1254, %v1296, %v1294
    %v1299 = vsel %vm1260, %v1297, 0.0
    %v1300 = vsel %vm1261, %v1298, 0.0
    %s1301 = sld [smem:[#allocation9 + $0x74]]
    %v1302 = vstv %s1301
    %v1303 = vmul.f32 %v1302, %v1299
    %v1304 = vmul.f32 %v1302, %v1300
    %v1305 = vadd.f32 %v1268, %v1303
    %v1306 = vadd.f32 %v1269, %v1304
    %s1307 = sld [smem:[#allocation9 + $0x75]]
    %v1308 = vstv %s1307
    %v1309 = vmul.f32 %v1308, %v1299
    %v1310 = vmul.f32 %v1308, %v1300
    %v1311 = vadd.f32 %v1274, %v1309
    %v1312 = vadd.f32 %v1275, %v1310
    %s1313 = sld [smem:[#allocation9 + $0x76]]
    %v1314 = vstv %s1313
    %v1315 = vmul.f32 %v1314, %v1299
    %v1316 = vmul.f32 %v1314, %v1300
    %v1317 = vadd.f32 %v1280, %v1315
    %v1318 = vadd.f32 %v1281, %v1316
    %s1319 = sld [smem:[#allocation9 + $0x77]]
    %v1320 = vstv %s1319
    %v1321 = vmul.f32 %v1320, %v1299
    %v1322 = vmul.f32 %v1320, %v1300
    %v1323 = vadd.f32 %v1286, %v1321
    %v1324 = vadd.f32 %v1287, %v1322
    %1325 = vst [vmem:[#allocation1] ss:$4 sm:$0xff] %v108
    %v1326 = vld.sshfl [vmem:[#allocation1] sm:$0xff pattern:$0x73625140]
    %v1327 = vld.sshfl [vmem:[#allocation1 + $0x8] sm:$0xff pattern:$0x73625140]
    %1330 = vrot.lane.b32.xlu0 %v1326, 112
    %v1331 = vpop.permute.xlu0 %1330
    %1332 = vrot.lane.b32.xlu0 %v1327, 112
    %v1333 = vpop.permute.xlu0 %1332
    %v1334 = vsel %vm1254, %v1331, %v1333
    %v1335 = vsel %vm1254, %v1333, %v1331
    %v1336 = vsel %vm1260, %v1334, 0.0
    %v1337 = vsel %vm1261, %v1335, 0.0
    %s1338 = sld [smem:[#allocation9 + $0x78]]
    %v1339 = vstv %s1338
    %v1340 = vmul.f32 %v1339, %v1336
    %v1341 = vmul.f32 %v1339, %v1337
    %v1342 = vadd.f32 %v1305, %v1340
    %v1343 = vadd.f32 %v1306, %v1341
    %s1344 = sld [smem:[#allocation9 + $0x79]]
    %v1345 = vstv %s1344
    %v1346 = vmul.f32 %v1345, %v1336
    %v1347 = vmul.f32 %v1345, %v1337
    %v1348 = vadd.f32 %v1311, %v1346
    %v1349 = vadd.f32 %v1312, %v1347
    %s1350 = sld [smem:[#allocation9 + $0x7a]]
    %v1351 = vstv %s1350
    %v1352 = vmul.f32 %v1351, %v1336
    %v1353 = vmul.f32 %v1351, %v1337
    %v1354 = vadd.f32 %v1317, %v1352
    %v1355 = vadd.f32 %v1318, %v1353
    %s1356 = sld [smem:[#allocation9 + $0x7b]]
    %v1357 = vstv %s1356
    %v1358 = vmul.f32 %v1357, %v1336
    %v1359 = vmul.f32 %v1357, %v1337
    %v1360 = vadd.f32 %v1323, %v1358
    %v1361 = vadd.f32 %v1324, %v1359
    %1362 = vst [vmem:[#allocation1] ss:$4 sm:$0xff] %v110
    %v1363 = vld.sshfl [vmem:[#allocation1] sm:$0xff pattern:$0x73625140]
    %v1364 = vld.sshfl [vmem:[#allocation1 + $0x8] sm:$0xff pattern:$0x73625140]
    %1367 = vrot.lane.b32.xlu0 %v1363, 112
    %v1368 = vpop.permute.xlu0 %1367
    %1369 = vrot.lane.b32.xlu0 %v1364, 112
    %v1370 = vpop.permute.xlu0 %1369
    %v1371 = vsel %vm1254, %v1368, %v1370
    %v1372 = vsel %vm1254, %v1370, %v1368
    %v1373 = vsel %vm1260, %v1371, 0.0
    %v1374 = vsel %vm1261, %v1372, 0.0
    %s1375 = sld [smem:[#allocation9 + $0x7c]]
    %v1376 = vstv %s1375
    %v1377 = vmul.f32 %v1376, %v1373
    %v1378 = vmul.f32 %v1376, %v1374
    %v1379 = vadd.f32 %v1342, %v1377
    %v1380 = vadd.f32 %v1343, %v1378
    %s1381 = sld [smem:[#allocation9 + $0x7d]]
    %v1382 = vstv %s1381
    %v1383 = vmul.f32 %v1382, %v1373
    %v1384 = vmul.f32 %v1382, %v1374
    %v1385 = vadd.f32 %v1348, %v1383
    %v1386 = vadd.f32 %v1349, %v1384
    %s1387 = sld [smem:[#allocation9 + $0x7e]]
    %v1388 = vstv %s1387
    %v1389 = vmul.f32 %v1388, %v1373
    %v1390 = vmul.f32 %v1388, %v1374
    %v1391 = vadd.f32 %v1354, %v1389
    %v1392 = vadd.f32 %v1355, %v1390
    %s1393 = sld [smem:[#allocation9 + $0x7f]]
    %v1394 = vstv %s1393
    %v1395 = vmul.f32 %v1394, %v1373
    %v1396 = vmul.f32 %v1394, %v1374
    %v1397 = vadd.f32 %v1360, %v1395
    %v1398 = vadd.f32 %v1361, %v1396
    %s1399 = scalar_lea.vmem [#allocation7], 16
    %v1400 = vld [vmem:[%s1399] ss:$8 sm:$0x3]
    %vm1401 = vcmp.ne.f32.partialorder %v1400, 0.0
    %1402 = vst [vmem:[#allocation1] ss:$4 sm:$0xff] %v104
    %v1403 = vld.sshfl [vmem:[#allocation1] sm:$0xff pattern:$0x73625140]
    %v1404 = vld.sshfl [vmem:[#allocation1 + $0x8] sm:$0xff pattern:$0x73625140]
    %1407 = vrot.lane.b32.xlu0 %v1403, 111
    %v1408 = vpop.permute.xlu0 %1407
    %1409 = vrot.lane.b32.xlu0 %v1404, 111
    %v1410 = vpop.permute.xlu0 %1409
    %vm1411 = vcmp.lt.s32.totalorder %v132, 111
    %v1412 = vsel %vm1411, %v1408, %v1410
    %v1413 = vsel %vm1411, %v1410, %v1408
    %v1414 = vsel %vm1401, 1, 0
    %v1415 = vperm.slane %v1414, 0
    %v1416 = vperm.slane %v1414, 1
    %vm1417 = vcmp.eq.s32.totalorder %v1415, 1
    %vm1418 = vcmp.eq.s32.totalorder %v1416, 1
    %v1419 = vsel %vm1417, %v1412, 0.0
    %v1420 = vsel %vm1418, %v1413, 0.0
    %s1421 = sld [smem:[#allocation9 + $0x80]]
    %v1422 = vstv %s1421
    %v1423 = vmul.f32 %v1422, %v1419
    %v1424 = vmul.f32 %v1422, %v1420
    %v1425 = vadd.f32 %v1379, %v1423
    %v1426 = vadd.f32 %v1380, %v1424
    %s1427 = sld [smem:[#allocation9 + $0x81]]
    %v1428 = vstv %s1427
    %v1429 = vmul.f32 %v1428, %v1419
    %v1430 = vmul.f32 %v1428, %v1420
    %v1431 = vadd.f32 %v1385, %v1429
    %v1432 = vadd.f32 %v1386, %v1430
    %s1433 = sld [smem:[#allocation9 + $0x82]]
    %v1434 = vstv %s1433
    %v1435 = vmul.f32 %v1434, %v1419
    %v1436 = vmul.f32 %v1434, %v1420
    %v1437 = vadd.f32 %v1391, %v1435
    %v1438 = vadd.f32 %v1392, %v1436
    %s1439 = sld [smem:[#allocation9 + $0x83]]
    %v1440 = vstv %s1439
    %v1441 = vmul.f32 %v1440, %v1419
    %v1442 = vmul.f32 %v1440, %v1420
    %v1443 = vadd.f32 %v1397, %v1441
    %v1444 = vadd.f32 %v1398, %v1442
    %1445 = vst [vmem:[#allocation1] ss:$4 sm:$0xff] %v106
    %v1446 = vld.sshfl [vmem:[#allocation1] sm:$0xff pattern:$0x73625140]
    %v1447 = vld.sshfl [vmem:[#allocation1 + $0x8] sm:$0xff pattern:$0x73625140]
    %1450 = vrot.lane.b32.xlu0 %v1446, 111
    %v1451 = vpop.permute.xlu0 %1450
    %1452 = vrot.lane.b32.xlu0 %v1447, 111
    %v1453 = vpop.permute.xlu0 %1452
    %v1454 = vsel %vm1411, %v1451, %v1453
    %v1455 = vsel %vm1411, %v1453, %v1451
    %v1456 = vsel %vm1417, %v1454, 0.0
    %v1457 = vsel %vm1418, %v1455, 0.0
    %s1458 = sld [smem:[#allocation9 + $0x84]]
    %v1459 = vstv %s1458
    %v1460 = vmul.f32 %v1459, %v1456
    %v1461 = vmul.f32 %v1459, %v1457
    %v1462 = vadd.f32 %v1425, %v1460
    %v1463 = vadd.f32 %v1426, %v1461
    %s1464 = sld [smem:[#allocation9 + $0x85]]
    %v1465 = vstv %s1464
    %v1466 = vmul.f32 %v1465, %v1456
    %v1467 = vmul.f32 %v1465, %v1457
    %v1468 = vadd.f32 %v1431, %v1466
    %v1469 = vadd.f32 %v1432, %v1467
    %s1470 = sld [smem:[#allocation9 + $0x86]]
    %v1471 = vstv %s1470
    %v1472 = vmul.f32 %v1471, %v1456
    %v1473 = vmul.f32 %v1471, %v1457
    %v1474 = vadd.f32 %v1437, %v1472
    %v1475 = vadd.f32 %v1438, %v1473
    %s1476 = sld [smem:[#allocation9 + $0x87]]
    %v1477 = vstv %s1476
    %v1478 = vmul.f32 %v1477, %v1456
    %v1479 = vmul.f32 %v1477, %v1457
    %v1480 = vadd.f32 %v1443, %v1478
    %v1481 = vadd.f32 %v1444, %v1479
    %1482 = vst [vmem:[#allocation1] ss:$4 sm:$0xff] %v108
    %v1483 = vld.sshfl [vmem:[#allocation1] sm:$0xff pattern:$0x73625140]
    %v1484 = vld.sshfl [vmem:[#allocation1 + $0x8] sm:$0xff pattern:$0x73625140]
    %1487 = vrot.lane.b32.xlu0 %v1483, 111
    %v1488 = vpop.permute.xlu0 %1487
    %1489 = vrot.lane.b32.xlu0 %v1484, 111
    %v1490 = vpop.permute.xlu0 %1489
    %v1491 = vsel %vm1411, %v1488, %v1490
    %v1492 = vsel %vm1411, %v1490, %v1488
    %v1493 = vsel %vm1417, %v1491, 0.0
    %v1494 = vsel %vm1418, %v1492, 0.0
    %s1495 = sld [smem:[#allocation9 + $0x88]]
    %v1496 = vstv %s1495
    %v1497 = vmul.f32 %v1496, %v1493
    %v1498 = vmul.f32 %v1496, %v1494
    %v1499 = vadd.f32 %v1462, %v1497
    %v1500 = vadd.f32 %v1463, %v1498
    %s1501 = sld [smem:[#allocation9 + $0x89]]
    %v1502 = vstv %s1501
    %v1503 = vmul.f32 %v1502, %v1493
    %v1504 = vmul.f32 %v1502, %v1494
    %v1505 = vadd.f32 %v1468, %v1503
    %v1506 = vadd.f32 %v1469, %v1504
    %s1507 = sld [smem:[#allocation9 + $0x8a]]
    %v1508 = vstv %s1507
    %v1509 = vmul.f32 %v1508, %v1493
    %v1510 = vmul.f32 %v1508, %v1494
    %v1511 = vadd.f32 %v1474, %v1509
    %v1512 = vadd.f32 %v1475, %v1510
    %s1513 = sld [smem:[#allocation9 + $0x8b]]
    %v1514 = vstv %s1513
    %v1515 = vmul.f32 %v1514, %v1493
    %v1516 = vmul.f32 %v1514, %v1494
    %v1517 = vadd.f32 %v1480, %v1515
    %v1518 = vadd.f32 %v1481, %v1516
    %1519 = vst [vmem:[#allocation1] ss:$4 sm:$0xff] %v110
    %v1520 = vld.sshfl [vmem:[#allocation1] sm:$0xff pattern:$0x73625140]
    %v1521 = vld.sshfl [vmem:[#allocation1 + $0x8] sm:$0xff pattern:$0x73625140]
    %1524 = vrot.lane.b32.xlu0 %v1520, 111
    %v1525 = vpop.permute.xlu0 %1524
    %1526 = vrot.lane.b32.xlu0 %v1521, 111
    %v1527 = vpop.permute.xlu0 %1526
    %v1528 = vsel %vm1411, %v1525, %v1527
    %v1529 = vsel %vm1411, %v1527, %v1525
    %v1530 = vsel %vm1417, %v1528, 0.0
    %v1531 = vsel %vm1418, %v1529, 0.0
    %s1532 = sld [smem:[#allocation9 + $0x8c]]
    %v1533 = vstv %s1532
    %v1534 = vmul.f32 %v1533, %v1530
    %v1535 = vmul.f32 %v1533, %v1531
    %v1536 = vadd.f32 %v1499, %v1534
    %v1537 = vadd.f32 %v1500, %v1535
    %s1538 = sld [smem:[#allocation9 + $0x8d]]
    %v1539 = vstv %s1538
    %v1540 = vmul.f32 %v1539, %v1530
    %v1541 = vmul.f32 %v1539, %v1531
    %v1542 = vadd.f32 %v1505, %v1540
    %v1543 = vadd.f32 %v1506, %v1541
    %s1544 = sld [smem:[#allocation9 + $0x8e]]
    %v1545 = vstv %s1544
    %v1546 = vmul.f32 %v1545, %v1530
    %v1547 = vmul.f32 %v1545, %v1531
    %v1548 = vadd.f32 %v1511, %v1546
    %v1549 = vadd.f32 %v1512, %v1547
    %s1550 = sld [smem:[#allocation9 + $0x8f]]
    %v1551 = vstv %s1550
    %v1552 = vmul.f32 %v1551, %v1530
    %v1553 = vmul.f32 %v1551, %v1531
    %v1554 = vadd.f32 %v1517, %v1552
    %v1555 = vadd.f32 %v1518, %v1553
    %v1556 = vmax.f32 %v1536, 0.0
    %v1557 = vmax.f32 %v1537, 0.0
    %v1558 = vmax.f32 %v1542, 0.0
    %v1559 = vmax.f32 %v1543, 0.0
    %v1560 = vmax.f32 %v1548, 0.0
    %v1561 = vmax.f32 %v1549, 0.0
    %v1562 = vmax.f32 %v1554, 0.0
    %v1563 = vmax.f32 %v1555, 0.0
    %s1564 = sld [smem:[#allocation13]]
    %v1565 = vstv %s1564
    %s1566 = sld [smem:[#allocation13 + $0x1]]
    %v1567 = vstv %s1566
    %s1568 = sld [smem:[#allocation13 + $0x2]]
    %v1569 = vstv %s1568
    %s1570 = sld [smem:[#allocation13 + $0x3]]
    %v1571 = vstv %s1570
    %1572 = vrot.lane.b32.xlu0 %v1556, 17
    %v1573 = vpop.permute.xlu0 %1572
    %1574 = vrot.lane.b32.xlu0 %v1557, 17
    %v1575 = vpop.permute.xlu0 %1574
    %v1576 = vsel %vm133, %v1573, %v1575
    %v1577 = vsel %vm133, %v1575, %v1573
    %v1578 = vsel %vm139, %v1577, 0.0
    %v1579 = vsel %vm140, %v1576, 0.0
    %s1580 = sld [smem:[#allocation11]]
    %v1581 = vstv %s1580
    %v1582 = vmul.f32 %v1581, %v1578
    %v1583 = vmul.f32 %v1581, %v1579
    %v1584 = vadd.f32 %v1565, %v1582
    %v1585 = vadd.f32 %v1565, %v1583
    %s1586 = sld [smem:[#allocation11 + $0x1]]
    %v1587 = vstv %s1586
    %v1588 = vmul.f32 %v1587, %v1578
    %v1589 = vmul.f32 %v1587, %v1579
    %v1590 = vadd.f32 %v1567, %v1588
    %v1591 = vadd.f32 %v1567, %v1589
    %s1592 = sld [smem:[#allocation11 + $0x2]]
    %v1593 = vstv %s1592
    %v1594 = vmul.f32 %v1593, %v1578
    %v1595 = vmul.f32 %v1593, %v1579
    %v1596 = vadd.f32 %v1569, %v1594
    %v1597 = vadd.f32 %v1569, %v1595
    %s1598 = sld [smem:[#allocation11 + $0x3]]
    %v1599 = vstv %s1598
    %v1600 = vmul.f32 %v1599, %v1578
    %v1601 = vmul.f32 %v1599, %v1579
    %v1602 = vadd.f32 %v1571, %v1600
    %v1603 = vadd.f32 %v1571, %v1601
    %1604 = vrot.lane.b32.xlu0 %v1558, 17
    %v1605 = vpop.permute.xlu0 %1604
    %1606 = vrot.lane.b32.xlu0 %v1559, 17
    %v1607 = vpop.permute.xlu0 %1606
    %v1608 = vsel %vm133, %v1605, %v1607
    %v1609 = vsel %vm133, %v1607, %v1605
    %v1610 = vsel %vm139, %v1609, 0.0
    %v1611 = vsel %vm140, %v1608, 0.0
    %s1612 = sld [smem:[#allocation11 + $0x4]]
    %v1613 = vstv %s1612
    %v1614 = vmul.f32 %v1613, %v1610
    %v1615 = vmul.f32 %v1613, %v1611
    %v1616 = vadd.f32 %v1584, %v1614
    %v1617 = vadd.f32 %v1585, %v1615
    %s1618 = sld [smem:[#allocation11 + $0x5]]
    %v1619 = vstv %s1618
    %v1620 = vmul.f32 %v1619, %v1610
    %v1621 = vmul.f32 %v1619, %v1611
    %v1622 = vadd.f32 %v1590, %v1620
    %v1623 = vadd.f32 %v1591, %v1621
    %s1624 = sld [smem:[#allocation11 + $0x6]]
    %v1625 = vstv %s1624
    %v1626 = vmul.f32 %v1625, %v1610
    %v1627 = vmul.f32 %v1625, %v1611
    %v1628 = vadd.f32 %v1596, %v1626
    %v1629 = vadd.f32 %v1597, %v1627
    %s1630 = sld [smem:[#allocation11 + $0x7]]
    %v1631 = vstv %s1630
    %v1632 = vmul.f32 %v1631, %v1610
    %v1633 = vmul.f32 %v1631, %v1611
    %v1634 = vadd.f32 %v1602, %v1632
    %v1635 = vadd.f32 %v1603, %v1633
    %1636 = vrot.lane.b32.xlu0 %v1560, 17
    %v1637 = vpop.permute.xlu0 %1636
    %1638 = vrot.lane.b32.xlu0 %v1561, 17
    %v1639 = vpop.permute.xlu0 %1638
    %v1640 = vsel %vm133, %v1637, %v1639
    %v1641 = vsel %vm133, %v1639, %v1637
    %v1642 = vsel %vm139, %v1641, 0.0
    %v1643 = vsel %vm140, %v1640, 0.0
    %s1644 = sld [smem:[#allocation11 + $0x8]]
    %v1645 = vstv %s1644
    %v1646 = vmul.f32 %v1645, %v1642
    %v1647 = vmul.f32 %v1645, %v1643
    %v1648 = vadd.f32 %v1616, %v1646
    %v1649 = vadd.f32 %v1617, %v1647
    %s1650 = sld [smem:[#allocation11 + $0x9]]
    %v1651 = vstv %s1650
    %v1652 = vmul.f32 %v1651, %v1642
    %v1653 = vmul.f32 %v1651, %v1643
    %v1654 = vadd.f32 %v1622, %v1652
    %v1655 = vadd.f32 %v1623, %v1653
    %s1656 = sld [smem:[#allocation11 + $0xa]]
    %v1657 = vstv %s1656
    %v1658 = vmul.f32 %v1657, %v1642
    %v1659 = vmul.f32 %v1657, %v1643
    %v1660 = vadd.f32 %v1628, %v1658
    %v1661 = vadd.f32 %v1629, %v1659
    %s1662 = sld [smem:[#allocation11 + $0xb]]
    %v1663 = vstv %s1662
    %v1664 = vmul.f32 %v1663, %v1642
    %v1665 = vmul.f32 %v1663, %v1643
    %v1666 = vadd.f32 %v1634, %v1664
    %v1667 = vadd.f32 %v1635, %v1665
    %1668 = vrot.lane.b32.xlu0 %v1562, 17
    %v1669 = vpop.permute.xlu0 %1668
    %1670 = vrot.lane.b32.xlu0 %v1563, 17
    %v1671 = vpop.permute.xlu0 %1670
    %v1672 = vsel %vm133, %v1669, %v1671
    %v1673 = vsel %vm133, %v1671, %v1669
    %v1674 = vsel %vm139, %v1673, 0.0
    %v1675 = vsel %vm140, %v1672, 0.0
    %s1676 = sld [smem:[#allocation11 + $0xc]]
    %v1677 = vstv %s1676
    %v1678 = vmul.f32 %v1677, %v1674
    %v1679 = vmul.f32 %v1677, %v1675
    %v1680 = vadd.f32 %v1648, %v1678
    %v1681 = vadd.f32 %v1649, %v1679
    %s1682 = sld [smem:[#allocation11 + $0xd]]
    %v1683 = vstv %s1682
    %v1684 = vmul.f32 %v1683, %v1674
    %v1685 = vmul.f32 %v1683, %v1675
    %v1686 = vadd.f32 %v1654, %v1684
    %v1687 = vadd.f32 %v1655, %v1685
    %s1688 = sld [smem:[#allocation11 + $0xe]]
    %v1689 = vstv %s1688
    %v1690 = vmul.f32 %v1689, %v1674
    %v1691 = vmul.f32 %v1689, %v1675
    %v1692 = vadd.f32 %v1660, %v1690
    %v1693 = vadd.f32 %v1661, %v1691
    %s1694 = sld [smem:[#allocation11 + $0xf]]
    %v1695 = vstv %s1694
    %v1696 = vmul.f32 %v1695, %v1674
    %v1697 = vmul.f32 %v1695, %v1675
    %v1698 = vadd.f32 %v1666, %v1696
    %v1699 = vadd.f32 %v1667, %v1697
    %1700 = vrot.lane.b32.xlu0 %v1556, 16
    %v1701 = vpop.permute.xlu0 %1700
    %1702 = vrot.lane.b32.xlu0 %v1557, 16
    %v1703 = vpop.permute.xlu0 %1702
    %v1704 = vsel %vm293, %v1701, %v1703
    %v1705 = vsel %vm293, %v1703, %v1701
    %v1706 = vsel %vm299, %v1705, 0.0
    %v1707 = vsel %vm300, %v1704, 0.0
    %s1708 = sld [smem:[#allocation11 + $0x10]]
    %v1709 = vstv %s1708
    %v1710 = vmul.f32 %v1709, %v1706
    %v1711 = vmul.f32 %v1709, %v1707
    %v1712 = vadd.f32 %v1680, %v1710
    %v1713 = vadd.f32 %v1681, %v1711
    %s1714 = sld [smem:[#allocation11 + $0x11]]
    %v1715 = vstv %s1714
    %v1716 = vmul.f32 %v1715, %v1706
    %v1717 = vmul.f32 %v1715, %v1707
    %v1718 = vadd.f32 %v1686, %v1716
    %v1719 = vadd.f32 %v1687, %v1717
    %s1720 = sld [smem:[#allocation11 + $0x12]]
    %v1721 = vstv %s1720
    %v1722 = vmul.f32 %v1721, %v1706
    %v1723 = vmul.f32 %v1721, %v1707
    %v1724 = vadd.f32 %v1692, %v1722
    %v1725 = vadd.f32 %v1693, %v1723
    %s1726 = sld [smem:[#allocation11 + $0x13]]
    %v1727 = vstv %s1726
    %v1728 = vmul.f32 %v1727, %v1706
    %v1729 = vmul.f32 %v1727, %v1707
    %v1730 = vadd.f32 %v1698, %v1728
    %v1731 = vadd.f32 %v1699, %v1729
    %1732 = vrot.lane.b32.xlu0 %v1558, 16
    %v1733 = vpop.permute.xlu0 %1732
    %1734 = vrot.lane.b32.xlu0 %v1559, 16
    %v1735 = vpop.permute.xlu0 %1734
    %v1736 = vsel %vm293, %v1733, %v1735
    %v1737 = vsel %vm293, %v1735, %v1733
    %v1738 = vsel %vm299, %v1737, 0.0
    %v1739 = vsel %vm300, %v1736, 0.0
    %s1740 = sld [smem:[#allocation11 + $0x14]]
    %v1741 = vstv %s1740
    %v1742 = vmul.f32 %v1741, %v1738
    %v1743 = vmul.f32 %v1741, %v1739
    %v1744 = vadd.f32 %v1712, %v1742
    %v1745 = vadd.f32 %v1713, %v1743
    %s1746 = sld [smem:[#allocation11 + $0x15]]
    %v1747 = vstv %s1746
    %v1748 = vmul.f32 %v1747, %v1738
    %v1749 = vmul.f32 %v1747, %v1739
    %v1750 = vadd.f32 %v1718, %v1748
    %v1751 = vadd.f32 %v1719, %v1749
    %s1752 = sld [smem:[#allocation11 + $0x16]]
    %v1753 = vstv %s1752
    %v1754 = vmul.f32 %v1753, %v1738
    %v1755 = vmul.f32 %v1753, %v1739
    %v1756 = vadd.f32 %v1724, %v1754
    %v1757 = vadd.f32 %v1725, %v1755
    %s1758 = sld [smem:[#allocation11 + $0x17]]
    %v1759 = vstv %s1758
    %v1760 = vmul.f32 %v1759, %v1738
    %v1761 = vmul.f32 %v1759, %v1739
    %v1762 = vadd.f32 %v1730, %v1760
    %v1763 = vadd.f32 %v1731, %v1761
    %1764 = vrot.lane.b32.xlu0 %v1560, 16
    %v1765 = vpop.permute.xlu0 %1764
    %1766 = vrot.lane.b32.xlu0 %v1561, 16
    %v1767 = vpop.permute.xlu0 %1766
    %v1768 = vsel %vm293, %v1765, %v1767
    %v1769 = vsel %vm293, %v1767, %v1765
    %v1770 = vsel %vm299, %v1769, 0.0
    %v1771 = vsel %vm300, %v1768, 0.0
    %s1772 = sld [smem:[#allocation11 + $0x18]]
    %v1773 = vstv %s1772
    %v1774 = vmul.f32 %v1773, %v1770
    %v1775 = vmul.f32 %v1773, %v1771
    %v1776 = vadd.f32 %v1744, %v1774
    %v1777 = vadd.f32 %v1745, %v1775
    %s1778 = sld [smem:[#allocation11 + $0x19]]
    %v1779 = vstv %s1778
    %v1780 = vmul.f32 %v1779, %v1770
    %v1781 = vmul.f32 %v1779, %v1771
    %v1782 = vadd.f32 %v1750, %v1780
    %v1783 = vadd.f32 %v1751, %v1781
    %s1784 = sld [smem:[#allocation11 + $0x1a]]
    %v1785 = vstv %s1784
    %v1786 = vmul.f32 %v1785, %v1770
    %v1787 = vmul.f32 %v1785, %v1771
    %v1788 = vadd.f32 %v1756, %v1786
    %v1789 = vadd.f32 %v1757, %v1787
    %s1790 = sld [smem:[#allocation11 + $0x1b]]
    %v1791 = vstv %s1790
    %v1792 = vmul.f32 %v1791, %v1770
    %v1793 = vmul.f32 %v1791, %v1771
    %v1794 = vadd.f32 %v1762, %v1792
    %v1795 = vadd.f32 %v1763, %v1793
    %1796 = vrot.lane.b32.xlu0 %v1562, 16
    %v1797 = vpop.permute.xlu0 %1796
    %1798 = vrot.lane.b32.xlu0 %v1563, 16
    %v1799 = vpop.permute.xlu0 %1798
    %v1800 = vsel %vm293, %v1797, %v1799
    %v1801 = vsel %vm293, %v1799, %v1797
    %v1802 = vsel %vm299, %v1801, 0.0
    %v1803 = vsel %vm300, %v1800, 0.0
    %s1804 = sld [smem:[#allocation11 + $0x1c]]
    %v1805 = vstv %s1804
    %v1806 = vmul.f32 %v1805, %v1802
    %v1807 = vmul.f32 %v1805, %v1803
    %v1808 = vadd.f32 %v1776, %v1806
    %v1809 = vadd.f32 %v1777, %v1807
    %s1810 = sld [smem:[#allocation11 + $0x1d]]
    %v1811 = vstv %s1810
    %v1812 = vmul.f32 %v1811, %v1802
    %v1813 = vmul.f32 %v1811, %v1803
    %v1814 = vadd.f32 %v1782, %v1812
    %v1815 = vadd.f32 %v1783, %v1813
    %s1816 = sld [smem:[#allocation11 + $0x1e]]
    %v1817 = vstv %s1816
    %v1818 = vmul.f32 %v1817, %v1802
    %v1819 = vmul.f32 %v1817, %v1803
    %v1820 = vadd.f32 %v1788, %v1818
    %v1821 = vadd.f32 %v1789, %v1819
    %s1822 = sld [smem:[#allocation11 + $0x1f]]
    %v1823 = vstv %s1822
    %v1824 = vmul.f32 %v1823, %v1802
    %v1825 = vmul.f32 %v1823, %v1803
    %v1826 = vadd.f32 %v1794, %v1824
    %v1827 = vadd.f32 %v1795, %v1825
    %1828 = vrot.lane.b32.xlu0 %v1556, 15
    %v1829 = vpop.permute.xlu0 %1828
    %1830 = vrot.lane.b32.xlu0 %v1557, 15
    %v1831 = vpop.permute.xlu0 %1830
    %v1832 = vsel %vm450, %v1829, %v1831
    %v1833 = vsel %vm450, %v1831, %v1829
    %v1834 = vsel %vm456, %v1833, 0.0
    %v1835 = vsel %vm457, %v1832, 0.0
    %s1836 = sld [smem:[#allocation11 + $0x20]]
    %v1837 = vstv %s1836
    %v1838 = vmul.f32 %v1837, %v1834
    %v1839 = vmul.f32 %v1837, %v1835
    %v1840 = vadd.f32 %v1808, %v1838
    %v1841 = vadd.f32 %v1809, %v1839
    %s1842 = sld [smem:[#allocation11 + $0x21]]
    %v1843 = vstv %s1842
    %v1844 = vmul.f32 %v1843, %v1834
    %v1845 = vmul.f32 %v1843, %v1835
    %v1846 = vadd.f32 %v1814, %v1844
    %v1847 = vadd.f32 %v1815, %v1845
    %s1848 = sld [smem:[#allocation11 + $0x22]]
    %v1849 = vstv %s1848
    %v1850 = vmul.f32 %v1849, %v1834
    %v1851 = vmul.f32 %v1849, %v1835
    %v1852 = vadd.f32 %v1820, %v1850
    %v1853 = vadd.f32 %v1821, %v1851
    %s1854 = sld [smem:[#allocation11 + $0x23]]
    %v1855 = vstv %s1854
    %v1856 = vmul.f32 %v1855, %v1834
    %v1857 = vmul.f32 %v1855, %v1835
    %v1858 = vadd.f32 %v1826, %v1856
    %v1859 = vadd.f32 %v1827, %v1857
    %1860 = vrot.lane.b32.xlu0 %v1558, 15
    %v1861 = vpop.permute.xlu0 %1860
    %1862 = vrot.lane.b32.xlu0 %v1559, 15
    %v1863 = vpop.permute.xlu0 %1862
    %v1864 = vsel %vm450, %v1861, %v1863
    %v1865 = vsel %vm450, %v1863, %v1861
    %v1866 = vsel %vm456, %v1865, 0.0
    %v1867 = vsel %vm457, %v1864, 0.0
    %s1868 = sld [smem:[#allocation11 + $0x24]]
    %v1869 = vstv %s1868
    %v1870 = vmul.f32 %v1869, %v1866
    %v1871 = vmul.f32 %v1869, %v1867
    %v1872 = vadd.f32 %v1840, %v1870
    %v1873 = vadd.f32 %v1841, %v1871
    %s1874 = sld [smem:[#allocation11 + $0x25]]
    %v1875 = vstv %s1874
    %v1876 = vmul.f32 %v1875, %v1866
    %v1877 = vmul.f32 %v1875, %v1867
    %v1878 = vadd.f32 %v1846, %v1876
    %v1879 = vadd.f32 %v1847, %v1877
    %s1880 = sld [smem:[#allocation11 + $0x26]]
    %v1881 = vstv %s1880
    %v1882 = vmul.f32 %v1881, %v1866
    %v1883 = vmul.f32 %v1881, %v1867
    %v1884 = vadd.f32 %v1852, %v1882
    %v1885 = vadd.f32 %v1853, %v1883
    %s1886 = sld [smem:[#allocation11 + $0x27]]
    %v1887 = vstv %s1886
    %v1888 = vmul.f32 %v1887, %v1866
    %v1889 = vmul.f32 %v1887, %v1867
    %v1890 = vadd.f32 %v1858, %v1888
    %v1891 = vadd.f32 %v1859, %v1889
    %1892 = vrot.lane.b32.xlu0 %v1560, 15
    %v1893 = vpop.permute.xlu0 %1892
    %1894 = vrot.lane.b32.xlu0 %v1561, 15
    %v1895 = vpop.permute.xlu0 %1894
    %v1896 = vsel %vm450, %v1893, %v1895
    %v1897 = vsel %vm450, %v1895, %v1893
    %v1898 = vsel %vm456, %v1897, 0.0
    %v1899 = vsel %vm457, %v1896, 0.0
    %s1900 = sld [smem:[#allocation11 + $0x28]]
    %v1901 = vstv %s1900
    %v1902 = vmul.f32 %v1901, %v1898
    %v1903 = vmul.f32 %v1901, %v1899
    %v1904 = vadd.f32 %v1872, %v1902
    %v1905 = vadd.f32 %v1873, %v1903
    %s1906 = sld [smem:[#allocation11 + $0x29]]
    %v1907 = vstv %s1906
    %v1908 = vmul.f32 %v1907, %v1898
    %v1909 = vmul.f32 %v1907, %v1899
    %v1910 = vadd.f32 %v1878, %v1908
    %v1911 = vadd.f32 %v1879, %v1909
    %s1912 = sld [smem:[#allocation11 + $0x2a]]
    %v1913 = vstv %s1912
    %v1914 = vmul.f32 %v1913, %v1898
    %v1915 = vmul.f32 %v1913, %v1899
    %v1916 = vadd.f32 %v1884, %v1914
    %v1917 = vadd.f32 %v1885, %v1915
    %s1918 = sld [smem:[#allocation11 + $0x2b]]
    %v1919 = vstv %s1918
    %v1920 = vmul.f32 %v1919, %v1898
    %v1921 = vmul.f32 %v1919, %v1899
    %v1922 = vadd.f32 %v1890, %v1920
    %v1923 = vadd.f32 %v1891, %v1921
    %1924 = vrot.lane.b32.xlu0 %v1562, 15
    %v1925 = vpop.permute.xlu0 %1924
    %1926 = vrot.lane.b32.xlu0 %v1563, 15
    %v1927 = vpop.permute.xlu0 %1926
    %v1928 = vsel %vm450, %v1925, %v1927
    %v1929 = vsel %vm450, %v1927, %v1925
    %v1930 = vsel %vm456, %v1929, 0.0
    %v1931 = vsel %vm457, %v1928, 0.0
    %s1932 = sld [smem:[#allocation11 + $0x2c]]
    %v1933 = vstv %s1932
    %v1934 = vmul.f32 %v1933, %v1930
    %v1935 = vmul.f32 %v1933, %v1931
    %v1936 = vadd.f32 %v1904, %v1934
    %v1937 = vadd.f32 %v1905, %v1935
    %s1938 = sld [smem:[#allocation11 + $0x2d]]
    %v1939 = vstv %s1938
    %v1940 = vmul.f32 %v1939, %v1930
    %v1941 = vmul.f32 %v1939, %v1931
    %v1942 = vadd.f32 %v1910, %v1940
    %v1943 = vadd.f32 %v1911, %v1941
    %s1944 = sld [smem:[#allocation11 + $0x2e]]
    %v1945 = vstv %s1944
    %v1946 = vmul.f32 %v1945, %v1930
    %v1947 = vmul.f32 %v1945, %v1931
    %v1948 = vadd.f32 %v1916, %v1946
    %v1949 = vadd.f32 %v1917, %v1947
    %s1950 = sld [smem:[#allocation11 + $0x2f]]
    %v1951 = vstv %s1950
    %v1952 = vmul.f32 %v1951, %v1930
    %v1953 = vmul.f32 %v1951, %v1931
    %v1954 = vadd.f32 %v1922, %v1952
    %v1955 = vadd.f32 %v1923, %v1953
    %1956 = vrot.lane.b32.xlu0 %v1556, 1
    %v1957 = vpop.permute.xlu0 %1956
    %1958 = vrot.lane.b32.xlu0 %v1557, 1
    %v1959 = vpop.permute.xlu0 %1958
    %v1960 = vsel %vm607, %v1957, %v1959
    %v1961 = vsel %vm607, %v1959, %v1957
    %v1962 = vsel %vm613, %v1961, 0.0
    %v1963 = vsel %vm614, %v1960, 0.0
    %s1964 = sld [smem:[#allocation11 + $0x30]]
    %v1965 = vstv %s1964
    %v1966 = vmul.f32 %v1965, %v1962
    %v1967 = vmul.f32 %v1965, %v1963
    %v1968 = vadd.f32 %v1936, %v1966
    %v1969 = vadd.f32 %v1937, %v1967
    %s1970 = sld [smem:[#allocation11 + $0x31]]
    %v1971 = vstv %s1970
    %v1972 = vmul.f32 %v1971, %v1962
    %v1973 = vmul.f32 %v1971, %v1963
    %v1974 = vadd.f32 %v1942, %v1972
    %v1975 = vadd.f32 %v1943, %v1973
    %s1976 = sld [smem:[#allocation11 + $0x32]]
    %v1977 = vstv %s1976
    %v1978 = vmul.f32 %v1977, %v1962
    %v1979 = vmul.f32 %v1977, %v1963
    %v1980 = vadd.f32 %v1948, %v1978
    %v1981 = vadd.f32 %v1949, %v1979
    %s1982 = sld [smem:[#allocation11 + $0x33]]
    %v1983 = vstv %s1982
    %v1984 = vmul.f32 %v1983, %v1962
    %v1985 = vmul.f32 %v1983, %v1963
    %v1986 = vadd.f32 %v1954, %v1984
    %v1987 = vadd.f32 %v1955, %v1985
    %1988 = vrot.lane.b32.xlu0 %v1558, 1
    %v1989 = vpop.permute.xlu0 %1988
    %1990 = vrot.lane.b32.xlu0 %v1559, 1
    %v1991 = vpop.permute.xlu0 %1990
    %v1992 = vsel %vm607, %v1989, %v1991
    %v1993 = vsel %vm607, %v1991, %v1989
    %v1994 = vsel %vm613, %v1993, 0.0
    %v1995 = vsel %vm614, %v1992, 0.0
    %s1996 = sld [smem:[#allocation11 + $0x34]]
    %v1997 = vstv %s1996
    %v1998 = vmul.f32 %v1997, %v1994
    %v1999 = vmul.f32 %v1997, %v1995
    %v2000 = vadd.f32 %v1968, %v1998
    %v2001 = vadd.f32 %v1969, %v1999
    %s2002 = sld [smem:[#allocation11 + $0x35]]
    %v2003 = vstv %s2002
    %v2004 = vmul.f32 %v2003, %v1994
    %v2005 = vmul.f32 %v2003, %v1995
    %v2006 = vadd.f32 %v1974, %v2004
    %v2007 = vadd.f32 %v1975, %v2005
    %s2008 = sld [smem:[#allocation11 + $0x36]]
    %v2009 = vstv %s2008
    %v2010 = vmul.f32 %v2009, %v1994
    %v2011 = vmul.f32 %v2009, %v1995
    %v2012 = vadd.f32 %v1980, %v2010
    %v2013 = vadd.f32 %v1981, %v2011
    %s2014 = sld [smem:[#allocation11 + $0x37]]
    %v2015 = vstv %s2014
    %v2016 = vmul.f32 %v2015, %v1994
    %v2017 = vmul.f32 %v2015, %v1995
    %v2018 = vadd.f32 %v1986, %v2016
    %v2019 = vadd.f32 %v1987, %v2017
    %2020 = vrot.lane.b32.xlu0 %v1560, 1
    %v2021 = vpop.permute.xlu0 %2020
    %2022 = vrot.lane.b32.xlu0 %v1561, 1
    %v2023 = vpop.permute.xlu0 %2022
    %v2024 = vsel %vm607, %v2021, %v2023
    %v2025 = vsel %vm607, %v2023, %v2021
    %v2026 = vsel %vm613, %v2025, 0.0
    %v2027 = vsel %vm614, %v2024, 0.0
    %s2028 = sld [smem:[#allocation11 + $0x38]]
    %v2029 = vstv %s2028
    %v2030 = vmul.f32 %v2029, %v2026
    %v2031 = vmul.f32 %v2029, %v2027
    %v2032 = vadd.f32 %v2000, %v2030
    %v2033 = vadd.f32 %v2001, %v2031
    %s2034 = sld [smem:[#allocation11 + $0x39]]
    %v2035 = vstv %s2034
    %v2036 = vmul.f32 %v2035, %v2026
    %v2037 = vmul.f32 %v2035, %v2027
    %v2038 = vadd.f32 %v2006, %v2036
    %v2039 = vadd.f32 %v2007, %v2037
    %s2040 = sld [smem:[#allocation11 + $0x3a]]
    %v2041 = vstv %s2040
    %v2042 = vmul.f32 %v2041, %v2026
    %v2043 = vmul.f32 %v2041, %v2027
    %v2044 = vadd.f32 %v2012, %v2042
    %v2045 = vadd.f32 %v2013, %v2043
    %s2046 = sld [smem:[#allocation11 + $0x3b]]
    %v2047 = vstv %s2046
    %v2048 = vmul.f32 %v2047, %v2026
    %v2049 = vmul.f32 %v2047, %v2027
    %v2050 = vadd.f32 %v2018, %v2048
    %v2051 = vadd.f32 %v2019, %v2049
    %2052 = vrot.lane.b32.xlu0 %v1562, 1
    %v2053 = vpop.permute.xlu0 %2052
    %2054 = vrot.lane.b32.xlu0 %v1563, 1
    %v2055 = vpop.permute.xlu0 %2054
    %v2056 = vsel %vm607, %v2053, %v2055
    %v2057 = vsel %vm607, %v2055, %v2053
    %v2058 = vsel %vm613, %v2057, 0.0
    %v2059 = vsel %vm614, %v2056, 0.0
    %s2060 = sld [smem:[#allocation11 + $0x3c]]
    %v2061 = vstv %s2060
    %v2062 = vmul.f32 %v2061, %v2058
    %v2063 = vmul.f32 %v2061, %v2059
    %v2064 = vadd.f32 %v2032, %v2062
    %v2065 = vadd.f32 %v2033, %v2063
    %s2066 = sld [smem:[#allocation11 + $0x3d]]
    %v2067 = vstv %s2066
    %v2068 = vmul.f32 %v2067, %v2058
    %v2069 = vmul.f32 %v2067, %v2059
    %v2070 = vadd.f32 %v2038, %v2068
    %v2071 = vadd.f32 %v2039, %v2069
    %s2072 = sld [smem:[#allocation11 + $0x3e]]
    %v2073 = vstv %s2072
    %v2074 = vmul.f32 %v2073, %v2058
    %v2075 = vmul.f32 %v2073, %v2059
    %v2076 = vadd.f32 %v2044, %v2074
    %v2077 = vadd.f32 %v2045, %v2075
    %s2078 = sld [smem:[#allocation11 + $0x3f]]
    %v2079 = vstv %s2078
    %v2080 = vmul.f32 %v2079, %v2058
    %v2081 = vmul.f32 %v2079, %v2059
    %v2082 = vadd.f32 %v2050, %v2080
    %v2083 = vadd.f32 %v2051, %v2081
    %s2084 = sld [smem:[#allocation11 + $0x40]]
    %v2085 = vstv %s2084
    %v2086 = vmul.f32 %v2085, %v1556
    %v2087 = vmul.f32 %v2085, %v1557
    %v2088 = vadd.f32 %v2064, %v2086
    %v2089 = vadd.f32 %v2065, %v2087
    %s2090 = sld [smem:[#allocation11 + $0x41]]
    %v2091 = vstv %s2090
    %v2092 = vmul.f32 %v2091, %v1556
    %v2093 = vmul.f32 %v2091, %v1557
    %v2094 = vadd.f32 %v2070, %v2092
    %v2095 = vadd.f32 %v2071, %v2093
    %s2096 = sld [smem:[#allocation11 + $0x42]]
    %v2097 = vstv %s2096
    %v2098 = vmul.f32 %v2097, %v1556
    %v2099 = vmul.f32 %v2097, %v1557
    %v2100 = vadd.f32 %v2076, %v2098
    %v2101 = vadd.f32 %v2077, %v2099
    %s2102 = sld [smem:[#allocation11 + $0x43]]
    %v2103 = vstv %s2102
    %v2104 = vmul.f32 %v2103, %v1556
    %v2105 = vmul.f32 %v2103, %v1557
    %v2106 = vadd.f32 %v2082, %v2104
    %v2107 = vadd.f32 %v2083, %v2105
    %s2108 = sld [smem:[#allocation11 + $0x44]]
    %v2109 = vstv %s2108
    %v2110 = vmul.f32 %v2109, %v1558
    %v2111 = vmul.f32 %v2109, %v1559
    %v2112 = vadd.f32 %v2088, %v2110
    %v2113 = vadd.f32 %v2089, %v2111
    %s2114 = sld [smem:[#allocation11 + $0x45]]
    %v2115 = vstv %s2114
    %v2116 = vmul.f32 %v2115, %v1558
    %v2117 = vmul.f32 %v2115, %v1559
    %v2118 = vadd.f32 %v2094, %v2116
    %v2119 = vadd.f32 %v2095, %v2117
    %s2120 = sld [smem:[#allocation11 + $0x46]]
    %v2121 = vstv %s2120
    %v2122 = vmul.f32 %v2121, %v1558
    %v2123 = vmul.f32 %v2121, %v1559
    %v2124 = vadd.f32 %v2100, %v2122
    %v2125 = vadd.f32 %v2101, %v2123
    %s2126 = sld [smem:[#allocation11 + $0x47]]
    %v2127 = vstv %s2126
    %v2128 = vmul.f32 %v2127, %v1558
    %v2129 = vmul.f32 %v2127, %v1559
    %v2130 = vadd.f32 %v2106, %v2128
    %v2131 = vadd.f32 %v2107, %v2129
    %s2132 = sld [smem:[#allocation11 + $0x48]]
    %v2133 = vstv %s2132
    %v2134 = vmul.f32 %v2133, %v1560
    %v2135 = vmul.f32 %v2133, %v1561
    %v2136 = vadd.f32 %v2112, %v2134
    %v2137 = vadd.f32 %v2113, %v2135
    %s2138 = sld [smem:[#allocation11 + $0x49]]
    %v2139 = vstv %s2138
    %v2140 = vmul.f32 %v2139, %v1560
    %v2141 = vmul.f32 %v2139, %v1561
    %v2142 = vadd.f32 %v2118, %v2140
    %v2143 = vadd.f32 %v2119, %v2141
    %s2144 = sld [smem:[#allocation11 + $0x4a]]
    %v2145 = vstv %s2144
    %v2146 = vmul.f32 %v2145, %v1560
    %v2147 = vmul.f32 %v2145, %v1561
    %v2148 = vadd.f32 %v2124, %v2146
    %v2149 = vadd.f32 %v2125, %v2147
    %s2150 = sld [smem:[#allocation11 + $0x4b]]
    %v2151 = vstv %s2150
    %v2152 = vmul.f32 %v2151, %v1560
    %v2153 = vmul.f32 %v2151, %v1561
    %v2154 = vadd.f32 %v2130, %v2152
    %v2155 = vadd.f32 %v2131, %v2153
    %s2156 = sld [smem:[#allocation11 + $0x4c]]
    %v2157 = vstv %s2156
    %v2158 = vmul.f32 %v2157, %v1562
    %v2159 = vmul.f32 %v2157, %v1563
    %v2160 = vadd.f32 %v2136, %v2158
    %v2161 = vadd.f32 %v2137, %v2159
    %s2162 = sld [smem:[#allocation11 + $0x4d]]
    %v2163 = vstv %s2162
    %v2164 = vmul.f32 %v2163, %v1562
    %v2165 = vmul.f32 %v2163, %v1563
    %v2166 = vadd.f32 %v2142, %v2164
    %v2167 = vadd.f32 %v2143, %v2165
    %s2168 = sld [smem:[#allocation11 + $0x4e]]
    %v2169 = vstv %s2168
    %v2170 = vmul.f32 %v2169, %v1562
    %v2171 = vmul.f32 %v2169, %v1563
    %v2172 = vadd.f32 %v2148, %v2170
    %v2173 = vadd.f32 %v2149, %v2171
    %s2174 = sld [smem:[#allocation11 + $0x4f]]
    %v2175 = vstv %s2174
    %v2176 = vmul.f32 %v2175, %v1562
    %v2177 = vmul.f32 %v2175, %v1563
    %v2178 = vadd.f32 %v2154, %v2176
    %v2179 = vadd.f32 %v2155, %v2177
    %2180 = vrot.lane.b32.xlu0 %v1556, 127
    %v2181 = vpop.permute.xlu0 %2180
    %2182 = vrot.lane.b32.xlu0 %v1557, 127
    %v2183 = vpop.permute.xlu0 %2182
    %v2184 = vsel %vm940, %v2181, %v2183
    %v2185 = vsel %vm940, %v2183, %v2181
    %v2186 = vsel %vm946, %v2184, 0.0
    %v2187 = vsel %vm947, %v2185, 0.0
    %s2188 = sld [smem:[#allocation11 + $0x50]]
    %v2189 = vstv %s2188
    %v2190 = vmul.f32 %v2189, %v2186
    %v2191 = vmul.f32 %v2189, %v2187
    %v2192 = vadd.f32 %v2160, %v2190
    %v2193 = vadd.f32 %v2161, %v2191
    %s2194 = sld [smem:[#allocation11 + $0x51]]
    %v2195 = vstv %s2194
    %v2196 = vmul.f32 %v2195, %v2186
    %v2197 = vmul.f32 %v2195, %v2187
    %v2198 = vadd.f32 %v2166, %v2196
    %v2199 = vadd.f32 %v2167, %v2197
    %s2200 = sld [smem:[#allocation11 + $0x52]]
    %v2201 = vstv %s2200
    %v2202 = vmul.f32 %v2201, %v2186
    %v2203 = vmul.f32 %v2201, %v2187
    %v2204 = vadd.f32 %v2172, %v2202
    %v2205 = vadd.f32 %v2173, %v2203
    %s2206 = sld [smem:[#allocation11 + $0x53]]
    %v2207 = vstv %s2206
    %v2208 = vmul.f32 %v2207, %v2186
    %v2209 = vmul.f32 %v2207, %v2187
    %v2210 = vadd.f32 %v2178, %v2208
    %v2211 = vadd.f32 %v2179, %v2209
    %2212 = vrot.lane.b32.xlu0 %v1558, 127
    %v2213 = vpop.permute.xlu0 %2212
    %2214 = vrot.lane.b32.xlu0 %v1559, 127
    %v2215 = vpop.permute.xlu0 %2214
    %v2216 = vsel %vm940, %v2213, %v2215
    %v2217 = vsel %vm940, %v2215, %v2213
    %v2218 = vsel %vm946, %v2216, 0.0
    %v2219 = vsel %vm947, %v2217, 0.0
    %s2220 = sld [smem:[#allocation11 + $0x54]]
    %v2221 = vstv %s2220
    %v2222 = vmul.f32 %v2221, %v2218
    %v2223 = vmul.f32 %v2221, %v2219
    %v2224 = vadd.f32 %v2192, %v2222
    %v2225 = vadd.f32 %v2193, %v2223
    %s2226 = sld [smem:[#allocation11 + $0x55]]
    %v2227 = vstv %s2226
    %v2228 = vmul.f32 %v2227, %v2218
    %v2229 = vmul.f32 %v2227, %v2219
    %v2230 = vadd.f32 %v2198, %v2228
    %v2231 = vadd.f32 %v2199, %v2229
    %s2232 = sld [smem:[#allocation11 + $0x56]]
    %v2233 = vstv %s2232
    %v2234 = vmul.f32 %v2233, %v2218
    %v2235 = vmul.f32 %v2233, %v2219
    %v2236 = vadd.f32 %v2204, %v2234
    %v2237 = vadd.f32 %v2205, %v2235
    %s2238 = sld [smem:[#allocation11 + $0x57]]
    %v2239 = vstv %s2238
    %v2240 = vmul.f32 %v2239, %v2218
    %v2241 = vmul.f32 %v2239, %v2219
    %v2242 = vadd.f32 %v2210, %v2240
    %v2243 = vadd.f32 %v2211, %v2241
    %2244 = vrot.lane.b32.xlu0 %v1560, 127
    %v2245 = vpop.permute.xlu0 %2244
    %2246 = vrot.lane.b32.xlu0 %v1561, 127
    %v2247 = vpop.permute.xlu0 %2246
    %v2248 = vsel %vm940, %v2245, %v2247
    %v2249 = vsel %vm940, %v2247, %v2245
    %v2250 = vsel %vm946, %v2248, 0.0
    %v2251 = vsel %vm947, %v2249, 0.0
    %s2252 = sld [smem:[#allocation11 + $0x58]]
    %v2253 = vstv %s2252
    %v2254 = vmul.f32 %v2253, %v2250
    %v2255 = vmul.f32 %v2253, %v2251
    %v2256 = vadd.f32 %v2224, %v2254
    %v2257 = vadd.f32 %v2225, %v2255
    %s2258 = sld [smem:[#allocation11 + $0x59]]
    %v2259 = vstv %s2258
    %v2260 = vmul.f32 %v2259, %v2250
    %v2261 = vmul.f32 %v2259, %v2251
    %v2262 = vadd.f32 %v2230, %v2260
    %v2263 = vadd.f32 %v2231, %v2261
    %s2264 = sld [smem:[#allocation11 + $0x5a]]
    %v2265 = vstv %s2264
    %v2266 = vmul.f32 %v2265, %v2250
    %v2267 = vmul.f32 %v2265, %v2251
    %v2268 = vadd.f32 %v2236, %v2266
    %v2269 = vadd.f32 %v2237, %v2267
    %s2270 = sld [smem:[#allocation11 + $0x5b]]
    %v2271 = vstv %s2270
    %v2272 = vmul.f32 %v2271, %v2250
    %v2273 = vmul.f32 %v2271, %v2251
    %v2274 = vadd.f32 %v2242, %v2272
    %v2275 = vadd.f32 %v2243, %v2273
    %2276 = vrot.lane.b32.xlu0 %v1562, 127
    %v2277 = vpop.permute.xlu0 %2276
    %2278 = vrot.lane.b32.xlu0 %v1563, 127
    %v2279 = vpop.permute.xlu0 %2278
    %v2280 = vsel %vm940, %v2277, %v2279
    %v2281 = vsel %vm940, %v2279, %v2277
    %v2282 = vsel %vm946, %v2280, 0.0
    %v2283 = vsel %vm947, %v2281, 0.0
    %s2284 = sld [smem:[#allocation11 + $0x5c]]
    %v2285 = vstv %s2284
    %v2286 = vmul.f32 %v2285, %v2282
    %v2287 = vmul.f32 %v2285, %v2283
    %v2288 = vadd.f32 %v2256, %v2286
    %v2289 = vadd.f32 %v2257, %v2287
    %s2290 = sld [smem:[#allocation11 + $0x5d]]
    %v2291 = vstv %s2290
    %v2292 = vmul.f32 %v2291, %v2282
    %v2293 = vmul.f32 %v2291, %v2283
    %v2294 = vadd.f32 %v2262, %v2292
    %v2295 = vadd.f32 %v2263, %v2293
    %s2296 = sld [smem:[#allocation11 + $0x5e]]
    %v2297 = vstv %s2296
    %v2298 = vmul.f32 %v2297, %v2282
    %v2299 = vmul.f32 %v2297, %v2283
    %v2300 = vadd.f32 %v2268, %v2298
    %v2301 = vadd.f32 %v2269, %v2299
    %s2302 = sld [smem:[#allocation11 + $0x5f]]
    %v2303 = vstv %s2302
    %v2304 = vmul.f32 %v2303, %v2282
    %v2305 = vmul.f32 %v2303, %v2283
    %v2306 = vadd.f32 %v2274, %v2304
    %v2307 = vadd.f32 %v2275, %v2305
    %2308 = vrot.lane.b32.xlu0 %v1556, 113
    %v2309 = vpop.permute.xlu0 %2308
    %2310 = vrot.lane.b32.xlu0 %v1557, 113
    %v2311 = vpop.permute.xlu0 %2310
    %v2312 = vsel %vm1097, %v2309, %v2311
    %v2313 = vsel %vm1097, %v2311, %v2309
    %v2314 = vsel %vm1103, %v2312, 0.0
    %v2315 = vsel %vm1104, %v2313, 0.0
    %s2316 = sld [smem:[#allocation11 + $0x60]]
    %v2317 = vstv %s2316
    %v2318 = vmul.f32 %v2317, %v2314
    %v2319 = vmul.f32 %v2317, %v2315
    %v2320 = vadd.f32 %v2288, %v2318
    %v2321 = vadd.f32 %v2289, %v2319
    %s2322 = sld [smem:[#allocation11 + $0x61]]
    %v2323 = vstv %s2322
    %v2324 = vmul.f32 %v2323, %v2314
    %v2325 = vmul.f32 %v2323, %v2315
    %v2326 = vadd.f32 %v2294, %v2324
    %v2327 = vadd.f32 %v2295, %v2325
    %s2328 = sld [smem:[#allocation11 + $0x62]]
    %v2329 = vstv %s2328
    %v2330 = vmul.f32 %v2329, %v2314
    %v2331 = vmul.f32 %v2329, %v2315
    %v2332 = vadd.f32 %v2300, %v2330
    %v2333 = vadd.f32 %v2301, %v2331
    %s2334 = sld [smem:[#allocation11 + $0x63]]
    %v2335 = vstv %s2334
    %v2336 = vmul.f32 %v2335, %v2314
    %v2337 = vmul.f32 %v2335, %v2315
    %v2338 = vadd.f32 %v2306, %v2336
    %v2339 = vadd.f32 %v2307, %v2337
    %2340 = vrot.lane.b32.xlu0 %v1558, 113
    %v2341 = vpop.permute.xlu0 %2340
    %2342 = vrot.lane.b32.xlu0 %v1559, 113
    %v2343 = vpop.permute.xlu0 %2342
    %v2344 = vsel %vm1097, %v2341, %v2343
    %v2345 = vsel %vm1097, %v2343, %v2341
    %v2346 = vsel %vm1103, %v2344, 0.0
    %v2347 = vsel %vm1104, %v2345, 0.0
    %s2348 = sld [smem:[#allocation11 + $0x64]]
    %v2349 = vstv %s2348
    %v2350 = vmul.f32 %v2349, %v2346
    %v2351 = vmul.f32 %v2349, %v2347
    %v2352 = vadd.f32 %v2320, %v2350
    %v2353 = vadd.f32 %v2321, %v2351
    %s2354 = sld [smem:[#allocation11 + $0x65]]
    %v2355 = vstv %s2354
    %v2356 = vmul.f32 %v2355, %v2346
    %v2357 = vmul.f32 %v2355, %v2347
    %v2358 = vadd.f32 %v2326, %v2356
    %v2359 = vadd.f32 %v2327, %v2357
    %s2360 = sld [smem:[#allocation11 + $0x66]]
    %v2361 = vstv %s2360
    %v2362 = vmul.f32 %v2361, %v2346
    %v2363 = vmul.f32 %v2361, %v2347
    %v2364 = vadd.f32 %v2332, %v2362
    %v2365 = vadd.f32 %v2333, %v2363
    %s2366 = sld [smem:[#allocation11 + $0x67]]
    %v2367 = vstv %s2366
    %v2368 = vmul.f32 %v2367, %v2346
    %v2369 = vmul.f32 %v2367, %v2347
    %v2370 = vadd.f32 %v2338, %v2368
    %v2371 = vadd.f32 %v2339, %v2369
    %2372 = vrot.lane.b32.xlu0 %v1560, 113
    %v2373 = vpop.permute.xlu0 %2372
    %2374 = vrot.lane.b32.xlu0 %v1561, 113
    %v2375 = vpop.permute.xlu0 %2374
    %v2376 = vsel %vm1097, %v2373, %v2375
    %v2377 = vsel %vm1097, %v2375, %v2373
    %v2378 = vsel %vm1103, %v2376, 0.0
    %v2379 = vsel %vm1104, %v2377, 0.0
    %s2380 = sld [smem:[#allocation11 + $0x68]]
    %v2381 = vstv %s2380
    %v2382 = vmul.f32 %v2381, %v2378
    %v2383 = vmul.f32 %v2381, %v2379
    %v2384 = vadd.f32 %v2352, %v2382
    %v2385 = vadd.f32 %v2353, %v2383
    %s2386 = sld [smem:[#allocation11 + $0x69]]
    %v2387 = vstv %s2386
    %v2388 = vmul.f32 %v2387, %v2378
    %v2389 = vmul.f32 %v2387, %v2379
    %v2390 = vadd.f32 %v2358, %v2388
    %v2391 = vadd.f32 %v2359, %v2389
    %s2392 = sld [smem:[#allocation11 + $0x6a]]
    %v2393 = vstv %s2392
    %v2394 = vmul.f32 %v2393, %v2378
    %v2395 = vmul.f32 %v2393, %v2379
    %v2396 = vadd.f32 %v2364, %v2394
    %v2397 = vadd.f32 %v2365, %v2395
    %s2398 = sld [smem:[#allocation11 + $0x6b]]
    %v2399 = vstv %s2398
    %v2400 = vmul.f32 %v2399, %v2378
    %v2401 = vmul.f32 %v2399, %v2379
    %v2402 = vadd.f32 %v2370, %v2400
    %v2403 = vadd.f32 %v2371, %v2401
    %2404 = vrot.lane.b32.xlu0 %v1562, 113
    %v2405 = vpop.permute.xlu0 %2404
    %2406 = vrot.lane.b32.xlu0 %v1563, 113
    %v2407 = vpop.permute.xlu0 %2406
    %v2408 = vsel %vm1097, %v2405, %v2407
    %v2409 = vsel %vm1097, %v2407, %v2405
    %v2410 = vsel %vm1103, %v2408, 0.0
    %v2411 = vsel %vm1104, %v2409, 0.0
    %s2412 = sld [smem:[#allocation11 + $0x6c]]
    %v2413 = vstv %s2412
    %v2414 = vmul.f32 %v2413, %v2410
    %v2415 = vmul.f32 %v2413, %v2411
    %v2416 = vadd.f32 %v2384, %v2414
    %v2417 = vadd.f32 %v2385, %v2415
    %s2418 = sld [smem:[#allocation11 + $0x6d]]
    %v2419 = vstv %s2418
    %v2420 = vmul.f32 %v2419, %v2410
    %v2421 = vmul.f32 %v2419, %v2411
    %v2422 = vadd.f32 %v2390, %v2420
    %v2423 = vadd.f32 %v2391, %v2421
    %s2424 = sld [smem:[#allocation11 + $0x6e]]
    %v2425 = vstv %s2424
    %v2426 = vmul.f32 %v2425, %v2410
    %v2427 = vmul.f32 %v2425, %v2411
    %v2428 = vadd.f32 %v2396, %v2426
    %v2429 = vadd.f32 %v2397, %v2427
    %s2430 = sld [smem:[#allocation11 + $0x6f]]
    %v2431 = vstv %s2430
    %v2432 = vmul.f32 %v2431, %v2410
    %v2433 = vmul.f32 %v2431, %v2411
    %v2434 = vadd.f32 %v2402, %v2432
    %v2435 = vadd.f32 %v2403, %v2433
    %2436 = vrot.lane.b32.xlu0 %v1556, 112
    %v2437 = vpop.permute.xlu0 %2436
    %2438 = vrot.lane.b32.xlu0 %v1557, 112
    %v2439 = vpop.permute.xlu0 %2438
    %v2440 = vsel %vm1254, %v2437, %v2439
    %v2441 = vsel %vm1254, %v2439, %v2437
    %v2442 = vsel %vm1260, %v2440, 0.0
    %v2443 = vsel %vm1261, %v2441, 0.0
    %s2444 = sld [smem:[#allocation11 + $0x70]]
    %v2445 = vstv %s2444
    %v2446 = vmul.f32 %v2445, %v2442
    %v2447 = vmul.f32 %v2445, %v2443
    %v2448 = vadd.f32 %v2416, %v2446
    %v2449 = vadd.f32 %v2417, %v2447
    %s2450 = sld [smem:[#allocation11 + $0x71]]
    %v2451 = vstv %s2450
    %v2452 = vmul.f32 %v2451, %v2442
    %v2453 = vmul.f32 %v2451, %v2443
    %v2454 = vadd.f32 %v2422, %v2452
    %v2455 = vadd.f32 %v2423, %v2453
    %s2456 = sld [smem:[#allocation11 + $0x72]]
    %v2457 = vstv %s2456
    %v2458 = vmul.f32 %v2457, %v2442
    %v2459 = vmul.f32 %v2457, %v2443
    %v2460 = vadd.f32 %v2428, %v2458
    %v2461 = vadd.f32 %v2429, %v2459
    %s2462 = sld [smem:[#allocation11 + $0x73]]
    %v2463 = vstv %s2462
    %v2464 = vmul.f32 %v2463, %v2442
    %v2465 = vmul.f32 %v2463, %v2443
    %v2466 = vadd.f32 %v2434, %v2464
    %v2467 = vadd.f32 %v2435, %v2465
    %2468 = vrot.lane.b32.xlu0 %v1558, 112
    %v2469 = vpop.permute.xlu0 %2468
    %2470 = vrot.lane.b32.xlu0 %v1559, 112
    %v2471 = vpop.permute.xlu0 %2470
    %v2472 = vsel %vm1254, %v2469, %v2471
    %v2473 = vsel %vm1254, %v2471, %v2469
    %v2474 = vsel %vm1260, %v2472, 0.0
    %v2475 = vsel %vm1261, %v2473, 0.0
    %s2476 = sld [smem:[#allocation11 + $0x74]]
    %v2477 = vstv %s2476
    %v2478 = vmul.f32 %v2477, %v2474
    %v2479 = vmul.f32 %v2477, %v2475
    %v2480 = vadd.f32 %v2448, %v2478
    %v2481 = vadd.f32 %v2449, %v2479
    %s2482 = sld [smem:[#allocation11 + $0x75]]
    %v2483 = vstv %s2482
    %v2484 = vmul.f32 %v2483, %v2474
    %v2485 = vmul.f32 %v2483, %v2475
    %v2486 = vadd.f32 %v2454, %v2484
    %v2487 = vadd.f32 %v2455, %v2485
    %s2488 = sld [smem:[#allocation11 + $0x76]]
    %v2489 = vstv %s2488
    %v2490 = vmul.f32 %v2489, %v2474
    %v2491 = vmul.f32 %v2489, %v2475
    %v2492 = vadd.f32 %v2460, %v2490
    %v2493 = vadd.f32 %v2461, %v2491
    %s2494 = sld [smem:[#allocation11 + $0x77]]
    %v2495 = vstv %s2494
    %v2496 = vmul.f32 %v2495, %v2474
    %v2497 = vmul.f32 %v2495, %v2475
    %v2498 = vadd.f32 %v2466, %v2496
    %v2499 = vadd.f32 %v2467, %v2497
    %2500 = vrot.lane.b32.xlu0 %v1560, 112
    %v2501 = vpop.permute.xlu0 %2500
    %2502 = vrot.lane.b32.xlu0 %v1561, 112
    %v2503 = vpop.permute.xlu0 %2502
    %v2504 = vsel %vm1254, %v2501, %v2503
    %v2505 = vsel %vm1254, %v2503, %v2501
    %v2506 = vsel %vm1260, %v2504, 0.0
    %v2507 = vsel %vm1261, %v2505, 0.0
    %s2508 = sld [smem:[#allocation11 + $0x78]]
    %v2509 = vstv %s2508
    %v2510 = vmul.f32 %v2509, %v2506
    %v2511 = vmul.f32 %v2509, %v2507
    %v2512 = vadd.f32 %v2480, %v2510
    %v2513 = vadd.f32 %v2481, %v2511
    %s2514 = sld [smem:[#allocation11 + $0x79]]
    %v2515 = vstv %s2514
    %v2516 = vmul.f32 %v2515, %v2506
    %v2517 = vmul.f32 %v2515, %v2507
    %v2518 = vadd.f32 %v2486, %v2516
    %v2519 = vadd.f32 %v2487, %v2517
    %s2520 = sld [smem:[#allocation11 + $0x7a]]
    %v2521 = vstv %s2520
    %v2522 = vmul.f32 %v2521, %v2506
    %v2523 = vmul.f32 %v2521, %v2507
    %v2524 = vadd.f32 %v2492, %v2522
    %v2525 = vadd.f32 %v2493, %v2523
    %s2526 = sld [smem:[#allocation11 + $0x7b]]
    %v2527 = vstv %s2526
    %v2528 = vmul.f32 %v2527, %v2506
    %v2529 = vmul.f32 %v2527, %v2507
    %v2530 = vadd.f32 %v2498, %v2528
    %v2531 = vadd.f32 %v2499, %v2529
    %2532 = vrot.lane.b32.xlu0 %v1562, 112
    %v2533 = vpop.permute.xlu0 %2532
    %2534 = vrot.lane.b32.xlu0 %v1563, 112
    %v2535 = vpop.permute.xlu0 %2534
    %v2536 = vsel %vm1254, %v2533, %v2535
    %v2537 = vsel %vm1254, %v2535, %v2533
    %v2538 = vsel %vm1260, %v2536, 0.0
    %v2539 = vsel %vm1261, %v2537, 0.0
    %s2540 = sld [smem:[#allocation11 + $0x7c]]
    %v2541 = vstv %s2540
    %v2542 = vmul.f32 %v2541, %v2538
    %v2543 = vmul.f32 %v2541, %v2539
    %v2544 = vadd.f32 %v2512, %v2542
    %v2545 = vadd.f32 %v2513, %v2543
    %s2546 = sld [smem:[#allocation11 + $0x7d]]
    %v2547 = vstv %s2546
    %v2548 = vmul.f32 %v2547, %v2538
    %v2549 = vmul.f32 %v2547, %v2539
    %v2550 = vadd.f32 %v2518, %v2548
    %v2551 = vadd.f32 %v2519, %v2549
    %s2552 = sld [smem:[#allocation11 + $0x7e]]
    %v2553 = vstv %s2552
    %v2554 = vmul.f32 %v2553, %v2538
    %v2555 = vmul.f32 %v2553, %v2539
    %v2556 = vadd.f32 %v2524, %v2554
    %v2557 = vadd.f32 %v2525, %v2555
    %s2558 = sld [smem:[#allocation11 + $0x7f]]
    %v2559 = vstv %s2558
    %v2560 = vmul.f32 %v2559, %v2538
    %v2561 = vmul.f32 %v2559, %v2539
    %v2562 = vadd.f32 %v2530, %v2560
    %v2563 = vadd.f32 %v2531, %v2561
    %2564 = vrot.lane.b32.xlu0 %v1556, 111
    %v2565 = vpop.permute.xlu0 %2564
    %2566 = vrot.lane.b32.xlu0 %v1557, 111
    %v2567 = vpop.permute.xlu0 %2566
    %v2568 = vsel %vm1411, %v2565, %v2567
    %v2569 = vsel %vm1411, %v2567, %v2565
    %v2570 = vsel %vm1417, %v2568, 0.0
    %v2571 = vsel %vm1418, %v2569, 0.0
    %s2572 = sld [smem:[#allocation11 + $0x80]]
    %v2573 = vstv %s2572
    %v2574 = vmul.f32 %v2573, %v2570
    %v2575 = vmul.f32 %v2573, %v2571
    %v2576 = vadd.f32 %v2544, %v2574
    %v2577 = vadd.f32 %v2545, %v2575
    %s2578 = sld [smem:[#allocation11 + $0x81]]
    %v2579 = vstv %s2578
    %v2580 = vmul.f32 %v2579, %v2570
    %v2581 = vmul.f32 %v2579, %v2571
    %v2582 = vadd.f32 %v2550, %v2580
    %v2583 = vadd.f32 %v2551, %v2581
    %s2584 = sld [smem:[#allocation11 + $0x82]]
    %v2585 = vstv %s2584
    %v2586 = vmul.f32 %v2585, %v2570
    %v2587 = vmul.f32 %v2585, %v2571
    %v2588 = vadd.f32 %v2556, %v2586
    %v2589 = vadd.f32 %v2557, %v2587
    %s2590 = sld [smem:[#allocation11 + $0x83]]
    %v2591 = vstv %s2590
    %v2592 = vmul.f32 %v2591, %v2570
    %v2593 = vmul.f32 %v2591, %v2571
    %v2594 = vadd.f32 %v2562, %v2592
    %v2595 = vadd.f32 %v2563, %v2593
    %2596 = vrot.lane.b32.xlu0 %v1558, 111
    %v2597 = vpop.permute.xlu0 %2596
    %2598 = vrot.lane.b32.xlu0 %v1559, 111
    %v2599 = vpop.permute.xlu0 %2598
    %v2600 = vsel %vm1411, %v2597, %v2599
    %v2601 = vsel %vm1411, %v2599, %v2597
    %v2602 = vsel %vm1417, %v2600, 0.0
    %v2603 = vsel %vm1418, %v2601, 0.0
    %s2604 = sld [smem:[#allocation11 + $0x84]]
    %v2605 = vstv %s2604
    %v2606 = vmul.f32 %v2605, %v2602
    %v2607 = vmul.f32 %v2605, %v2603
    %v2608 = vadd.f32 %v2576, %v2606
    %v2609 = vadd.f32 %v2577, %v2607
    %s2610 = sld [smem:[#allocation11 + $0x85]]
    %v2611 = vstv %s2610
    %v2612 = vmul.f32 %v2611, %v2602
    %v2613 = vmul.f32 %v2611, %v2603
    %v2614 = vadd.f32 %v2582, %v2612
    %v2615 = vadd.f32 %v2583, %v2613
    %s2616 = sld [smem:[#allocation11 + $0x86]]
    %v2617 = vstv %s2616
    %v2618 = vmul.f32 %v2617, %v2602
    %v2619 = vmul.f32 %v2617, %v2603
    %v2620 = vadd.f32 %v2588, %v2618
    %v2621 = vadd.f32 %v2589, %v2619
    %s2622 = sld [smem:[#allocation11 + $0x87]]
    %v2623 = vstv %s2622
    %v2624 = vmul.f32 %v2623, %v2602
    %v2625 = vmul.f32 %v2623, %v2603
    %v2626 = vadd.f32 %v2594, %v2624
    %v2627 = vadd.f32 %v2595, %v2625
    %2628 = vrot.lane.b32.xlu0 %v1560, 111
    %v2629 = vpop.permute.xlu0 %2628
    %2630 = vrot.lane.b32.xlu0 %v1561, 111
    %v2631 = vpop.permute.xlu0 %2630
    %v2632 = vsel %vm1411, %v2629, %v2631
    %v2633 = vsel %vm1411, %v2631, %v2629
    %v2634 = vsel %vm1417, %v2632, 0.0
    %v2635 = vsel %vm1418, %v2633, 0.0
    %s2636 = sld [smem:[#allocation11 + $0x88]]
    %v2637 = vstv %s2636
    %v2638 = vmul.f32 %v2637, %v2634
    %v2639 = vmul.f32 %v2637, %v2635
    %v2640 = vadd.f32 %v2608, %v2638
    %v2641 = vadd.f32 %v2609, %v2639
    %s2642 = sld [smem:[#allocation11 + $0x89]]
    %v2643 = vstv %s2642
    %v2644 = vmul.f32 %v2643, %v2634
    %v2645 = vmul.f32 %v2643, %v2635
    %v2646 = vadd.f32 %v2614, %v2644
    %v2647 = vadd.f32 %v2615, %v2645
    %s2648 = sld [smem:[#allocation11 + $0x8a]]
    %v2649 = vstv %s2648
    %v2650 = vmul.f32 %v2649, %v2634
    %v2651 = vmul.f32 %v2649, %v2635
    %v2652 = vadd.f32 %v2620, %v2650
    %v2653 = vadd.f32 %v2621, %v2651
    %s2654 = sld [smem:[#allocation11 + $0x8b]]
    %v2655 = vstv %s2654
    %v2656 = vmul.f32 %v2655, %v2634
    %v2657 = vmul.f32 %v2655, %v2635
    %v2658 = vadd.f32 %v2626, %v2656
    %v2659 = vadd.f32 %v2627, %v2657
    %2660 = vrot.lane.b32.xlu0 %v1562, 111
    %v2661 = vpop.permute.xlu0 %2660
    %2662 = vrot.lane.b32.xlu0 %v1563, 111
    %v2663 = vpop.permute.xlu0 %2662
    %v2664 = vsel %vm1411, %v2661, %v2663
    %v2665 = vsel %vm1411, %v2663, %v2661
    %v2666 = vsel %vm1417, %v2664, 0.0
    %v2667 = vsel %vm1418, %v2665, 0.0
    %s2668 = sld [smem:[#allocation11 + $0x8c]]
    %v2669 = vstv %s2668
    %v2670 = vmul.f32 %v2669, %v2666
    %v2671 = vmul.f32 %v2669, %v2667
    %v2672 = vadd.f32 %v2640, %v2670
    %v2673 = vadd.f32 %v2641, %v2671
    %s2674 = sld [smem:[#allocation11 + $0x8d]]
    %v2675 = vstv %s2674
    %v2676 = vmul.f32 %v2675, %v2666
    %v2677 = vmul.f32 %v2675, %v2667
    %v2678 = vadd.f32 %v2646, %v2676
    %v2679 = vadd.f32 %v2647, %v2677
    %s2680 = sld [smem:[#allocation11 + $0x8e]]
    %v2681 = vstv %s2680
    %v2682 = vmul.f32 %v2681, %v2666
    %v2683 = vmul.f32 %v2681, %v2667
    %v2684 = vadd.f32 %v2652, %v2682
    %v2685 = vadd.f32 %v2653, %v2683
    %s2686 = sld [smem:[#allocation11 + $0x8f]]
    %v2687 = vstv %s2686
    %v2688 = vmul.f32 %v2687, %v2666
    %v2689 = vmul.f32 %v2687, %v2667
    %v2690 = vadd.f32 %v2658, %v2688
    %v2691 = vadd.f32 %v2659, %v2689
    %v2694 = vrot.slane %v2673, 6
    %vm2695 = vcmask 1041408
    %v2696 = vsel %vm2695, %v2672, %v2694
    %v2698 = vadd.f32 %v104, %v2696
    %2699 = vst [vmem:[#allocation14] sm:$0xf] %v2698
    %v2702 = vrot.slane %v2679, 6
    %v2703 = vsel %vm2695, %v2678, %v2702
    %v2705 = vadd.f32 %v106, %v2703
    %s2706 = scalar_lea.vmem [#allocation14], 4
    %2707 = vst [vmem:[%s2706] sm:$0xf] %v2705
    %v2710 = vrot.slane %v2685, 6
    %v2711 = vsel %vm2695, %v2684, %v2710
    %v2713 = vadd.f32 %v108, %v2711
    %s2714 = scalar_lea.vmem [#allocation14], 8
    %2715 = vst [vmem:[%s2714] sm:$0xf] %v2713
    %v2718 = vrot.slane %v2691, 6
    %v2719 = vsel %vm2695, %v2690, %v2718
    %v2721 = vadd.f32 %v110, %v2719
    %s2722 = scalar_lea.vmem [#allocation14], 12
    %2723 = vst [vmem:[%s2722] sm:$0xf] %v2721
    // Predicated region
    $region50: #{tpu_custom_call.1} parent=1 // pred_check
      _
    $region51: #{tpu_custom_call.1} parent=1 // pred_check_branch
      %2725 = sbr.rel (0) target = $region53
    $region52: #{tpu_custom_call.1} parent=1 // pred_region
      %2727 = vsyncadd [#allocation4], 0
      %s2728 = sshll.u32 [#allocation14], 4
      %s2729 = int_to_ptr.vmem [resolvable:$true] %s2728
      %s2730 = sshll.u32 %s6, 4
      %s2731 = int_to_ptr.hbm [resolvable:$true] %s2730
      %2736 = dma.vmem_to_hbm [thread:$0]  %s2729, 256, %s2731, [#allocation4], 64, 64, 4
    $region53: #{tpu_custom_call.1} parent=1 // pred_fallthru
      _
    // Predicated region
    $region54: #{tpu_custom_call.1} parent=1 // pred_check
      _
    $region55: #{tpu_custom_call.1} parent=1 // pred_check_branch
      %2738 = sbr.rel (0) target = $region57
    $region56: #{tpu_custom_call.1} parent=1 // pred_region
      %2740 = dma.done [#allocation4], 256
    $region57: #{tpu_custom_call.1} parent=1 // pred_fallthru
      _
    %2741 = vsyncpa [#allocation3], 1
    %2742 = vsyncpa [#allocation8], 1
    %2743 = vsyncpa [#allocation4], 1
    %2744 = vsyncpa [#allocation5], 1
    %2745 = vsyncpa [#allocation6], 1
    %2746 = vsyncpa [#allocation12], 1

</llo_original>
